<compile_context>
chip_gen: v7x
topology: tpu7x:2x2x1
jax: 0.10.0
libtpu: 0.0.40
codegen_flags: <defaults>
</compile_context>

<pallas_src>
import jax
import jax.numpy as jnp
import numpy as np
from jax.experimental import pallas as pl
from jax.experimental.pallas import tpu as pltpu


# ----------------------------------------------------------------------------
# tiling helpers
# ----------------------------------------------------------------------------
def _pick_row_tile(rows, max_tile=512):
    """Largest row tile <= max_tile that divides `rows` and is a multiple of 8,
    else the full row count (which is always a legal block)."""
    if rows <= max_tile:
        return rows
    start = max_tile - (max_tile % 8)
    for cand in range(start, 7, -8):
        if rows % cand == 0:
            return cand
    return rows


def _pick_time_chunk(T, max_chunk=32):
    """Largest time chunk <= max_chunk that divides T (leading dim: no
    (8,128) constraint)."""
    if T <= max_chunk:
        return T
    for cand in range(max_chunk, 0, -1):
        if T % cand == 0:
            return cand
    return T


# ----------------------------------------------------------------------------
# Kernel 1: sequence-wide input projection  gx = x @ W_ih + (b_ih + b_hh)
# ----------------------------------------------------------------------------
def _gates_kernel(x_ref, w_ref, b_ref, out_ref):
    out_ref[...] = (
        jnp.dot(x_ref[...], w_ref[...], preferred_element_type=jnp.float32)
        + b_ref[...]).astype(out_ref.dtype)


def gates_pallas(x2d, w_ih_t, bias):
    """(rows, D_in) x (n_dir, D_in, 4H) + (n_dir, 1, 4H) -> (n_dir, rows, 4H)."""
    rows, D_in = x2d.shape
    n_dir, _, G = w_ih_t.shape
    rt = _pick_row_tile(rows)
    return pl.pallas_call(
        _gates_kernel,
        out_shape=jax.ShapeDtypeStruct((n_dir, rows, G), jnp.float32),
        grid_spec=pltpu.PrefetchScalarGridSpec(
            num_scalar_prefetch=0,
            grid=(n_dir, rows // rt),
            in_specs=[
                pl.BlockSpec((rt, D_in), lambda d, r: (r, 0)),
                pl.BlockSpec((None, D_in, G), lambda d, r: (d, 0, 0)),
                pl.BlockSpec((None, 1, G), lambda d, r: (d, 0, 0)),
            ],
            out_specs=pl.BlockSpec((None, rt, G), lambda d, r: (d, r, 0)),
        ),
        compiler_params=pltpu.CompilerParams(
            dimension_semantics=("parallel", "parallel")),
    )(x2d, w_ih_t, bias)


# ----------------------------------------------------------------------------
# Kernel 2: time-chunked bidirectional LSTM recurrence (h/c in VMEM scratch)
# ----------------------------------------------------------------------------
def _make_recurrence_kernel(n_dir, Tc, H, unroll):
    def kernel(gx_ref, whh_ref, out_ref, h_scr, c_scr):
        r = pl.program_id(1)

        @pl.when(r == 0)
        def _():
            h_scr[...] = jnp.zeros_like(h_scr)
            c_scr[...] = jnp.zeros_like(c_scr)

        whh = whh_ref[...]                              # (H, 4H)

        def make_step(reverse):
            def step(s, carry):
                h, c = carry
                lt = (Tc - 1 - s) if reverse else s
                g = gx_ref[lt] + jnp.dot(h, whh,
                                         preferred_element_type=jnp.float32)
                # PyTorch gate order: i, f, g, o
                i = jax.nn.sigmoid(g[:, 0 * H:1 * H])
                f = jax.nn.sigmoid(g[:, 1 * H:2 * H])
                gg = jnp.tanh(g[:, 2 * H:3 * H])
                o = jax.nn.sigmoid(g[:, 3 * H:4 * H])
                c_new = f * c + i * gg
                h_new = o * jnp.tanh(c_new)
                out_ref[lt] = h_new.astype(out_ref.dtype)
                return h_new, c_new
            return step

        def run(reverse):
            h, c = jax.lax.fori_loop(0, Tc, make_step(reverse),
                                     (h_scr[...], c_scr[...]), unroll=unroll)
            h_scr[...] = h
            c_scr[...] = c

        if n_dir == 1:
            run(False)
        else:
            d = pl.program_id(0)

            @pl.when(d == 0)
            def _():
                run(False)

            @pl.when(d == 1)
            def _():
                run(True)

    return kernel


def lstm_recurrence_pallas(gates_x, w_hh_t):
    """gates_x: (n_dir, T, B, 4H), w_hh_t: (n_dir, H, 4H) -> (n_dir, T, B, H)."""
    n_dir, T, B, G = gates_x.shape
    H = w_hh_t.shape[1]
    Tc = _pick_time_chunk(T)
    n_chunks = T // Tc
    unroll = True if Tc <= 8 else 4

    def t_block(d, r):
        # forward direction (d=0): chunk r ; backward (d=1): n_chunks-1-r
        return d * (n_chunks - 1) + (1 - 2 * d) * r

    kernel = _make_recurrence_kernel(n_dir, Tc, H, unroll)
    return pl.pallas_call(
        kernel,
        out_shape=jax.ShapeDtypeStruct((n_dir, T, B, H), jnp.float32),
        grid_spec=pltpu.PrefetchScalarGridSpec(
            num_scalar_prefetch=0,
            grid=(n_dir, n_chunks),
            in_specs=[
                pl.BlockSpec((None, Tc, B, G),
                             lambda d, r: (d, t_block(d, r), 0, 0)),
                pl.BlockSpec((None, H, G), lambda d, r: (d, 0, 0)),
            ],
            out_specs=pl.BlockSpec((None, Tc, B, H),
                                   lambda d, r: (d, t_block(d, r), 0, 0)),
            scratch_shapes=[
                pltpu.VMEM((B, H), jnp.float32),   # h state (per core)
                pltpu.VMEM((B, H), jnp.float32),   # c state (per core)
            ],
        ),
        compiler_params=pltpu.CompilerParams(
            # direction is independent (2 TCs on v7x); time chunks are a
            # sequential recurrence -> must stay "arbitrary".
            dimension_semantics=("parallel", "arbitrary")),
    )(gates_x, w_hh_t)


# ----------------------------------------------------------------------------
# Kernel 3: fused lps + sigmoid(mask) heads over flattened (T*B) rows,
# with the fwd/bwd hidden concat folded into a sum of per-direction dots.
# ----------------------------------------------------------------------------
def _make_heads_kernel(n_dir, O):
    def kernel(h_ref, w_ref, b_ref, lps_ref, irm_ref):
        acc = jnp.dot(h_ref[0], w_ref[0], preferred_element_type=jnp.float32)
        for d in range(1, n_dir):
            acc = acc + jnp.dot(h_ref[d], w_ref[d],
                                preferred_element_type=jnp.float32)
        z = acc + b_ref[...]
        lps_ref[...] = z[:, :O].astype(lps_ref.dtype)
        irm_ref[...] = jax.nn.sigmoid(z[:, O:]).astype(irm_ref.dtype)
    return kernel


def heads_pallas(h, w_heads_t, b_heads):
    """h: (n_dir, rows, H), w_heads_t: (n_dir, H, 2O), b_heads: (1, 2O)."""
    n_dir, rows, H = h.shape
    O2 = w_heads_t.shape[-1]
    O = O2 // 2
    rt = _pick_row_tile(rows)
    kernel = _make_heads_kernel(n_dir, O)
    return pl.pallas_call(
        kernel,
        out_shape=(jax.ShapeDtypeStruct((rows, O), jnp.float32),
                   jax.ShapeDtypeStruct((rows, O), jnp.float32)),
        grid_spec=pltpu.PrefetchScalarGridSpec(
            num_scalar_prefetch=0,
            grid=(rows // rt,),
            in_specs=[
                pl.BlockSpec((n_dir, rt, H), lambda r: (0, r, 0)),
                pl.BlockSpec((n_dir, H, O2), lambda r: (0, 0, 0)),
                pl.BlockSpec((1, O2), lambda r: (0, 0)),
            ],
            out_specs=[pl.BlockSpec((rt, O), lambda r: (r, 0)),
                       pl.BlockSpec((rt, O), lambda r: (r, 0))],
        ),
        compiler_params=pltpu.CompilerParams(
            dimension_semantics=("parallel",)),
    )(h, w_heads_t, b_heads)


# ----------------------------------------------------------------------------
# Model forward (thin JAX glue around the three Pallas kernels)
# ----------------------------------------------------------------------------
def stage_forward(sp, x):
    T, B, D_in = x.shape
    n_dir, _, G = sp['w_ih_t'].shape
    H = G // 4
    rows = T * B
    gx = gates_pallas(x.reshape(rows, D_in), sp['w_ih_t'], sp['bias'])
    gx = gx.reshape(n_dir, T, B, G)
    h = lstm_recurrence_pallas(gx, sp['w_hh_t'])            # (n_dir, T, B, H)
    lps2d, irm2d = heads_pallas(h.reshape(n_dir, rows, H),
                                sp['w_heads_t'], sp['b_heads'])
    O = lps2d.shape[-1]
    return lps2d.reshape(T, B, O), irm2d.reshape(T, B, O)


def lstm_se_pl_dense_mtl_forward(params, input_features, fea_dim):
    lps_outputs, irm_outputs = [], []

    lps1, irm1 = stage_forward(params[0], input_features)
    lps_outputs.append(lps1)
    irm_outputs.append(irm1)

    input_frame = input_features[:, :, fea_dim * 3:fea_dim * 4]
    # TODO(synk): these small concats could be folded into split W_ih row-blocks
    # inside gates_pallas to avoid re-materializing cur_inputs in HBM.
    cur_inputs = jnp.concatenate((input_frame, lps_outputs[0]), axis=-1)
    lps2, irm2 = stage_forward(params[1], cur_inputs)
    lps_outputs.append(lps2)
    irm_outputs.append(irm2)

    cur_inputs = jnp.concatenate((cur_inputs, lps_outputs[1]), axis=-1)
    lps3, irm3 = stage_forward(params[2], cur_inputs)
    lps_outputs.append(lps3)
    irm_outputs.append(irm3)

    return lps_outputs, irm_outputs


# ----------------------------------------------------------------------------
# Parameter construction (deterministic, PyTorch-style uniform init)
# ----------------------------------------------------------------------------
def _uniform(key, shape, scale):
    return jax.random.uniform(key, shape, jnp.float32, minval=-scale, maxval=scale)


def init_stage_params(key, input_size, hidden_dim, output_dim, bidirectional):
    n_dir = 2 if bidirectional else 1
    stdv_l = 1.0 / np.sqrt(hidden_dim)
    keys = jax.random.split(key, 4 * n_dir + 4)

    w_ih_t, w_hh_t, bias = [], [], []
    for d in range(n_dir):
        k = keys[4 * d:4 * d + 4]
        w_ih = _uniform(k[0], (4 * hidden_dim, input_size), stdv_l)   # torch layout
        w_hh = _uniform(k[1], (4 * hidden_dim, hidden_dim), stdv_l)
        b_ih = _uniform(k[2], (4 * hidden_dim,), stdv_l)
        b_hh = _uniform(k[3], (4 * hidden_dim,), stdv_l)
        w_ih_t.append(w_ih.T)                                          # (D_in, 4H)
        w_hh_t.append(w_hh.T)                                          # (H, 4H)
        bias.append((b_ih + b_hh).reshape(1, 4 * hidden_dim))

    stdv_h = 1.0 / np.sqrt(hidden_dim * n_dir)
    kl_w, kl_b, km_w, km_b = (keys[4 * n_dir], keys[4 * n_dir + 1],
                              keys[4 * n_dir + 2], keys[4 * n_dir + 3])
    w_lps = _uniform(kl_w, (output_dim, hidden_dim * n_dir), stdv_h)
    b_lps = _uniform(kl_b, (output_dim,), stdv_h)
    w_msk = _uniform(km_w, (output_dim, hidden_dim * n_dir), stdv_h)
    b_msk = _uniform(km_b, (output_dim,), stdv_h)
    w_lps_t = w_lps.T                                                  # (n_dir*H, O)
    w_msk_t = w_msk.T

    # Fused head weights: per direction (H, 2O) = [W_lps_d | W_mask_d]
    w_heads_t = jnp.stack([
        jnp.concatenate([w_lps_t[d * hidden_dim:(d + 1) * hidden_dim],
                         w_msk_t[d * hidden_dim:(d + 1) * hidden_dim]], axis=-1)
        for d in range(n_dir)], axis=0)
    b_heads = jnp.concatenate([b_lps, b_msk]).reshape(1, 2 * output_dim)

    return dict(
        w_ih_t=jnp.stack(w_ih_t, axis=0),          # (n_dir, D_in, 4H)
        w_hh_t=jnp.stack(w_hh_t, axis=0),          # (n_dir, H, 4H)
        bias=jnp.stack(bias, axis=0),              # (n_dir, 1, 4H)
        w_heads_t=w_heads_t,                       # (n_dir, H, 2O)
        b_heads=b_heads,                           # (1, 2O)
        # un-fused copies, used only by the pure-JAX reference
        w_lps_t=w_lps_t, b_lps=b_lps.reshape(1, output_dim),
        w_mask_t=w_msk_t, b_mask=b_msk.reshape(1, output_dim),
    )


# ----------------------------------------------------------------------------
# Pure-JAX reference (lax.scan LSTM) for correctness checking
# ----------------------------------------------------------------------------
def _lstm_ref(x, w_ih_t, w_hh_t, bias, reverse):
    H = w_hh_t.shape[0]
    xs = x[::-1] if reverse else x
    hp = jax.lax.Precision.HIGHEST

    def step(carry, xt):
        h, c = carry
        g = (jnp.dot(xt, w_ih_t, precision=hp)
             + jnp.dot(h, w_hh_t, precision=hp) + bias)
        i = jax.nn.sigmoid(g[:, :H])
        f = jax.nn.sigmoid(g[:, H:2 * H])
        gg = jnp.tanh(g[:, 2 * H:3 * H])
        o = jax.nn.sigmoid(g[:, 3 * H:])
        c = f * c + i * gg
        h = o * jnp.tanh(c)
        return (h, c), h

    B = x.shape[1]
    init = (jnp.zeros((B, H), x.dtype), jnp.zeros((B, H), x.dtype))
    _, hs = jax.lax.scan(step, init, xs)
    return hs[::-1] if reverse else hs


def _reference_forward(params, x, fea_dim):
    hp = jax.lax.Precision.HIGHEST

    def stage(sp, inp):
        n_dir = sp['w_ih_t'].shape[0]
        outs = [_lstm_ref(inp, sp['w_ih_t'][d], sp['w_hh_t'][d], sp['bias'][d],
                          reverse=(d == 1)) for d in range(n_dir)]
        h = jnp.concatenate(outs, axis=-1) if n_dir > 1 else outs[0]
        lps = jnp.dot(h, sp['w_lps_t'], precision=hp) + sp['b_lps']
        irm = jax.nn.sigmoid(jnp.dot(h, sp['w_mask_t'], precision=hp)
                             + sp['b_mask'])
        return lps, irm

    lps_outputs, irm_outputs = [], []
    lps1, irm1 = stage(params[0], x)
    lps_outputs.append(lps1); irm_outputs.append(irm1)
    input_frame = x[:, :, fea_dim * 3:fea_dim * 4]
    cur = jnp.concatenate((input_frame, lps1), axis=-1)
    lps2, irm2 = stage(params[1], cur)
    lps_outputs.append(lps2); irm_outputs.append(irm2)
    cur = jnp.concatenate((cur, lps2), axis=-1)
    lps3, irm3 = stage(params[2], cur)
    lps_outputs.append(lps3); irm_outputs.append(irm3)
    return lps_outputs, irm_outputs


# ----------------------------------------------------------------------------
if __name__ == "__main__":
    # Small shapes consistent with the module: output_dim must equal fea_dim
    # (stage-2 LSTM input = fea_dim*2), context_len >= 4 (center-frame slice).
    T, B = 8, 2
    fea_dim, context_len = 8, 7
    hidden_dim = 32
    output_dim = fea_dim
    bidirectional = True                      # util.strtobool("true")

    key = jax.random.PRNGKey(0)
    kx, kp = jax.random.split(key)
    x = jax.random.normal(kx, (T, B, fea_dim * context_len), jnp.float32)

    stage_in = [fea_dim * context_len, fea_dim * 2, fea_dim * 3]
    stage_keys = jax.random.split(kp, 3)
    params = [init_stage_params(stage_keys[s], stage_in[s], hidden_dim,
                                output_dim, bidirectional) for s in range(3)]

    fwd = jax.jit(lstm_se_pl_dense_mtl_forward, static_argnums=2)
    lps_outs, irm_outs = fwd(params, x, fea_dim)
    jax.block_until_ready(lps_outs)
    jax.block_until_ready(irm_outs)

    # Correctness check vs. pure-JAX reference.
    lps_ref, irm_ref = _reference_forward(params, x, fea_dim)
    for got, ref in zip(lps_outs + irm_outs, lps_ref + irm_ref):
        np.testing.assert_allclose(np.asarray(got), np.asarray(ref),
                                   atol=5e-3, rtol=5e-3)

    print("KERNEL_OK")
</pallas_src>

<mosaic_0001>
module attributes {stable_mosaic.version = 11 : i64} {
  func.func @_gates_kernel(%arg0: i32, %arg1: i32, %arg2: memref<16x56xf32, #tpu.memory_space<vmem>>, %arg3: memref<1x56x128xf32, #tpu.memory_space<vmem>>, %arg4: memref<1x1x128xf32, #tpu.memory_space<vmem>>, %arg5: memref<1x16x128xf32, #tpu.memory_space<vmem>>) attributes {dimension_semantics = [#tpu.dimension_semantics<parallel>, #tpu.dimension_semantics<parallel>], iteration_bounds = array<i64: 2, 1>, scalar_prefetch = 0 : i64, scratch_operands = 0 : i64, tpu.core_type = #tpu.core_type<tc>, window_params = [{transform_indices = @transform_0, window_bounds = array<i64: 16, 56>}, {transform_indices = @transform_1, window_bounds = array<i64: 1, 56, 128>}, {transform_indices = @transform_2, window_bounds = array<i64: 1, 1, 128>}, {transform_indices = @transform_3, window_bounds = array<i64: 1, 16, 128>}]} {
    %c0 = arith.constant 0 : index
    %c0_0 = arith.constant 0 : index
    %0 = vector.load %arg2[%c0, %c0_0] : memref<16x56xf32, #tpu.memory_space<vmem>>, vector<16x56xf32>
    %c0_1 = arith.constant 0 : index
    %c0_2 = arith.constant 0 : index
    %c0_3 = arith.constant 0 : index
    %1 = vector.load %arg3[%c0_1, %c0_2, %c0_3] : memref<1x56x128xf32, #tpu.memory_space<vmem>>, vector<1x56x128xf32>
    %2 = vector.shape_cast %1 : vector<1x56x128xf32> to vector<56x128xf32>
    %cst = arith.constant dense<0.000000e+00> : vector<16x128xf32>
    %3 = tpu.matmul %0, %2, %cst {dimension_numbers = #tpu.dot_dimension_numbers<[1], [0], [0], [1], [0, 0, 1, 1], [], []>} : vector<16x56xf32>, vector<56x128xf32>, vector<16x128xf32> -> vector<16x128xf32>
    %c0_4 = arith.constant 0 : index
    %c0_5 = arith.constant 0 : index
    %c0_6 = arith.constant 0 : index
    %4 = vector.load %arg4[%c0_4, %c0_5, %c0_6] : memref<1x1x128xf32, #tpu.memory_space<vmem>>, vector<1x1x128xf32>
    %5 = vector.shape_cast %4 : vector<1x1x128xf32> to vector<1x128xf32>
    %6 = vector.broadcast %5 : vector<1x128xf32> to vector<16x128xf32>
    %7 = arith.addf %3, %6 : vector<16x128xf32>
    %c0_7 = arith.constant 0 : index
    %c0_8 = arith.constant 0 : index
    %c0_9 = arith.constant 0 : index
    %8 = vector.load %arg5[%c0_7, %c0_8, %c0_9] : memref<1x16x128xf32, #tpu.memory_space<vmem>>, vector<1x16x128xf32>
    %9 = vector.shape_cast %8 : vector<1x16x128xf32> to vector<16x128xf32>
    %10 = vector.shape_cast %7 : vector<16x128xf32> to vector<1x16x128xf32>
    tpu.vector_store %arg5[%c0_7, %c0_8, %c0_9], %10 {strides = array<i32>} : memref<1x16x128xf32, #tpu.memory_space<vmem>>, vector<1x16x128xf32>,
    return
  }
  func.func @transform_0(%arg0: i32, %arg1: i32) -> (i32, i32) {
    %c0_i32 = arith.constant 0 : i32
    %c0_i32_0 = arith.constant 0 : i32
    return %arg1, %c0_i32 : i32, i32
  }
  func.func @transform_1(%arg0: i32, %arg1: i32) -> (i32, i32, i32) {
    %c0_i32 = arith.constant 0 : i32
    %c0_i32_0 = arith.constant 0 : i32
    %c0_i32_1 = arith.constant 0 : i32
    return %arg0, %c0_i32, %c0_i32_0 : i32, i32, i32
  }
  func.func @transform_2(%arg0: i32, %arg1: i32) -> (i32, i32, i32) {
    %c0_i32 = arith.constant 0 : i32
    %c0_i32_0 = arith.constant 0 : i32
    %c0_i32_1 = arith.constant 0 : i32
    return %arg0, %c0_i32, %c0_i32_0 : i32, i32, i32
  }
  func.func @transform_3(%arg0: i32, %arg1: i32) -> (i32, i32, i32) {
    %c0_i32 = arith.constant 0 : i32
    %c0_i32_0 = arith.constant 0 : i32
    return %arg0, %arg1, %c0_i32 : i32, i32, i32
  }
}

module attributes {stable_mosaic.version = 11 : i64} {
  func.func @kernel(%arg0: i32, %arg1: i32, %arg2: memref<1x8x2x128xf32, #tpu.memory_space<vmem>>, %arg3: memref<1x32x128xf32, #tpu.memory_space<vmem>>, %arg4: memref<1x8x2x32xf32, #tpu.memory_space<vmem>>, %arg5: memref<2x32xf32, #tpu.memory_space<vmem>>, %arg6: memref<2x32xf32, #tpu.memory_space<vmem>>) attributes {dimension_semantics = [#tpu.dimension_semantics<parallel>, #tpu.dimension_semantics<arbitrary>], iteration_bounds = array<i64: 2, 1>, scalar_prefetch = 0 : i64, scratch_operands = 2 : i64, tpu.core_type = #tpu.core_type<tc>, window_params = [{transform_indices = @transform_0, window_bounds = array<i64: 1, 8, 2, 128>}, {transform_indices = @transform_1, window_bounds = array<i64: 1, 32, 128>}, {transform_indices = @transform_2, window_bounds = array<i64: 1, 8, 2, 32>}]} {
    %c0_i32 = arith.constant 0 : i32
    %0 = arith.cmpi eq, %arg1, %c0_i32 : i32
    %1 = arith.extui %0 : i1 to i32
    %c0_i32_0 = arith.constant 0 : i32
    %2 = arith.cmpi ne, %1, %c0_i32_0 : i32
    scf.if %2 {
      %cst = arith.constant 0.000000e+00 : f32
      %11 = vector.broadcast %cst : f32 to vector<2x32xf32>
      %c0_6 = arith.constant 0 : index
      %c0_7 = arith.constant 0 : index
      %12 = vector.load %arg5[%c0_6, %c0_7] : memref<2x32xf32, #tpu.memory_space<vmem>>, vector<2x32xf32>
      tpu.vector_store %arg5[%c0_6, %c0_7], %11 {strides = array<i32>} : memref<2x32xf32, #tpu.memory_space<vmem>>, vector<2x32xf32>,
      %cst_8 = arith.constant 0.000000e+00 : f32
      %13 = vector.broadcast %cst_8 : f32 to vector<2x32xf32>
      %c0_9 = arith.constant 0 : index
      %c0_10 = arith.constant 0 : index
      %14 = vector.load %arg6[%c0_9, %c0_10] : memref<2x32xf32, #tpu.memory_space<vmem>>, vector<2x32xf32>
      tpu.vector_store %arg6[%c0_9, %c0_10], %13 {strides = array<i32>} : memref<2x32xf32, #tpu.memory_space<vmem>>, vector<2x32xf32>,
    } else {
    }
    %c0 = arith.constant 0 : index
    %c0_1 = arith.constant 0 : index
    %c0_2 = arith.constant 0 : index
    %3 = vector.load %arg3[%c0, %c0_1, %c0_2] : memref<1x32x128xf32, #tpu.memory_space<vmem>>, vector<1x32x128xf32>
    %4 = vector.shape_cast %3 : vector<1x32x128xf32> to vector<32x128xf32>
    %c0_i32_3 = arith.constant 0 : i32
    %5 = arith.cmpi eq, %arg0, %c0_i32_3 : i32
    %6 = arith.extui %5 : i1 to i32
    %c0_i32_4 = arith.constant 0 : i32
    %7 = arith.cmpi ne, %6, %c0_i32_4 : i32
    scf.if %7 {
      %c0_6 = arith.constant 0 : index
      %c0_7 = arith.constant 0 : index
      %11 = vector.load %arg5[%c0_6, %c0_7] : memref<2x32xf32, #tpu.memory_space<vmem>>, vector<2x32xf32>
      %c0_8 = arith.constant 0 : index
      %c0_9 = arith.constant 0 : index
      %12 = vector.load %arg6[%c0_8, %c0_9] : memref<2x32xf32, #tpu.memory_space<vmem>>, vector<2x32xf32>
      %c0_i32_10 = arith.constant 0 : i32
      %c0_11 = arith.constant 0 : index
      %13 = arith.index_cast %c0_i32_10 : i32 to index
      %c0_12 = arith.constant 0 : index
      %c0_13 = arith.constant 0 : index
      %14 = vector.load %arg2[%c0_11, %13, %c0_12, %c0_13] : memref<1x8x2x128xf32, #tpu.memory_space<vmem>>, vector<1x1x2x128xf32>
      %15 = vector.shape_cast %14 : vector<1x1x2x128xf32> to vector<2x128xf32>
      %cst = arith.constant dense<0.000000e+00> : vector<2x128xf32>
      %16 = tpu.matmul %11, %4, %cst {dimension_numbers = #tpu.dot_dimension_numbers<[1], [0], [0], [1], [0, 0, 1, 1], [], []>} : vector<2x32xf32>, vector<32x128xf32>, vector<2x128xf32> -> vector<2x128xf32>
      %17 = arith.addf %15, %16 : vector<2x128xf32>
      %18 = vector.extract_strided_slice %17 {offsets = [0, 0], sizes = [2, 32], strides = [1, 1]} : vector<2x128xf32> to vector<2x32xf32>
      %19 = arith.negf %18 : vector<2x32xf32>
      %20 = math.exp %19 : vector<2x32xf32>
      %cst_14 = arith.constant 1.000000e+00 : f32
      %21 = vector.broadcast %cst_14 : f32 to vector<2x32xf32>
      %22 = arith.addf %21, %20 : vector<2x32xf32>
      %23 = arith.divf %21, %22 : vector<2x32xf32>
      %24 = vector.extract_strided_slice %17 {offsets = [0, 32], sizes = [2, 32], strides = [1, 1]} : vector<2x128xf32> to vector<2x32xf32>
      %25 = arith.negf %24 : vector<2x32xf32>
      %26 = math.exp %25 : vector<2x32xf32>
      %cst_15 = arith.constant 1.000000e+00 : f32
      %27 = vector.broadcast %cst_15 : f32 to vector<2x32xf32>
      %28 = arith.addf %27, %26 : vector<2x32xf32>
      %29 = arith.divf %27, %28 : vector<2x32xf32>
      %30 = vector.extract_strided_slice %17 {offsets = [0, 64], sizes = [2, 32], strides = [1, 1]} : vector<2x128xf32> to vector<2x32xf32>
      %31 = math.tanh %30 : vector<2x32xf32>
      %32 = vector.extract_strided_slice %17 {offsets = [0, 96], sizes = [2, 32], strides = [1, 1]} : vector<2x128xf32> to vector<2x32xf32>
      %33 = arith.negf %32 : vector<2x32xf32>
      %34 = math.exp %33 : vector<2x32xf32>
      %cst_16 = arith.constant 1.000000e+00 : f32
      %35 = vector.broadcast %cst_16 : f32 to vector<2x32xf32>
      %36 = arith.addf %35, %34 : vector<2x32xf32>
      %37 = arith.divf %35, %36 : vector<2x32xf32>
      %38 = arith.mulf %29, %12 : vector<2x32xf32>
      %39 = arith.mulf %23, %31 : vector<2x32xf32>
      %40 = arith.addf %38, %39 : vector<2x32xf32>
      %41 = math.tanh %40 : vector<2x32xf32>
      %42 = arith.mulf %37, %41 : vector<2x32xf32>
      %c0_17 = arith.constant 0 : index
      %43 = arith.index_cast %c0_i32_10 : i32 to index
      %c0_18 = arith.constant 0 : index
      %c0_19 = arith.constant 0 : index
      %44 = vector.load %arg4[%c0_17, %43, %c0_18, %c0_19] : memref<1x8x2x32xf32, #tpu.memory_space<vmem>>, vector<1x1x2x32xf32>
      %45 = vector.shape_cast %44 : vector<1x1x2x32xf32> to vector<2x32xf32>
      %46 = vector.shape_cast %42 : vector<2x32xf32> to vector<1x1x2x32xf32>
      tpu.vector_store %arg4[%c0_17, %43, %c0_18, %c0_19], %46 {strides = array<i32>} : memref<1x8x2x32xf32, #tpu.memory_space<vmem>>, vector<1x1x2x32xf32>,
      %c1_i32_20 = arith.constant 1 : i32
      %c0_21 = arith.constant 0 : index
      %47 = arith.index_cast %c1_i32_20 : i32 to index
      %c0_22 = arith.constant 0 : index
      %c0_23 = arith.constant 0 : index
      %48 = vector.load %arg2[%c0_21, %47, %c0_22, %c0_23] : memref<1x8x2x128xf32, #tpu.memory_space<vmem>>, vector<1x1x2x128xf32>
      %49 = vector.shape_cast %48 : vector<1x1x2x128xf32> to vector<2x128xf32>
      %cst_24 = arith.constant dense<0.000000e+00> : vector<2x128xf32>
      %50 = tpu.matmul %42, %4, %cst_24 {dimension_numbers = #tpu.dot_dimension_numbers<[1], [0], [0], [1], [0, 0, 1, 1], [], []>} : vector<2x32xf32>, vector<32x128xf32>, vector<2x128xf32> -> vector<2x128xf32>
      %51 = arith.addf %49, %50 : vector<2x128xf32>
      %52 = vector.extract_strided_slice %51 {offsets = [0, 0], sizes = [2, 32], strides = [1, 1]} : vector<2x128xf32> to vector<2x32xf32>
      %53 = arith.negf %52 : vector<2x32xf32>
      %54 = math.exp %53 : vector<2x32xf32>
      %cst_25 = arith.constant 1.000000e+00 : f32
      %55 = vector.broadcast %cst_25 : f32 to vector<2x32xf32>
      %56 = arith.addf %55, %54 : vector<2x32xf32>
      %57 = arith.divf %55, %56 : vector<2x32xf32>
      %58 = vector.extract_strided_slice %51 {offsets = [0, 32], sizes = [2, 32], strides = [1, 1]} : vector<2x128xf32> to vector<2x32xf32>
      %59 = arith.negf %58 : vector<2x32xf32>
      %60 = math.exp %59 : vector<2x32xf32>
      %cst_26 = arith.constant 1.000000e+00 : f32
      %61 = vector.broadcast %cst_26 : f32 to vector<2x32xf32>
      %62 = arith.addf %61, %60 : vector<2x32xf32>
      %63 = arith.divf %61, %62 : vector<2x32xf32>
      %64 = vector.extract_strided_slice %51 {offsets = [0, 64], sizes = [2, 32], strides = [1, 1]} : vector<2x128xf32> to vector<2x32xf32>
      %65 = math.tanh %64 : vector<2x32xf32>
      %66 = vector.extract_strided_slice %51 {offsets = [0, 96], sizes = [2, 32], strides = [1, 1]} : vector<2x128xf32> to vector<2x32xf32>
      %67 = arith.negf %66 : vector<2x32xf32>
      %68 = math.exp %67 : vector<2x32xf32>
      %cst_27 = arith.constant 1.000000e+00 : f32
      %69 = vector.broadcast %cst_27 : f32 to vector<2x32xf32>
      %70 = arith.addf %69, %68 : vector<2x32xf32>
      %71 = arith.divf %69, %70 : vector<2x32xf32>
      %72 = arith.mulf %63, %40 : vector<2x32xf32>
      %73 = arith.mulf %57, %65 : vector<2x32xf32>
      %74 = arith.addf %72, %73 : vector<2x32xf32>
      %75 = math.tanh %74 : vector<2x32xf32>
      %76 = arith.mulf %71, %75 : vector<2x32xf32>
      %c0_28 = arith.constant 0 : index
      %77 = arith.index_cast %c1_i32_20 : i32 to index
      %c0_29 = arith.constant 0 : index
      %c0_30 = arith.constant 0 : index
      %78 = vector.load %arg4[%c0_28, %77, %c0_29, %c0_30] : memref<1x8x2x32xf32, #tpu.memory_space<vmem>>, vector<1x1x2x32xf32>
      %79 = vector.shape_cast %78 : vector<1x1x2x32xf32> to vector<2x32xf32>
      %80 = vector.shape_cast %76 : vector<2x32xf32> to vector<1x1x2x32xf32>
      tpu.vector_store %arg4[%c0_28, %77, %c0_29, %c0_30], %80 {strides = array<i32>} : memref<1x8x2x32xf32, #tpu.memory_space<vmem>>, vector<1x1x2x32xf32>,
      %c2_i32 = arith.constant 2 : i32
      %c0_31 = arith.constant 0 : index
      %81 = arith.index_cast %c2_i32 : i32 to index
      %c0_32 = arith.constant 0 : index
      %c0_33 = arith.constant 0 : index
      %82 = vector.load %arg2[%c0_31, %81, %c0_32, %c0_33] : memref<1x8x2x128xf32, #tpu.memory_space<vmem>>, vector<1x1x2x128xf32>
      %83 = vector.shape_cast %82 : vector<1x1x2x128xf32> to vector<2x128xf32>
      %cst_34 = arith.constant dense<0.000000e+00> : vector<2x128xf32>
      %84 = tpu.matmul %76, %4, %cst_34 {dimension_numbers = #tpu.dot_dimension_numbers<[1], [0], [0], [1], [0, 0, 1, 1], [], []>} : vector<2x32xf32>, vector<32x128xf32>, vector<2x128xf32> -> vector<2x128xf32>
      %85 = arith.addf %83, %84 : vector<2x128xf32>
      %86 = vector.extract_strided_slice %85 {offsets = [0, 0], sizes = [2, 32], strides = [1, 1]} : vector<2x128xf32> to vector<2x32xf32>
      %87 = arith.negf %86 : vector<2x32xf32>
      %88 = math.exp %87 : vector<2x32xf32>
      %cst_35 = arith.constant 1.000000e+00 : f32
      %89 = vector.broadcast %cst_35 : f32 to vector<2x32xf32>
      %90 = arith.addf %89, %88 : vector<2x32xf32>
      %91 = arith.divf %89, %90 : vector<2x32xf32>
      %92 = vector.extract_strided_slice %85 {offsets = [0, 32], sizes = [2, 32], strides = [1, 1]} : vector<2x128xf32> to vector<2x32xf32>
      %93 = arith.negf %92 : vector<2x32xf32>
      %94 = math.exp %93 : vector<2x32xf32>
      %cst_36 = arith.constant 1.000000e+00 : f32
      %95 = vector.broadcast %cst_36 : f32 to vector<2x32xf32>
      %96 = arith.addf %95, %94 : vector<2x32xf32>
      %97 = arith.divf %95, %96 : vector<2x32xf32>
      %98 = vector.extract_strided_slice %85 {offsets = [0, 64], sizes = [2, 32], strides = [1, 1]} : vector<2x128xf32> to vector<2x32xf32>
      %99 = math.tanh %98 : vector<2x32xf32>
      %100 = vector.extract_strided_slice %85 {offsets = [0, 96], sizes = [2, 32], strides = [1, 1]} : vector<2x128xf32> to vector<2x32xf32>
      %101 = arith.negf %100 : vector<2x32xf32>
      %102 = math.exp %101 : vector<2x32xf32>
      %cst_37 = arith.constant 1.000000e+00 : f32
      %103 = vector.broadcast %cst_37 : f32 to vector<2x32xf32>
      %104 = arith.addf %103, %102 : vector<2x32xf32>
      %105 = arith.divf %103, %104 : vector<2x32xf32>
      %106 = arith.mulf %97, %74 : vector<2x32xf32>
      %107 = arith.mulf %91, %99 : vector<2x32xf32>
      %108 = arith.addf %106, %107 : vector<2x32xf32>
      %109 = math.tanh %108 : vector<2x32xf32>
      %110 = arith.mulf %105, %109 : vector<2x32xf32>
      %c0_38 = arith.constant 0 : index
      %111 = arith.index_cast %c2_i32 : i32 to index
      %c0_39 = arith.constant 0 : index
      %c0_40 = arith.constant 0 : index
      %112 = vector.load %arg4[%c0_38, %111, %c0_39, %c0_40] : memref<1x8x2x32xf32, #tpu.memory_space<vmem>>, vector<1x1x2x32xf32>
      %113 = vector.shape_cast %112 : vector<1x1x2x32xf32> to vector<2x32xf32>
      %114 = vector.shape_cast %110 : vector<2x32xf32> to vector<1x1x2x32xf32>
      tpu.vector_store %arg4[%c0_38, %111, %c0_39, %c0_40], %114 {strides = array<i32>} : memref<1x8x2x32xf32, #tpu.memory_space<vmem>>, vector<1x1x2x32xf32>,
      %c3_i32 = arith.constant 3 : i32
      %c0_41 = arith.constant 0 : index
      %115 = arith.index_cast %c3_i32 : i32 to index
      %c0_42 = arith.constant 0 : index
      %c0_43 = arith.constant 0 : index
      %116 = vector.load %arg2[%c0_41, %115, %c0_42, %c0_43] : memref<1x8x2x128xf32, #tpu.memory_space<vmem>>, vector<1x1x2x128xf32>
      %117 = vector.shape_cast %116 : vector<1x1x2x128xf32> to vector<2x128xf32>
      %cst_44 = arith.constant dense<0.000000e+00> : vector<2x128xf32>
      %118 = tpu.matmul %110, %4, %cst_44 {dimension_numbers = #tpu.dot_dimension_numbers<[1], [0], [0], [1], [0, 0, 1, 1], [], []>} : vector<2x32xf32>, vector<32x128xf32>, vector<2x128xf32> -> vector<2x128xf32>
      %119 = arith.addf %117, %118 : vector<2x128xf32>
      %120 = vector.extract_strided_slice %119 {offsets = [0, 0], sizes = [2, 32], strides = [1, 1]} : vector<2x128xf32> to vector<2x32xf32>
      %121 = arith.negf %120 : vector<2x32xf32>
      %122 = math.exp %121 : vector<2x32xf32>
      %cst_45 = arith.constant 1.000000e+00 : f32
      %123 = vector.broadcast %cst_45 : f32 to vector<2x32xf32>
      %124 = arith.addf %123, %122 : vector<2x32xf32>
      %125 = arith.divf %123, %124 : vector<2x32xf32>
      %126 = vector.extract_strided_slice %119 {offsets = [0, 32], sizes = [2, 32], strides = [1, 1]} : vector<2x128xf32> to vector<2x32xf32>
      %127 = arith.negf %126 : vector<2x32xf32>
      %128 = math.exp %127 : vector<2x32xf32>
      %cst_46 = arith.constant 1.000000e+00 : f32
      %129 = vector.broadcast %cst_46 : f32 to vector<2x32xf32>
      %130 = arith.addf %129, %128 : vector<2x32xf32>
      %131 = arith.divf %129, %130 : vector<2x32xf32>
      %132 = vector.extract_strided_slice %119 {offsets = [0, 64], sizes = [2, 32], strides = [1, 1]} : vector<2x128xf32> to vector<2x32xf32>
      %133 = math.tanh %132 : vector<2x32xf32>
      %134 = vector.extract_strided_slice %119 {offsets = [0, 96], sizes = [2, 32], strides = [1, 1]} : vector<2x128xf32> to vector<2x32xf32>
      %135 = arith.negf %134 : vector<2x32xf32>
      %136 = math.exp %135 : vector<2x32xf32>
      %cst_47 = arith.constant 1.000000e+00 : f32
      %137 = vector.broadcast %cst_47 : f32 to vector<2x32xf32>
      %138 = arith.addf %137, %136 : vector<2x32xf32>
      %139 = arith.divf %137, %138 : vector<2x32xf32>
      %140 = arith.mulf %131, %108 : vector<2x32xf32>
      %141 = arith.mulf %125, %133 : vector<2x32xf32>
      %142 = arith.addf %140, %141 : vector<2x32xf32>
      %143 = math.tanh %142 : vector<2x32xf32>
      %144 = arith.mulf %139, %143 : vector<2x32xf32>
      %c0_48 = arith.constant 0 : index
      %145 = arith.index_cast %c3_i32 : i32 to index
      %c0_49 = arith.constant 0 : index
      %c0_50 = arith.constant 0 : index
      %146 = vector.load %arg4[%c0_48, %145, %c0_49, %c0_50] : memref<1x8x2x32xf32, #tpu.memory_space<vmem>>, vector<1x1x2x32xf32>
      %147 = vector.shape_cast %146 : vector<1x1x2x32xf32> to vector<2x32xf32>
      %148 = vector.shape_cast %144 : vector<2x32xf32> to vector<1x1x2x32xf32>
      tpu.vector_store %arg4[%c0_48, %145, %c0_49, %c0_50], %148 {strides = array<i32>} : memref<1x8x2x32xf32, #tpu.memory_space<vmem>>, vector<1x1x2x32xf32>,
      %c4_i32 = arith.constant 4 : i32
      %c0_51 = arith.constant 0 : index
      %149 = arith.index_cast %c4_i32 : i32 to index
      %c0_52 = arith.constant 0 : index
      %c0_53 = arith.constant 0 : index
      %150 = vector.load %arg2[%c0_51, %149, %c0_52, %c0_53] : memref<1x8x2x128xf32, #tpu.memory_space<vmem>>, vector<1x1x2x128xf32>
      %151 = vector.shape_cast %150 : vector<1x1x2x128xf32> to vector<2x128xf32>
      %cst_54 = arith.constant dense<0.000000e+00> : vector<2x128xf32>
      %152 = tpu.matmul %144, %4, %cst_54 {dimension_numbers = #tpu.dot_dimension_numbers<[1], [0], [0], [1], [0, 0, 1, 1], [], []>} : vector<2x32xf32>, vector<32x128xf32>, vector<2x128xf32> -> vector<2x128xf32>
      %153 = arith.addf %151, %152 : vector<2x128xf32>
      %154 = vector.extract_strided_slice %153 {offsets = [0, 0], sizes = [2, 32], strides = [1, 1]} : vector<2x128xf32> to vector<2x32xf32>
      %155 = arith.negf %154 : vector<2x32xf32>
      %156 = math.exp %155 : vector<2x32xf32>
      %cst_55 = arith.constant 1.000000e+00 : f32
      %157 = vector.broadcast %cst_55 : f32 to vector<2x32xf32>
      %158 = arith.addf %157, %156 : vector<2x32xf32>
      %159 = arith.divf %157, %158 : vector<2x32xf32>
      %160 = vector.extract_strided_slice %153 {offsets = [0, 32], sizes = [2, 32], strides = [1, 1]} : vector<2x128xf32> to vector<2x32xf32>
      %161 = arith.negf %160 : vector<2x32xf32>
      %162 = math.exp %161 : vector<2x32xf32>
      %cst_56 = arith.constant 1.000000e+00 : f32
      %163 = vector.broadcast %cst_56 : f32 to vector<2x32xf32>
      %164 = arith.addf %163, %162 : vector<2x32xf32>
      %165 = arith.divf %163, %164 : vector<2x32xf32>
      %166 = vector.extract_strided_slice %153 {offsets = [0, 64], sizes = [2, 32], strides = [1, 1]} : vector<2x128xf32> to vector<2x32xf32>
      %167 = math.tanh %166 : vector<2x32xf32>
      %168 = vector.extract_strided_slice %153 {offsets = [0, 96], sizes = [2, 32], strides = [1, 1]} : vector<2x128xf32> to vector<2x32xf32>
      %169 = arith.negf %168 : vector<2x32xf32>
      %170 = math.exp %169 : vector<2x32xf32>
      %cst_57 = arith.constant 1.000000e+00 : f32
      %171 = vector.broadcast %cst_57 : f32 to vector<2x32xf32>
      %172 = arith.addf %171, %170 : vector<2x32xf32>
      %173 = arith.divf %171, %172 : vector<2x32xf32>
      %174 = arith.mulf %165, %142 : vector<2x32xf32>
      %175 = arith.mulf %159, %167 : vector<2x32xf32>
      %176 = arith.addf %174, %175 : vector<2x32xf32>
      %177 = math.tanh %176 : vector<2x32xf32>
      %178 = arith.mulf %173, %177 : vector<2x32xf32>
      %c0_58 = arith.constant 0 : index
      %179 = arith.index_cast %c4_i32 : i32 to index
      %c0_59 = arith.constant 0 : index
      %c0_60 = arith.constant 0 : index
      %180 = vector.load %arg4[%c0_58, %179, %c0_59, %c0_60] : memref<1x8x2x32xf32, #tpu.memory_space<vmem>>, vector<1x1x2x32xf32>
      %181 = vector.shape_cast %180 : vector<1x1x2x32xf32> to vector<2x32xf32>
      %182 = vector.shape_cast %178 : vector<2x32xf32> to vector<1x1x2x32xf32>
      tpu.vector_store %arg4[%c0_58, %179, %c0_59, %c0_60], %182 {strides = array<i32>} : memref<1x8x2x32xf32, #tpu.memory_space<vmem>>, vector<1x1x2x32xf32>,
      %c5_i32 = arith.constant 5 : i32
      %c0_61 = arith.constant 0 : index
      %183 = arith.index_cast %c5_i32 : i32 to index
      %c0_62 = arith.constant 0 : index
      %c0_63 = arith.constant 0 : index
      %184 = vector.load %arg2[%c0_61, %183, %c0_62, %c0_63] : memref<1x8x2x128xf32, #tpu.memory_space<vmem>>, vector<1x1x2x128xf32>
      %185 = vector.shape_cast %184 : vector<1x1x2x128xf32> to vector<2x128xf32>
      %cst_64 = arith.constant dense<0.000000e+00> : vector<2x128xf32>
      %186 = tpu.matmul %178, %4, %cst_64 {dimension_numbers = #tpu.dot_dimension_numbers<[1], [0], [0], [1], [0, 0, 1, 1], [], []>} : vector<2x32xf32>, vector<32x128xf32>, vector<2x128xf32> -> vector<2x128xf32>
      %187 = arith.addf %185, %186 : vector<2x128xf32>
      %188 = vector.extract_strided_slice %187 {offsets = [0, 0], sizes = [2, 32], strides = [1, 1]} : vector<2x128xf32> to vector<2x32xf32>
      %189 = arith.negf %188 : vector<2x32xf32>
      %190 = math.exp %189 : vector<2x32xf32>
      %cst_65 = arith.constant 1.000000e+00 : f32
      %191 = vector.broadcast %cst_65 : f32 to vector<2x32xf32>
      %192 = arith.addf %191, %190 : vector<2x32xf32>
      %193 = arith.divf %191, %192 : vector<2x32xf32>
      %194 = vector.extract_strided_slice %187 {offsets = [0, 32], sizes = [2, 32], strides = [1, 1]} : vector<2x128xf32> to vector<2x32xf32>
      %195 = arith.negf %194 : vector<2x32xf32>
      %196 = math.exp %195 : vector<2x32xf32>
      %cst_66 = arith.constant 1.000000e+00 : f32
      %197 = vector.broadcast %cst_66 : f32 to vector<2x32xf32>
      %198 = arith.addf %197, %196 : vector<2x32xf32>
      %199 = arith.divf %197, %198 : vector<2x32xf32>
      %200 = vector.extract_strided_slice %187 {offsets = [0, 64], sizes = [2, 32], strides = [1, 1]} : vector<2x128xf32> to vector<2x32xf32>
      %201 = math.tanh %200 : vector<2x32xf32>
      %202 = vector.extract_strided_slice %187 {offsets = [0, 96], sizes = [2, 32], strides = [1, 1]} : vector<2x128xf32> to vector<2x32xf32>
      %203 = arith.negf %202 : vector<2x32xf32>
      %204 = math.exp %203 : vector<2x32xf32>
      %cst_67 = arith.constant 1.000000e+00 : f32
      %205 = vector.broadcast %cst_67 : f32 to vector<2x32xf32>
      %206 = arith.addf %205, %204 : vector<2x32xf32>
      %207 = arith.divf %205, %206 : vector<2x32xf32>
      %208 = arith.mulf %199, %176 : vector<2x32xf32>
      %209 = arith.mulf %193, %201 : vector<2x32xf32>
      %210 = arith.addf %208, %209 : vector<2x32xf32>
      %211 = math.tanh %210 : vector<2x32xf32>
      %212 = arith.mulf %207, %211 : vector<2x32xf32>
      %c0_68 = arith.constant 0 : index
      %213 = arith.index_cast %c5_i32 : i32 to index
      %c0_69 = arith.constant 0 : index
      %c0_70 = arith.constant 0 : index
      %214 = vector.load %arg4[%c0_68, %213, %c0_69, %c0_70] : memref<1x8x2x32xf32, #tpu.memory_space<vmem>>, vector<1x1x2x32xf32>
      %215 = vector.shape_cast %214 : vector<1x1x2x32xf32> to vector<2x32xf32>
      %216 = vector.shape_cast %212 : vector<2x32xf32> to vector<1x1x2x32xf32>
      tpu.vector_store %arg4[%c0_68, %213, %c0_69, %c0_70], %216 {strides = array<i32>} : memref<1x8x2x32xf32, #tpu.memory_space<vmem>>, vector<1x1x2x32xf32>,
      %c6_i32 = arith.constant 6 : i32
      %c0_71 = arith.constant 0 : index
      %217 = arith.index_cast %c6_i32 : i32 to index
      %c0_72 = arith.constant 0 : index
      %c0_73 = arith.constant 0 : index
      %218 = vector.load %arg2[%c0_71, %217, %c0_72, %c0_73] : memref<1x8x2x128xf32, #tpu.memory_space<vmem>>, vector<1x1x2x128xf32>
      %219 = vector.shape_cast %218 : vector<1x1x2x128xf32> to vector<2x128xf32>
      %cst_74 = arith.constant dense<0.000000e+00> : vector<2x128xf32>
      %220 = tpu.matmul %212, %4, %cst_74 {dimension_numbers = #tpu.dot_dimension_numbers<[1], [0], [0], [1], [0, 0, 1, 1], [], []>} : vector<2x32xf32>, vector<32x128xf32>, vector<2x128xf32> -> vector<2x128xf32>
      %221 = arith.addf %219, %220 : vector<2x128xf32>
      %222 = vector.extract_strided_slice %221 {offsets = [0, 0], sizes = [2, 32], strides = [1, 1]} : vector<2x128xf32> to vector<2x32xf32>
      %223 = arith.negf %222 : vector<2x32xf32>
      %224 = math.exp %223 : vector<2x32xf32>
      %cst_75 = arith.constant 1.000000e+00 : f32
      %225 = vector.broadcast %cst_75 : f32 to vector<2x32xf32>
      %226 = arith.addf %225, %224 : vector<2x32xf32>
      %227 = arith.divf %225, %226 : vector<2x32xf32>
      %228 = vector.extract_strided_slice %221 {offsets = [0, 32], sizes = [2, 32], strides = [1, 1]} : vector<2x128xf32> to vector<2x32xf32>
      %229 = arith.negf %228 : vector<2x32xf32>
      %230 = math.exp %229 : vector<2x32xf32>
      %cst_76 = arith.constant 1.000000e+00 : f32
      %231 = vector.broadcast %cst_76 : f32 to vector<2x32xf32>
      %232 = arith.addf %231, %230 : vector<2x32xf32>
      %233 = arith.divf %231, %232 : vector<2x32xf32>
      %234 = vector.extract_strided_slice %221 {offsets = [0, 64], sizes = [2, 32], strides = [1, 1]} : vector<2x128xf32> to vector<2x32xf32>
      %235 = math.tanh %234 : vector<2x32xf32>
      %236 = vector.extract_strided_slice %221 {offsets = [0, 96], sizes = [2, 32], strides = [1, 1]} : vector<2x128xf32> to vector<2x32xf32>
      %237 = arith.negf %236 : vector<2x32xf32>
      %238 = math.exp %237 : vector<2x32xf32>
      %cst_77 = arith.constant 1.000000e+00 : f32
      %239 = vector.broadcast %cst_77 : f32 to vector<2x32xf32>
      %240 = arith.addf %239, %238 : vector<2x32xf32>
      %241 = arith.divf %239, %240 : vector<2x32xf32>
      %242 = arith.mulf %233, %210 : vector<2x32xf32>
      %243 = arith.mulf %227, %235 : vector<2x32xf32>
      %244 = arith.addf %242, %243 : vector<2x32xf32>
      %245 = math.tanh %244 : vector<2x32xf32>
      %246 = arith.mulf %241, %245 : vector<2x32xf32>
      %c0_78 = arith.constant 0 : index
      %247 = arith.index_cast %c6_i32 : i32 to index
      %c0_79 = arith.constant 0 : index
      %c0_80 = arith.constant 0 : index
      %248 = vector.load %arg4[%c0_78, %247, %c0_79, %c0_80] : memref<1x8x2x32xf32, #tpu.memory_space<vmem>>, vector<1x1x2x32xf32>
      %249 = vector.shape_cast %248 : vector<1x1x2x32xf32> to vector<2x32xf32>
      %250 = vector.shape_cast %246 : vector<2x32xf32> to vector<1x1x2x32xf32>
      tpu.vector_store %arg4[%c0_78, %247, %c0_79, %c0_80], %250 {strides = array<i32>} : memref<1x8x2x32xf32, #tpu.memory_space<vmem>>, vector<1x1x2x32xf32>,
      %c7_i32 = arith.constant 7 : i32
      %c0_81 = arith.constant 0 : index
      %251 = arith.index_cast %c7_i32 : i32 to index
      %c0_82 = arith.constant 0 : index
      %c0_83 = arith.constant 0 : index
      %252 = vector.load %arg2[%c0_81, %251, %c0_82, %c0_83] : memref<1x8x2x128xf32, #tpu.memory_space<vmem>>, vector<1x1x2x128xf32>
      %253 = vector.shape_cast %252 : vector<1x1x2x128xf32> to vector<2x128xf32>
      %cst_84 = arith.constant dense<0.000000e+00> : vector<2x128xf32>
      %254 = tpu.matmul %246, %4, %cst_84 {dimension_numbers = #tpu.dot_dimension_numbers<[1], [0], [0], [1], [0, 0, 1, 1], [], []>} : vector<2x32xf32>, vector<32x128xf32>, vector<2x128xf32> -> vector<2x128xf32>
      %255 = arith.addf %253, %254 : vector<2x128xf32>
      %256 = vector.extract_strided_slice %255 {offsets = [0, 0], sizes = [2, 32], strides = [1, 1]} : vector<2x128xf32> to vector<2x32xf32>
      %257 = arith.negf %256 : vector<2x32xf32>
      %258 = math.exp %257 : vector<2x32xf32>
      %cst_85 = arith.constant 1.000000e+00 : f32
      %259 = vector.broadcast %cst_85 : f32 to vector<2x32xf32>
      %260 = arith.addf %259, %258 : vector<2x32xf32>
      %261 = arith.divf %259, %260 : vector<2x32xf32>
      %262 = vector.extract_strided_slice %255 {offsets = [0, 32], sizes = [2, 32], strides = [1, 1]} : vector<2x128xf32> to vector<2x32xf32>
      %263 = arith.negf %262 : vector<2x32xf32>
      %264 = math.exp %263 : vector<2x32xf32>
      %cst_86 = arith.constant 1.000000e+00 : f32
      %265 = vector.broadcast %cst_86 : f32 to vector<2x32xf32>
      %266 = arith.addf %265, %264 : vector<2x32xf32>
      %267 = arith.divf %265, %266 : vector<2x32xf32>
      %268 = vector.extract_strided_slice %255 {offsets = [0, 64], sizes = [2, 32], strides = [1, 1]} : vector<2x128xf32> to vector<2x32xf32>
      %269 = math.tanh %268 : vector<2x32xf32>
      %270 = vector.extract_strided_slice %255 {offsets = [0, 96], sizes = [2, 32], strides = [1, 1]} : vector<2x128xf32> to vector<2x32xf32>
      %271 = arith.negf %270 : vector<2x32xf32>
      %272 = math.exp %271 : vector<2x32xf32>
      %cst_87 = arith.constant 1.000000e+00 : f32
      %273 = vector.broadcast %cst_87 : f32 to vector<2x32xf32>
      %274 = arith.addf %273, %272 : vector<2x32xf32>
      %275 = arith.divf %273, %274 : vector<2x32xf32>
      %276 = arith.mulf %267, %244 : vector<2x32xf32>
      %277 = arith.mulf %261, %269 : vector<2x32xf32>
      %278 = arith.addf %276, %277 : vector<2x32xf32>
      %279 = math.tanh %278 : vector<2x32xf32>
      %280 = arith.mulf %275, %279 : vector<2x32xf32>
      %c0_88 = arith.constant 0 : index
      %281 = arith.index_cast %c7_i32 : i32 to index
      %c0_89 = arith.constant 0 : index
      %c0_90 = arith.constant 0 : index
      %282 = vector.load %arg4[%c0_88, %281, %c0_89, %c0_90] : memref<1x8x2x32xf32, #tpu.memory_space<vmem>>, vector<1x1x2x32xf32>
      %283 = vector.shape_cast %282 : vector<1x1x2x32xf32> to vector<2x32xf32>
      %284 = vector.shape_cast %280 : vector<2x32xf32> to vector<1x1x2x32xf32>
      tpu.vector_store %arg4[%c0_88, %281, %c0_89, %c0_90], %284 {strides = array<i32>} : memref<1x8x2x32xf32, #tpu.memory_space<vmem>>, vector<1x1x2x32xf32>,
      %c8_i32 = arith.constant 8 : i32
      %c0_91 = arith.constant 0 : index
      %c0_92 = arith.constant 0 : index
      %285 = vector.load %arg5[%c0_91, %c0_92] : memref<2x32xf32, #tpu.memory_space<vmem>>, vector<2x32xf32>
      tpu.vector_store %arg5[%c0_91, %c0_92], %280 {strides = array<i32>} : memref<2x32xf32, #tpu.memory_space<vmem>>, vector<2x32xf32>,
      %c0_93 = arith.constant 0 : index
      %c0_94 = arith.constant 0 : index
      %286 = vector.load %arg6[%c0_93, %c0_94] : memref<2x32xf32, #tpu.memory_space<vmem>>, vector<2x32xf32>
      tpu.vector_store %arg6[%c0_93, %c0_94], %278 {strides = array<i32>} : memref<2x32xf32, #tpu.memory_space<vmem>>, vector<2x32xf32>,
    } else {
    }
    %c1_i32 = arith.constant 1 : i32
    %8 = arith.cmpi eq, %arg0, %c1_i32 : i32
    %9 = arith.extui %8 : i1 to i32
    %c0_i32_5 = arith.constant 0 : i32
    %10 = arith.cmpi ne, %9, %c0_i32_5 : i32
    scf.if %10 {
      %c0_6 = arith.constant 0 : index
      %c0_7 = arith.constant 0 : index
      %11 = vector.load %arg5[%c0_6, %c0_7] : memref<2x32xf32, #tpu.memory_space<vmem>>, vector<2x32xf32>
      %c0_8 = arith.constant 0 : index
      %c0_9 = arith.constant 0 : index
      %12 = vector.load %arg6[%c0_8, %c0_9] : memref<2x32xf32, #tpu.memory_space<vmem>>, vector<2x32xf32>
      %c0_i32_10 = arith.constant 0 : i32
      %c7_i32 = arith.constant 7 : i32
      %13 = arith.subi %c7_i32, %c0_i32_10 : i32
      %c0_11 = arith.constant 0 : index
      %14 = arith.index_cast %13 : i32 to index
      %c0_12 = arith.constant 0 : index
      %c0_13 = arith.constant 0 : index
      %15 = vector.load %arg2[%c0_11, %14, %c0_12, %c0_13] : memref<1x8x2x128xf32, #tpu.memory_space<vmem>>, vector<1x1x2x128xf32>
      %16 = vector.shape_cast %15 : vector<1x1x2x128xf32> to vector<2x128xf32>
      %cst = arith.constant dense<0.000000e+00> : vector<2x128xf32>
      %17 = tpu.matmul %11, %4, %cst {dimension_numbers = #tpu.dot_dimension_numbers<[1], [0], [0], [1], [0, 0, 1, 1], [], []>} : vector<2x32xf32>, vector<32x128xf32>, vector<2x128xf32> -> vector<2x128xf32>
      %18 = arith.addf %16, %17 : vector<2x128xf32>
      %19 = vector.extract_strided_slice %18 {offsets = [0, 0], sizes = [2, 32], strides = [1, 1]} : vector<2x128xf32> to vector<2x32xf32>
      %20 = arith.negf %19 : vector<2x32xf32>
      %21 = math.exp %20 : vector<2x32xf32>
      %cst_14 = arith.constant 1.000000e+00 : f32
      %22 = vector.broadcast %cst_14 : f32 to vector<2x32xf32>
      %23 = arith.addf %22, %21 : vector<2x32xf32>
      %24 = arith.divf %22, %23 : vector<2x32xf32>
      %25 = vector.extract_strided_slice %18 {offsets = [0, 32], sizes = [2, 32], strides = [1, 1]} : vector<2x128xf32> to vector<2x32xf32>
      %26 = arith.negf %25 : vector<2x32xf32>
      %27 = math.exp %26 : vector<2x32xf32>
      %cst_15 = arith.constant 1.000000e+00 : f32
      %28 = vector.broadcast %cst_15 : f32 to vector<2x32xf32>
      %29 = arith.addf %28, %27 : vector<2x32xf32>
      %30 = arith.divf %28, %29 : vector<2x32xf32>
      %31 = vector.extract_strided_slice %18 {offsets = [0, 64], sizes = [2, 32], strides = [1, 1]} : vector<2x128xf32> to vector<2x32xf32>
      %32 = math.tanh %31 : vector<2x32xf32>
      %33 = vector.extract_strided_slice %18 {offsets = [0, 96], sizes = [2, 32], strides = [1, 1]} : vector<2x128xf32> to vector<2x32xf32>
      %34 = arith.negf %33 : vector<2x32xf32>
      %35 = math.exp %34 : vector<2x32xf32>
      %cst_16 = arith.constant 1.000000e+00 : f32
      %36 = vector.broadcast %cst_16 : f32 to vector<2x32xf32>
      %37 = arith.addf %36, %35 : vector<2x32xf32>
      %38 = arith.divf %36, %37 : vector<2x32xf32>
      %39 = arith.mulf %30, %12 : vector<2x32xf32>
      %40 = arith.mulf %24, %32 : vector<2x32xf32>
      %41 = arith.addf %39, %40 : vector<2x32xf32>
      %42 = math.tanh %41 : vector<2x32xf32>
      %43 = arith.mulf %38, %42 : vector<2x32xf32>
      %c0_17 = arith.constant 0 : index
      %44 = arith.index_cast %13 : i32 to index
      %c0_18 = arith.constant 0 : index
      %c0_19 = arith.constant 0 : index
      %45 = vector.load %arg4[%c0_17, %44, %c0_18, %c0_19] : memref<1x8x2x32xf32, #tpu.memory_space<vmem>>, vector<1x1x2x32xf32>
      %46 = vector.shape_cast %45 : vector<1x1x2x32xf32> to vector<2x32xf32>
      %47 = vector.shape_cast %43 : vector<2x32xf32> to vector<1x1x2x32xf32>
      tpu.vector_store %arg4[%c0_17, %44, %c0_18, %c0_19], %47 {strides = array<i32>} : memref<1x8x2x32xf32, #tpu.memory_space<vmem>>, vector<1x1x2x32xf32>,
      %c1_i32_20 = arith.constant 1 : i32
      %c7_i32_21 = arith.constant 7 : i32
      %48 = arith.subi %c7_i32_21, %c1_i32_20 : i32
      %c0_22 = arith.constant 0 : index
      %49 = arith.index_cast %48 : i32 to index
      %c0_23 = arith.constant 0 : index
      %c0_24 = arith.constant 0 : index
      %50 = vector.load %arg2[%c0_22, %49, %c0_23, %c0_24] : memref<1x8x2x128xf32, #tpu.memory_space<vmem>>, vector<1x1x2x128xf32>
      %51 = vector.shape_cast %50 : vector<1x1x2x128xf32> to vector<2x128xf32>
      %cst_25 = arith.constant dense<0.000000e+00> : vector<2x128xf32>
      %52 = tpu.matmul %43, %4, %cst_25 {dimension_numbers = #tpu.dot_dimension_numbers<[1], [0], [0], [1], [0, 0, 1, 1], [], []>} : vector<2x32xf32>, vector<32x128xf32>, vector<2x128xf32> -> vector<2x128xf32>
      %53 = arith.addf %51, %52 : vector<2x128xf32>
      %54 = vector.extract_strided_slice %53 {offsets = [0, 0], sizes = [2, 32], strides = [1, 1]} : vector<2x128xf32> to vector<2x32xf32>
      %55 = arith.negf %54 : vector<2x32xf32>
      %56 = math.exp %55 : vector<2x32xf32>
      %cst_26 = arith.constant 1.000000e+00 : f32
      %57 = vector.broadcast %cst_26 : f32 to vector<2x32xf32>
      %58 = arith.addf %57, %56 : vector<2x32xf32>
      %59 = arith.divf %57, %58 : vector<2x32xf32>
      %60 = vector.extract_strided_slice %53 {offsets = [0, 32], sizes = [2, 32], strides = [1, 1]} : vector<2x128xf32> to vector<2x32xf32>
      %61 = arith.negf %60 : vector<2x32xf32>
      %62 = math.exp %61 : vector<2x32xf32>
      %cst_27 = arith.constant 1.000000e+00 : f32
      %63 = vector.broadcast %cst_27 : f32 to vector<2x32xf32>
      %64 = arith.addf %63, %62 : vector<2x32xf32>
      %65 = arith.divf %63, %64 : vector<2x32xf32>
      %66 = vector.extract_strided_slice %53 {offsets = [0, 64], sizes = [2, 32], strides = [1, 1]} : vector<2x128xf32> to vector<2x32xf32>
      %67 = math.tanh %66 : vector<2x32xf32>
      %68 = vector.extract_strided_slice %53 {offsets = [0, 96], sizes = [2, 32], strides = [1, 1]} : vector<2x128xf32> to vector<2x32xf32>
      %69 = arith.negf %68 : vector<2x32xf32>
      %70 = math.exp %69 : vector<2x32xf32>
      %cst_28 = arith.constant 1.000000e+00 : f32
      %71 = vector.broadcast %cst_28 : f32 to vector<2x32xf32>
      %72 = arith.addf %71, %70 : vector<2x32xf32>
      %73 = arith.divf %71, %72 : vector<2x32xf32>
      %74 = arith.mulf %65, %41 : vector<2x32xf32>
      %75 = arith.mulf %59, %67 : vector<2x32xf32>
      %76 = arith.addf %74, %75 : vector<2x32xf32>
      %77 = math.tanh %76 : vector<2x32xf32>
      %78 = arith.mulf %73, %77 : vector<2x32xf32>
      %c0_29 = arith.constant 0 : index
      %79 = arith.index_cast %48 : i32 to index
      %c0_30 = arith.constant 0 : index
      %c0_31 = arith.constant 0 : index
      %80 = vector.load %arg4[%c0_29, %79, %c0_30, %c0_31] : memref<1x8x2x32xf32, #tpu.memory_space<vmem>>, vector<1x1x2x32xf32>
      %81 = vector.shape_cast %80 : vector<1x1x2x32xf32> to vector<2x32xf32>
      %82 = vector.shape_cast %78 : vector<2x32xf32> to vector<1x1x2x32xf32>
      tpu.vector_store %arg4[%c0_29, %79, %c0_30, %c0_31], %82 {strides = array<i32>} : memref<1x8x2x32xf32, #tpu.memory_space<vmem>>, vector<1x1x2x32xf32>,
      %c2_i32 = arith.constant 2 : i32
      %c7_i32_32 = arith.constant 7 : i32
      %83 = arith.subi %c7_i32_32, %c2_i32 : i32
      %c0_33 = arith.constant 0 : index
      %84 = arith.index_cast %83 : i32 to index
      %c0_34 = arith.constant 0 : index
      %c0_35 = arith.constant 0 : index
      %85 = vector.load %arg2[%c0_33, %84, %c0_34, %c0_35] : memref<1x8x2x128xf32, #tpu.memory_space<vmem>>, vector<1x1x2x128xf32>
      %86 = vector.shape_cast %85 : vector<1x1x2x128xf32> to vector<2x128xf32>
      %cst_36 = arith.constant dense<0.000000e+00> : vector<2x128xf32>
      %87 = tpu.matmul %78, %4, %cst_36 {dimension_numbers = #tpu.dot_dimension_numbers<[1], [0], [0], [1], [0, 0, 1, 1], [], []>} : vector<2x32xf32>, vector<32x128xf32>, vector<2x128xf32> -> vector<2x128xf32>
      %88 = arith.addf %86, %87 : vector<2x128xf32>
      %89 = vector.extract_strided_slice %88 {offsets = [0, 0], sizes = [2, 32], strides = [1, 1]} : vector<2x128xf32> to vector<2x32xf32>
      %90 = arith.negf %89 : vector<2x32xf32>
      %91 = math.exp %90 : vector<2x32xf32>
      %cst_37 = arith.constant 1.000000e+00 : f32
      %92 = vector.broadcast %cst_37 : f32 to vector<2x32xf32>
      %93 = arith.addf %92, %91 : vector<2x32xf32>
      %94 = arith.divf %92, %93 : vector<2x32xf32>
      %95 = vector.extract_strided_slice %88 {offsets = [0, 32], sizes = [2, 32], strides = [1, 1]} : vector<2x128xf32> to vector<2x32xf32>
      %96 = arith.negf %95 : vector<2x32xf32>
      %97 = math.exp %96 : vector<2x32xf32>
      %cst_38 = arith.constant 1.000000e+00 : f32
      %98 = vector.broadcast %cst_38 : f32 to vector<2x32xf32>
      %99 = arith.addf %98, %97 : vector<2x32xf32>
      %100 = arith.divf %98, %99 : vector<2x32xf32>
      %101 = vector.extract_strided_slice %88 {offsets = [0, 64], sizes = [2, 32], strides = [1, 1]} : vector<2x128xf32> to vector<2x32xf32>
      %102 = math.tanh %101 : vector<2x32xf32>
      %103 = vector.extract_strided_slice %88 {offsets = [0, 96], sizes = [2, 32], strides = [1, 1]} : vector<2x128xf32> to vector<2x32xf32>
      %104 = arith.negf %103 : vector<2x32xf32>
      %105 = math.exp %104 : vector<2x32xf32>
      %cst_39 = arith.constant 1.000000e+00 : f32
      %106 = vector.broadcast %cst_39 : f32 to vector<2x32xf32>
      %107 = arith.addf %106, %105 : vector<2x32xf32>
      %108 = arith.divf %106, %107 : vector<2x32xf32>
      %109 = arith.mulf %100, %76 : vector<2x32xf32>
      %110 = arith.mulf %94, %102 : vector<2x32xf32>
      %111 = arith.addf %109, %110 : vector<2x32xf32>
      %112 = math.tanh %111 : vector<2x32xf32>
      %113 = arith.mulf %108, %112 : vector<2x32xf32>
      %c0_40 = arith.constant 0 : index
      %114 = arith.index_cast %83 : i32 to index
      %c0_41 = arith.constant 0 : index
      %c0_42 = arith.constant 0 : index
      %115 = vector.load %arg4[%c0_40, %114, %c0_41, %c0_42] : memref<1x8x2x32xf32, #tpu.memory_space<vmem>>, vector<1x1x2x32xf32>
      %116 = vector.shape_cast %115 : vector<1x1x2x32xf32> to vector<2x32xf32>
      %117 = vector.shape_cast %113 : vector<2x32xf32> to vector<1x1x2x32xf32>
      tpu.vector_store %arg4[%c0_40, %114, %c0_41, %c0_42], %117 {strides = array<i32>} : memref<1x8x2x32xf32, #tpu.memory_space<vmem>>, vector<1x1x2x32xf32>,
      %c3_i32 = arith.constant 3 : i32
      %c7_i32_43 = arith.constant 7 : i32
      %118 = arith.subi %c7_i32_43, %c3_i32 : i32
      %c0_44 = arith.constant 0 : index
      %119 = arith.index_cast %118 : i32 to index
      %c0_45 = arith.constant 0 : index
      %c0_46 = arith.constant 0 : index
      %120 = vector.load %arg2[%c0_44, %119, %c0_45, %c0_46] : memref<1x8x2x128xf32, #tpu.memory_space<vmem>>, vector<1x1x2x128xf32>
      %121 = vector.shape_cast %120 : vector<1x1x2x128xf32> to vector<2x128xf32>
      %cst_47 = arith.constant dense<0.000000e+00> : vector<2x128xf32>
      %122 = tpu.matmul %113, %4, %cst_47 {dimension_numbers = #tpu.dot_dimension_numbers<[1], [0], [0], [1], [0, 0, 1, 1], [], []>} : vector<2x32xf32>, vector<32x128xf32>, vector<2x128xf32> -> vector<2x128xf32>
      %123 = arith.addf %121, %122 : vector<2x128xf32>
      %124 = vector.extract_strided_slice %123 {offsets = [0, 0], sizes = [2, 32], strides = [1, 1]} : vector<2x128xf32> to vector<2x32xf32>
      %125 = arith.negf %124 : vector<2x32xf32>
      %126 = math.exp %125 : vector<2x32xf32>
      %cst_48 = arith.constant 1.000000e+00 : f32
      %127 = vector.broadcast %cst_48 : f32 to vector<2x32xf32>
      %128 = arith.addf %127, %126 : vector<2x32xf32>
      %129 = arith.divf %127, %128 : vector<2x32xf32>
      %130 = vector.extract_strided_slice %123 {offsets = [0, 32], sizes = [2, 32], strides = [1, 1]} : vector<2x128xf32> to vector<2x32xf32>
      %131 = arith.negf %130 : vector<2x32xf32>
      %132 = math.exp %131 : vector<2x32xf32>
      %cst_49 = arith.constant 1.000000e+00 : f32
      %133 = vector.broadcast %cst_49 : f32 to vector<2x32xf32>
      %134 = arith.addf %133, %132 : vector<2x32xf32>
      %135 = arith.divf %133, %134 : vector<2x32xf32>
      %136 = vector.extract_strided_slice %123 {offsets = [0, 64], sizes = [2, 32], strides = [1, 1]} : vector<2x128xf32> to vector<2x32xf32>
      %137 = math.tanh %136 : vector<2x32xf32>
      %138 = vector.extract_strided_slice %123 {offsets = [0, 96], sizes = [2, 32], strides = [1, 1]} : vector<2x128xf32> to vector<2x32xf32>
      %139 = arith.negf %138 : vector<2x32xf32>
      %140 = math.exp %139 : vector<2x32xf32>
      %cst_50 = arith.constant 1.000000e+00 : f32
      %141 = vector.broadcast %cst_50 : f32 to vector<2x32xf32>
      %142 = arith.addf %141, %140 : vector<2x32xf32>
      %143 = arith.divf %141, %142 : vector<2x32xf32>
      %144 = arith.mulf %135, %111 : vector<2x32xf32>
      %145 = arith.mulf %129, %137 : vector<2x32xf32>
      %146 = arith.addf %144, %145 : vector<2x32xf32>
      %147 = math.tanh %146 : vector<2x32xf32>
      %148 = arith.mulf %143, %147 : vector<2x32xf32>
      %c0_51 = arith.constant 0 : index
      %149 = arith.index_cast %118 : i32 to index
      %c0_52 = arith.constant 0 : index
      %c0_53 = arith.constant 0 : index
      %150 = vector.load %arg4[%c0_51, %149, %c0_52, %c0_53] : memref<1x8x2x32xf32, #tpu.memory_space<vmem>>, vector<1x1x2x32xf32>
      %151 = vector.shape_cast %150 : vector<1x1x2x32xf32> to vector<2x32xf32>
      %152 = vector.shape_cast %148 : vector<2x32xf32> to vector<1x1x2x32xf32>
      tpu.vector_store %arg4[%c0_51, %149, %c0_52, %c0_53], %152 {strides = array<i32>} : memref<1x8x2x32xf32, #tpu.memory_space<vmem>>, vector<1x1x2x32xf32>,
      %c4_i32 = arith.constant 4 : i32
      %c7_i32_54 = arith.constant 7 : i32
      %153 = arith.subi %c7_i32_54, %c4_i32 : i32
      %c0_55 = arith.constant 0 : index
      %154 = arith.index_cast %153 : i32 to index
      %c0_56 = arith.constant 0 : index
      %c0_57 = arith.constant 0 : index
      %155 = vector.load %arg2[%c0_55, %154, %c0_56, %c0_57] : memref<1x8x2x128xf32, #tpu.memory_space<vmem>>, vector<1x1x2x128xf32>
      %156 = vector.shape_cast %155 : vector<1x1x2x128xf32> to vector<2x128xf32>
      %cst_58 = arith.constant dense<0.000000e+00> : vector<2x128xf32>
      %157 = tpu.matmul %148, %4, %cst_58 {dimension_numbers = #tpu.dot_dimension_numbers<[1], [0], [0], [1], [0, 0, 1, 1], [], []>} : vector<2x32xf32>, vector<32x128xf32>, vector<2x128xf32> -> vector<2x128xf32>
      %158 = arith.addf %156, %157 : vector<2x128xf32>
      %159 = vector.extract_strided_slice %158 {offsets = [0, 0], sizes = [2, 32], strides = [1, 1]} : vector<2x128xf32> to vector<2x32xf32>
      %160 = arith.negf %159 : vector<2x32xf32>
      %161 = math.exp %160 : vector<2x32xf32>
      %cst_59 = arith.constant 1.000000e+00 : f32
      %162 = vector.broadcast %cst_59 : f32 to vector<2x32xf32>
      %163 = arith.addf %162, %161 : vector<2x32xf32>
      %164 = arith.divf %162, %163 : vector<2x32xf32>
      %165 = vector.extract_strided_slice %158 {offsets = [0, 32], sizes = [2, 32], strides = [1, 1]} : vector<2x128xf32> to vector<2x32xf32>
      %166 = arith.negf %165 : vector<2x32xf32>
      %167 = math.exp %166 : vector<2x32xf32>
      %cst_60 = arith.constant 1.000000e+00 : f32
      %168 = vector.broadcast %cst_60 : f32 to vector<2x32xf32>
      %169 = arith.addf %168, %167 : vector<2x32xf32>
      %170 = arith.divf %168, %169 : vector<2x32xf32>
      %171 = vector.extract_strided_slice %158 {offsets = [0, 64], sizes = [2, 32], strides = [1, 1]} : vector<2x128xf32> to vector<2x32xf32>
      %172 = math.tanh %171 : vector<2x32xf32>
      %173 = vector.extract_strided_slice %158 {offsets = [0, 96], sizes = [2, 32], strides = [1, 1]} : vector<2x128xf32> to vector<2x32xf32>
      %174 = arith.negf %173 : vector<2x32xf32>
      %175 = math.exp %174 : vector<2x32xf32>
      %cst_61 = arith.constant 1.000000e+00 : f32
      %176 = vector.broadcast %cst_61 : f32 to vector<2x32xf32>
      %177 = arith.addf %176, %175 : vector<2x32xf32>
      %178 = arith.divf %176, %177 : vector<2x32xf32>
      %179 = arith.mulf %170, %146 : vector<2x32xf32>
      %180 = arith.mulf %164, %172 : vector<2x32xf32>
      %181 = arith.addf %179, %180 : vector<2x32xf32>
      %182 = math.tanh %181 : vector<2x32xf32>
      %183 = arith.mulf %178, %182 : vector<2x32xf32>
      %c0_62 = arith.constant 0 : index
      %184 = arith.index_cast %153 : i32 to index
      %c0_63 = arith.constant 0 : index
      %c0_64 = arith.constant 0 : index
      %185 = vector.load %arg4[%c0_62, %184, %c0_63, %c0_64] : memref<1x8x2x32xf32, #tpu.memory_space<vmem>>, vector<1x1x2x32xf32>
      %186 = vector.shape_cast %185 : vector<1x1x2x32xf32> to vector<2x32xf32>
      %187 = vector.shape_cast %183 : vector<2x32xf32> to vector<1x1x2x32xf32>
      tpu.vector_store %arg4[%c0_62, %184, %c0_63, %c0_64], %187 {strides = array<i32>} : memref<1x8x2x32xf32, #tpu.memory_space<vmem>>, vector<1x1x2x32xf32>,
      %c5_i32 = arith.constant 5 : i32
      %c7_i32_65 = arith.constant 7 : i32
      %188 = arith.subi %c7_i32_65, %c5_i32 : i32
      %c0_66 = arith.constant 0 : index
      %189 = arith.index_cast %188 : i32 to index
      %c0_67 = arith.constant 0 : index
      %c0_68 = arith.constant 0 : index
      %190 = vector.load %arg2[%c0_66, %189, %c0_67, %c0_68] : memref<1x8x2x128xf32, #tpu.memory_space<vmem>>, vector<1x1x2x128xf32>
      %191 = vector.shape_cast %190 : vector<1x1x2x128xf32> to vector<2x128xf32>
      %cst_69 = arith.constant dense<0.000000e+00> : vector<2x128xf32>
      %192 = tpu.matmul %183, %4, %cst_69 {dimension_numbers = #tpu.dot_dimension_numbers<[1], [0], [0], [1], [0, 0, 1, 1], [], []>} : vector<2x32xf32>, vector<32x128xf32>, vector<2x128xf32> -> vector<2x128xf32>
      %193 = arith.addf %191, %192 : vector<2x128xf32>
      %194 = vector.extract_strided_slice %193 {offsets = [0, 0], sizes = [2, 32], strides = [1, 1]} : vector<2x128xf32> to vector<2x32xf32>
      %195 = arith.negf %194 : vector<2x32xf32>
      %196 = math.exp %195 : vector<2x32xf32>
      %cst_70 = arith.constant 1.000000e+00 : f32
      %197 = vector.broadcast %cst_70 : f32 to vector<2x32xf32>
      %198 = arith.addf %197, %196 : vector<2x32xf32>
      %199 = arith.divf %197, %198 : vector<2x32xf32>
      %200 = vector.extract_strided_slice %193 {offsets = [0, 32], sizes = [2, 32], strides = [1, 1]} : vector<2x128xf32> to vector<2x32xf32>
      %201 = arith.negf %200 : vector<2x32xf32>
      %202 = math.exp %201 : vector<2x32xf32>
      %cst_71 = arith.constant 1.000000e+00 : f32
      %203 = vector.broadcast %cst_71 : f32 to vector<2x32xf32>
      %204 = arith.addf %203, %202 : vector<2x32xf32>
      %205 = arith.divf %203, %204 : vector<2x32xf32>
      %206 = vector.extract_strided_slice %193 {offsets = [0, 64], sizes = [2, 32], strides = [1, 1]} : vector<2x128xf32> to vector<2x32xf32>
      %207 = math.tanh %206 : vector<2x32xf32>
      %208 = vector.extract_strided_slice %193 {offsets = [0, 96], sizes = [2, 32], strides = [1, 1]} : vector<2x128xf32> to vector<2x32xf32>
      %209 = arith.negf %208 : vector<2x32xf32>
      %210 = math.exp %209 : vector<2x32xf32>
      %cst_72 = arith.constant 1.000000e+00 : f32
      %211 = vector.broadcast %cst_72 : f32 to vector<2x32xf32>
      %212 = arith.addf %211, %210 : vector<2x32xf32>
      %213 = arith.divf %211, %212 : vector<2x32xf32>
      %214 = arith.mulf %205, %181 : vector<2x32xf32>
      %215 = arith.mulf %199, %207 : vector<2x32xf32>
      %216 = arith.addf %214, %215 : vector<2x32xf32>
      %217 = math.tanh %216 : vector<2x32xf32>
      %218 = arith.mulf %213, %217 : vector<2x32xf32>
      %c0_73 = arith.constant 0 : index
      %219 = arith.index_cast %188 : i32 to index
      %c0_74 = arith.constant 0 : index
      %c0_75 = arith.constant 0 : index
      %220 = vector.load %arg4[%c0_73, %219, %c0_74, %c0_75] : memref<1x8x2x32xf32, #tpu.memory_space<vmem>>, vector<1x1x2x32xf32>
      %221 = vector.shape_cast %220 : vector<1x1x2x32xf32> to vector<2x32xf32>
      %222 = vector.shape_cast %218 : vector<2x32xf32> to vector<1x1x2x32xf32>
      tpu.vector_store %arg4[%c0_73, %219, %c0_74, %c0_75], %222 {strides = array<i32>} : memref<1x8x2x32xf32, #tpu.memory_space<vmem>>, vector<1x1x2x32xf32>,
      %c6_i32 = arith.constant 6 : i32
      %c7_i32_76 = arith.constant 7 : i32
      %223 = arith.subi %c7_i32_76, %c6_i32 : i32
      %c0_77 = arith.constant 0 : index
      %224 = arith.index_cast %223 : i32 to index
      %c0_78 = arith.constant 0 : index
      %c0_79 = arith.constant 0 : index
      %225 = vector.load %arg2[%c0_77, %224, %c0_78, %c0_79] : memref<1x8x2x128xf32, #tpu.memory_space<vmem>>, vector<1x1x2x128xf32>
      %226 = vector.shape_cast %225 : vector<1x1x2x128xf32> to vector<2x128xf32>
      %cst_80 = arith.constant dense<0.000000e+00> : vector<2x128xf32>
      %227 = tpu.matmul %218, %4, %cst_80 {dimension_numbers = #tpu.dot_dimension_numbers<[1], [0], [0], [1], [0, 0, 1, 1], [], []>} : vector<2x32xf32>, vector<32x128xf32>, vector<2x128xf32> -> vector<2x128xf32>
      %228 = arith.addf %226, %227 : vector<2x128xf32>
      %229 = vector.extract_strided_slice %228 {offsets = [0, 0], sizes = [2, 32], strides = [1, 1]} : vector<2x128xf32> to vector<2x32xf32>
      %230 = arith.negf %229 : vector<2x32xf32>
      %231 = math.exp %230 : vector<2x32xf32>
      %cst_81 = arith.constant 1.000000e+00 : f32
      %232 = vector.broadcast %cst_81 : f32 to vector<2x32xf32>
      %233 = arith.addf %232, %231 : vector<2x32xf32>
      %234 = arith.divf %232, %233 : vector<2x32xf32>
      %235 = vector.extract_strided_slice %228 {offsets = [0, 32], sizes = [2, 32], strides = [1, 1]} : vector<2x128xf32> to vector<2x32xf32>
      %236 = arith.negf %235 : vector<2x32xf32>
      %237 = math.exp %236 : vector<2x32xf32>
      %cst_82 = arith.constant 1.000000e+00 : f32
      %238 = vector.broadcast %cst_82 : f32 to vector<2x32xf32>
      %239 = arith.addf %238, %237 : vector<2x32xf32>
      %240 = arith.divf %238, %239 : vector<2x32xf32>
      %241 = vector.extract_strided_slice %228 {offsets = [0, 64], sizes = [2, 32], strides = [1, 1]} : vector<2x128xf32> to vector<2x32xf32>
      %242 = math.tanh %241 : vector<2x32xf32>
      %243 = vector.extract_strided_slice %228 {offsets = [0, 96], sizes = [2, 32], strides = [1, 1]} : vector<2x128xf32> to vector<2x32xf32>
      %244 = arith.negf %243 : vector<2x32xf32>
      %245 = math.exp %244 : vector<2x32xf32>
      %cst_83 = arith.constant 1.000000e+00 : f32
      %246 = vector.broadcast %cst_83 : f32 to vector<2x32xf32>
      %247 = arith.addf %246, %245 : vector<2x32xf32>
      %248 = arith.divf %246, %247 : vector<2x32xf32>
      %249 = arith.mulf %240, %216 : vector<2x32xf32>
      %250 = arith.mulf %234, %242 : vector<2x32xf32>
      %251 = arith.addf %249, %250 : vector<2x32xf32>
      %252 = math.tanh %251 : vector<2x32xf32>
      %253 = arith.mulf %248, %252 : vector<2x32xf32>
      %c0_84 = arith.constant 0 : index
      %254 = arith.index_cast %223 : i32 to index
      %c0_85 = arith.constant 0 : index
      %c0_86 = arith.constant 0 : index
      %255 = vector.load %arg4[%c0_84, %254, %c0_85, %c0_86] : memref<1x8x2x32xf32, #tpu.memory_space<vmem>>, vector<1x1x2x32xf32>
      %256 = vector.shape_cast %255 : vector<1x1x2x32xf32> to vector<2x32xf32>
      %257 = vector.shape_cast %253 : vector<2x32xf32> to vector<1x1x2x32xf32>
      tpu.vector_store %arg4[%c0_84, %254, %c0_85, %c0_86], %257 {strides = array<i32>} : memref<1x8x2x32xf32, #tpu.memory_space<vmem>>, vector<1x1x2x32xf32>,
      %c7_i32_87 = arith.constant 7 : i32
      %c7_i32_88 = arith.constant 7 : i32
      %258 = arith.subi %c7_i32_88, %c7_i32_87 : i32
      %c0_89 = arith.constant 0 : index
      %259 = arith.index_cast %258 : i32 to index
      %c0_90 = arith.constant 0 : index
      %c0_91 = arith.constant 0 : index
      %260 = vector.load %arg2[%c0_89, %259, %c0_90, %c0_91] : memref<1x8x2x128xf32, #tpu.memory_space<vmem>>, vector<1x1x2x128xf32>
      %261 = vector.shape_cast %260 : vector<1x1x2x128xf32> to vector<2x128xf32>
      %cst_92 = arith.constant dense<0.000000e+00> : vector<2x128xf32>
      %262 = tpu.matmul %253, %4, %cst_92 {dimension_numbers = #tpu.dot_dimension_numbers<[1], [0], [0], [1], [0, 0, 1, 1], [], []>} : vector<2x32xf32>, vector<32x128xf32>, vector<2x128xf32> -> vector<2x128xf32>
      %263 = arith.addf %261, %262 : vector<2x128xf32>
      %264 = vector.extract_strided_slice %263 {offsets = [0, 0], sizes = [2, 32], strides = [1, 1]} : vector<2x128xf32> to vector<2x32xf32>
      %265 = arith.negf %264 : vector<2x32xf32>
      %266 = math.exp %265 : vector<2x32xf32>
      %cst_93 = arith.constant 1.000000e+00 : f32
      %267 = vector.broadcast %cst_93 : f32 to vector<2x32xf32>
      %268 = arith.addf %267, %266 : vector<2x32xf32>
      %269 = arith.divf %267, %268 : vector<2x32xf32>
      %270 = vector.extract_strided_slice %263 {offsets = [0, 32], sizes = [2, 32], strides = [1, 1]} : vector<2x128xf32> to vector<2x32xf32>
      %271 = arith.negf %270 : vector<2x32xf32>
      %272 = math.exp %271 : vector<2x32xf32>
      %cst_94 = arith.constant 1.000000e+00 : f32
      %273 = vector.broadcast %cst_94 : f32 to vector<2x32xf32>
      %274 = arith.addf %273, %272 : vector<2x32xf32>
      %275 = arith.divf %273, %274 : vector<2x32xf32>
      %276 = vector.extract_strided_slice %263 {offsets = [0, 64], sizes = [2, 32], strides = [1, 1]} : vector<2x128xf32> to vector<2x32xf32>
      %277 = math.tanh %276 : vector<2x32xf32>
      %278 = vector.extract_strided_slice %263 {offsets = [0, 96], sizes = [2, 32], strides = [1, 1]} : vector<2x128xf32> to vector<2x32xf32>
      %279 = arith.negf %278 : vector<2x32xf32>
      %280 = math.exp %279 : vector<2x32xf32>
      %cst_95 = arith.constant 1.000000e+00 : f32
      %281 = vector.broadcast %cst_95 : f32 to vector<2x32xf32>
      %282 = arith.addf %281, %280 : vector<2x32xf32>
      %283 = arith.divf %281, %282 : vector<2x32xf32>
      %284 = arith.mulf %275, %251 : vector<2x32xf32>
      %285 = arith.mulf %269, %277 : vector<2x32xf32>
      %286 = arith.addf %284, %285 : vector<2x32xf32>
      %287 = math.tanh %286 : vector<2x32xf32>
      %288 = arith.mulf %283, %287 : vector<2x32xf32>
      %c0_96 = arith.constant 0 : index
      %289 = arith.index_cast %258 : i32 to index
      %c0_97 = arith.constant 0 : index
      %c0_98 = arith.constant 0 : index
      %290 = vector.load %arg4[%c0_96, %289, %c0_97, %c0_98] : memref<1x8x2x32xf32, #tpu.memory_space<vmem>>, vector<1x1x2x32xf32>
      %291 = vector.shape_cast %290 : vector<1x1x2x32xf32> to vector<2x32xf32>
      %292 = vector.shape_cast %288 : vector<2x32xf32> to vector<1x1x2x32xf32>
      tpu.vector_store %arg4[%c0_96, %289, %c0_97, %c0_98], %292 {strides = array<i32>} : memref<1x8x2x32xf32, #tpu.memory_space<vmem>>, vector<1x1x2x32xf32>,
      %c8_i32 = arith.constant 8 : i32
      %c0_99 = arith.constant 0 : index
      %c0_100 = arith.constant 0 : index
      %293 = vector.load %arg5[%c0_99, %c0_100] : memref<2x32xf32, #tpu.memory_space<vmem>>, vector<2x32xf32>
      tpu.vector_store %arg5[%c0_99, %c0_100], %288 {strides = array<i32>} : memref<2x32xf32, #tpu.memory_space<vmem>>, vector<2x32xf32>,
      %c0_101 = arith.constant 0 : index
      %c0_102 = arith.constant 0 : index
      %294 = vector.load %arg6[%c0_101, %c0_102] : memref<2x32xf32, #tpu.memory_space<vmem>>, vector<2x32xf32>
      tpu.vector_store %arg6[%c0_101, %c0_102], %286 {strides = array<i32>} : memref<2x32xf32, #tpu.memory_space<vmem>>, vector<2x32xf32>,
    } else {
    }
    return
  }
  func.func @transform_0(%arg0: i32, %arg1: i32) -> (i32, i32, i32, i32) {
    %c0_i32 = arith.constant 0 : i32
    %0 = arith.muli %arg0, %c0_i32 : i32
    %c2_i32 = arith.constant 2 : i32
    %1 = arith.muli %c2_i32, %arg0 : i32
    %c1_i32 = arith.constant 1 : i32
    %2 = arith.subi %c1_i32, %1 : i32
    %3 = arith.muli %2, %arg1 : i32
    %4 = arith.addi %0, %3 : i32
    %c0_i32_0 = arith.constant 0 : i32
    %c0_i32_1 = arith.constant 0 : i32
    %c0_i32_2 = arith.constant 0 : i32
    return %arg0, %4, %c0_i32_0, %c0_i32_1 : i32, i32, i32, i32
  }
  func.func @transform_1(%arg0: i32, %arg1: i32) -> (i32, i32, i32) {
    %c0_i32 = arith.constant 0 : i32
    %c0_i32_0 = arith.constant 0 : i32
    %c0_i32_1 = arith.constant 0 : i32
    return %arg0, %c0_i32, %c0_i32_0 : i32, i32, i32
  }
  func.func @transform_2(%arg0: i32, %arg1: i32) -> (i32, i32, i32, i32) {
    %c0_i32 = arith.constant 0 : i32
    %0 = arith.muli %arg0, %c0_i32 : i32
    %c2_i32 = arith.constant 2 : i32
    %1 = arith.muli %c2_i32, %arg0 : i32
    %c1_i32 = arith.constant 1 : i32
    %2 = arith.subi %c1_i32, %1 : i32
    %3 = arith.muli %2, %arg1 : i32
    %4 = arith.addi %0, %3 : i32
    %c0_i32_0 = arith.constant 0 : i32
    %c0_i32_1 = arith.constant 0 : i32
    %c0_i32_2 = arith.constant 0 : i32
    return %arg0, %4, %c0_i32_0, %c0_i32_1 : i32, i32, i32, i32
  }
}

module attributes {stable_mosaic.version = 11 : i64} {
  func.func @kernel(%arg0: i32, %arg1: memref<2x16x32xf32, #tpu.memory_space<vmem>>, %arg2: memref<2x32x16xf32, #tpu.memory_space<vmem>>, %arg3: memref<1x16xf32, #tpu.memory_space<vmem>>, %arg4: memref<16x8xf32, #tpu.memory_space<vmem>>, %arg5: memref<16x8xf32, #tpu.memory_space<vmem>>) attributes {dimension_semantics = [#tpu.dimension_semantics<parallel>], iteration_bounds = array<i64: 1>, scalar_prefetch = 0 : i64, scratch_operands = 0 : i64, tpu.core_type = #tpu.core_type<tc>, window_params = [{transform_indices = @transform_0, window_bounds = array<i64: 2, 16, 32>}, {pipeline_mode = #tpu.pipeline_mode<synchronous>, transform_indices = @transform_1, window_bounds = array<i64: 2, 32, 16>}, {pipeline_mode = #tpu.pipeline_mode<synchronous>, transform_indices = @transform_2, window_bounds = array<i64: 1, 16>}, {transform_indices = @transform_3, window_bounds = array<i64: 16, 8>}, {transform_indices = @transform_4, window_bounds = array<i64: 16, 8>}]} {
    %c0 = arith.constant 0 : index
    %c0_0 = arith.constant 0 : index
    %c0_1 = arith.constant 0 : index
    %0 = vector.load %arg1[%c0, %c0_0, %c0_1] : memref<2x16x32xf32, #tpu.memory_space<vmem>>, vector<1x16x32xf32>
    %1 = vector.shape_cast %0 : vector<1x16x32xf32> to vector<16x32xf32>
    %c0_2 = arith.constant 0 : index
    %c0_3 = arith.constant 0 : index
    %c0_4 = arith.constant 0 : index
    %2 = vector.load %arg2[%c0_2, %c0_3, %c0_4] : memref<2x32x16xf32, #tpu.memory_space<vmem>>, vector<1x32x16xf32>
    %3 = vector.shape_cast %2 : vector<1x32x16xf32> to vector<32x16xf32>
    %cst = arith.constant dense<0.000000e+00> : vector<16x16xf32>
    %4 = tpu.matmul %1, %3, %cst {dimension_numbers = #tpu.dot_dimension_numbers<[1], [0], [0], [1], [0, 0, 1, 1], [], []>} : vector<16x32xf32>, vector<32x16xf32>, vector<16x16xf32> -> vector<16x16xf32>
    %c1 = arith.constant 1 : index
    %c0_5 = arith.constant 0 : index
    %c0_6 = arith.constant 0 : index
    %5 = vector.load %arg1[%c1, %c0_5, %c0_6] : memref<2x16x32xf32, #tpu.memory_space<vmem>>, vector<1x16x32xf32>
    %6 = vector.shape_cast %5 : vector<1x16x32xf32> to vector<16x32xf32>
    %c1_7 = arith.constant 1 : index
    %c0_8 = arith.constant 0 : index
    %c0_9 = arith.constant 0 : index
    %7 = vector.load %arg2[%c1_7, %c0_8, %c0_9] : memref<2x32x16xf32, #tpu.memory_space<vmem>>, vector<1x32x16xf32>
    %8 = vector.shape_cast %7 : vector<1x32x16xf32> to vector<32x16xf32>
    %cst_10 = arith.constant dense<0.000000e+00> : vector<16x16xf32>
    %9 = tpu.matmul %6, %8, %cst_10 {dimension_numbers = #tpu.dot_dimension_numbers<[1], [0], [0], [1], [0, 0, 1, 1], [], []>} : vector<16x32xf32>, vector<32x16xf32>, vector<16x16xf32> -> vector<16x16xf32>
    %10 = arith.addf %4, %9 : vector<16x16xf32>
    %c0_11 = arith.constant 0 : index
    %c0_12 = arith.constant 0 : index
    %11 = vector.load %arg3[%c0_11, %c0_12] : memref<1x16xf32, #tpu.memory_space<vmem>>, vector<1x16xf32>
    %12 = vector.broadcast %11 : vector<1x16xf32> to vector<16x16xf32>
    %13 = arith.addf %10, %12 : vector<16x16xf32>
    %14 = vector.extract_strided_slice %13 {offsets = [0, 0], sizes = [16, 8], strides = [1, 1]} : vector<16x16xf32> to vector<16x8xf32>
    %c0_13 = arith.constant 0 : index
    %c0_14 = arith.constant 0 : index
    %15 = vector.load %arg4[%c0_13, %c0_14] : memref<16x8xf32, #tpu.memory_space<vmem>>, vector<16x8xf32>
    tpu.vector_store %arg4[%c0_13, %c0_14], %14 {strides = array<i32>} : memref<16x8xf32, #tpu.memory_space<vmem>>, vector<16x8xf32>,
    %16 = vector.extract_strided_slice %13 {offsets = [0, 8], sizes = [16, 8], strides = [1, 1]} : vector<16x16xf32> to vector<16x8xf32>
    %17 = arith.negf %16 : vector<16x8xf32>
    %18 = math.exp %17 : vector<16x8xf32>
    %cst_15 = arith.constant 1.000000e+00 : f32
    %19 = vector.broadcast %cst_15 : f32 to vector<16x8xf32>
    %20 = arith.addf %19, %18 : vector<16x8xf32>
    %21 = arith.divf %19, %20 : vector<16x8xf32>
    %c0_16 = arith.constant 0 : index
    %c0_17 = arith.constant 0 : index
    %22 = vector.load %arg5[%c0_16, %c0_17] : memref<16x8xf32, #tpu.memory_space<vmem>>, vector<16x8xf32>
    tpu.vector_store %arg5[%c0_16, %c0_17], %21 {strides = array<i32>} : memref<16x8xf32, #tpu.memory_space<vmem>>, vector<16x8xf32>,
    return
  }
  func.func @transform_0(%arg0: i32) -> (i32, i32, i32) {
    %c0_i32 = arith.constant 0 : i32
    %c0_i32_0 = arith.constant 0 : i32
    %c0_i32_1 = arith.constant 0 : i32
    return %c0_i32, %arg0, %c0_i32_0 : i32, i32, i32
  }
  func.func @transform_1(%arg0: i32) -> (i32, i32, i32) {
    %c0_i32 = arith.constant 0 : i32
    %c0_i32_0 = arith.constant 0 : i32
    %c0_i32_1 = arith.constant 0 : i32
    %c0_i32_2 = arith.constant 0 : i32
    return %c0_i32, %c0_i32_0, %c0_i32_1 : i32, i32, i32
  }
  func.func @transform_2(%arg0: i32) -> (i32, i32) {
    %c0_i32 = arith.constant 0 : i32
    %c0_i32_0 = arith.constant 0 : i32
    %c0_i32_1 = arith.constant 0 : i32
    return %c0_i32, %c0_i32_0 : i32, i32
  }
  func.func @transform_3(%arg0: i32) -> (i32, i32) {
    %c0_i32 = arith.constant 0 : i32
    %c0_i32_0 = arith.constant 0 : i32
    return %arg0, %c0_i32 : i32, i32
  }
  func.func @transform_4(%arg0: i32) -> (i32, i32) {
    %c0_i32 = arith.constant 0 : i32
    %c0_i32_0 = arith.constant 0 : i32
    return %arg0, %c0_i32 : i32, i32
  }
}

module attributes {stable_mosaic.version = 11 : i64} {
  func.func @_gates_kernel(%arg0: i32, %arg1: i32, %arg2: memref<16x16xf32, #tpu.memory_space<vmem>>, %arg3: memref<1x16x128xf32, #tpu.memory_space<vmem>>, %arg4: memref<1x1x128xf32, #tpu.memory_space<vmem>>, %arg5: memref<1x16x128xf32, #tpu.memory_space<vmem>>) attributes {dimension_semantics = [#tpu.dimension_semantics<parallel>, #tpu.dimension_semantics<parallel>], iteration_bounds = array<i64: 2, 1>, scalar_prefetch = 0 : i64, scratch_operands = 0 : i64, tpu.core_type = #tpu.core_type<tc>, window_params = [{transform_indices = @transform_0, window_bounds = array<i64: 16, 16>}, {transform_indices = @transform_1, window_bounds = array<i64: 1, 16, 128>}, {transform_indices = @transform_2, window_bounds = array<i64: 1, 1, 128>}, {transform_indices = @transform_3, window_bounds = array<i64: 1, 16, 128>}]} {
    %c0 = arith.constant 0 : index
    %c0_0 = arith.constant 0 : index
    %0 = vector.load %arg2[%c0, %c0_0] : memref<16x16xf32, #tpu.memory_space<vmem>>, vector<16x16xf32>
    %c0_1 = arith.constant 0 : index
    %c0_2 = arith.constant 0 : index
    %c0_3 = arith.constant 0 : index
    %1 = vector.load %arg3[%c0_1, %c0_2, %c0_3] : memref<1x16x128xf32, #tpu.memory_space<vmem>>, vector<1x16x128xf32>
    %2 = vector.shape_cast %1 : vector<1x16x128xf32> to vector<16x128xf32>
    %cst = arith.constant dense<0.000000e+00> : vector<16x128xf32>
    %3 = tpu.matmul %0, %2, %cst {dimension_numbers = #tpu.dot_dimension_numbers<[1], [0], [0], [1], [0, 0, 1, 1], [], []>} : vector<16x16xf32>, vector<16x128xf32>, vector<16x128xf32> -> vector<16x128xf32>
    %c0_4 = arith.constant 0 : index
    %c0_5 = arith.constant 0 : index
    %c0_6 = arith.constant 0 : index
    %4 = vector.load %arg4[%c0_4, %c0_5, %c0_6] : memref<1x1x128xf32, #tpu.memory_space<vmem>>, vector<1x1x128xf32>
    %5 = vector.shape_cast %4 : vector<1x1x128xf32> to vector<1x128xf32>
    %6 = vector.broadcast %5 : vector<1x128xf32> to vector<16x128xf32>
    %7 = arith.addf %3, %6 : vector<16x128xf32>
    %c0_7 = arith.constant 0 : index
    %c0_8 = arith.constant 0 : index
    %c0_9 = arith.constant 0 : index
    %8 = vector.load %arg5[%c0_7, %c0_8, %c0_9] : memref<1x16x128xf32, #tpu.memory_space<vmem>>, vector<1x16x128xf32>
    %9 = vector.shape_cast %8 : vector<1x16x128xf32> to vector<16x128xf32>
    %10 = vector.shape_cast %7 : vector<16x128xf32> to vector<1x16x128xf32>
    tpu.vector_store %arg5[%c0_7, %c0_8, %c0_9], %10 {strides = array<i32>} : memref<1x16x128xf32, #tpu.memory_space<vmem>>, vector<1x16x128xf32>,
    return
  }
  func.func @transform_0(%arg0: i32, %arg1: i32) -> (i32, i32) {
    %c0_i32 = arith.constant 0 : i32
    %c0_i32_0 = arith.constant 0 : i32
    return %arg1, %c0_i32 : i32, i32
  }
  func.func @transform_1(%arg0: i32, %arg1: i32) -> (i32, i32, i32) {
    %c0_i32 = arith.constant 0 : i32
    %c0_i32_0 = arith.constant 0 : i32
    %c0_i32_1 = arith.constant 0 : i32
    return %arg0, %c0_i32, %c0_i32_0 : i32, i32, i32
  }
  func.func @transform_2(%arg0: i32, %arg1: i32) -> (i32, i32, i32) {
    %c0_i32 = arith.constant 0 : i32
    %c0_i32_0 = arith.constant 0 : i32
    %c0_i32_1 = arith.constant 0 : i32
    return %arg0, %c0_i32, %c0_i32_0 : i32, i32, i32
  }
  func.func @transform_3(%arg0: i32, %arg1: i32) -> (i32, i32, i32) {
    %c0_i32 = arith.constant 0 : i32
    %c0_i32_0 = arith.constant 0 : i32
    return %arg0, %arg1, %c0_i32 : i32, i32, i32
  }
}

module attributes {stable_mosaic.version = 11 : i64} {
  func.func @_gates_kernel(%arg0: i32, %arg1: i32, %arg2: memref<16x24xf32, #tpu.memory_space<vmem>>, %arg3: memref<1x24x128xf32, #tpu.memory_space<vmem>>, %arg4: memref<1x1x128xf32, #tpu.memory_space<vmem>>, %arg5: memref<1x16x128xf32, #tpu.memory_space<vmem>>) attributes {dimension_semantics = [#tpu.dimension_semantics<parallel>, #tpu.dimension_semantics<parallel>], iteration_bounds = array<i64: 2, 1>, scalar_prefetch = 0 : i64, scratch_operands = 0 : i64, tpu.core_type = #tpu.core_type<tc>, window_params = [{transform_indices = @transform_0, window_bounds = array<i64: 16, 24>}, {transform_indices = @transform_1, window_bounds = array<i64: 1, 24, 128>}, {transform_indices = @transform_2, window_bounds = array<i64: 1, 1, 128>}, {transform_indices = @transform_3, window_bounds = array<i64: 1, 16, 128>}]} {
    %c0 = arith.constant 0 : index
    %c0_0 = arith.constant 0 : index
    %0 = vector.load %arg2[%c0, %c0_0] : memref<16x24xf32, #tpu.memory_space<vmem>>, vector<16x24xf32>
    %c0_1 = arith.constant 0 : index
    %c0_2 = arith.constant 0 : index
    %c0_3 = arith.constant 0 : index
    %1 = vector.load %arg3[%c0_1, %c0_2, %c0_3] : memref<1x24x128xf32, #tpu.memory_space<vmem>>, vector<1x24x128xf32>
    %2 = vector.shape_cast %1 : vector<1x24x128xf32> to vector<24x128xf32>
    %cst = arith.constant dense<0.000000e+00> : vector<16x128xf32>
    %3 = tpu.matmul %0, %2, %cst {dimension_numbers = #tpu.dot_dimension_numbers<[1], [0], [0], [1], [0, 0, 1, 1], [], []>} : vector<16x24xf32>, vector<24x128xf32>, vector<16x128xf32> -> vector<16x128xf32>
    %c0_4 = arith.constant 0 : index
    %c0_5 = arith.constant 0 : index
    %c0_6 = arith.constant 0 : index
    %4 = vector.load %arg4[%c0_4, %c0_5, %c0_6] : memref<1x1x128xf32, #tpu.memory_space<vmem>>, vector<1x1x128xf32>
    %5 = vector.shape_cast %4 : vector<1x1x128xf32> to vector<1x128xf32>
    %6 = vector.broadcast %5 : vector<1x128xf32> to vector<16x128xf32>
    %7 = arith.addf %3, %6 : vector<16x128xf32>
    %c0_7 = arith.constant 0 : index
    %c0_8 = arith.constant 0 : index
    %c0_9 = arith.constant 0 : index
    %8 = vector.load %arg5[%c0_7, %c0_8, %c0_9] : memref<1x16x128xf32, #tpu.memory_space<vmem>>, vector<1x16x128xf32>
    %9 = vector.shape_cast %8 : vector<1x16x128xf32> to vector<16x128xf32>
    %10 = vector.shape_cast %7 : vector<16x128xf32> to vector<1x16x128xf32>
    tpu.vector_store %arg5[%c0_7, %c0_8, %c0_9], %10 {strides = array<i32>} : memref<1x16x128xf32, #tpu.memory_space<vmem>>, vector<1x16x128xf32>,
    return
  }
  func.func @transform_0(%arg0: i32, %arg1: i32) -> (i32, i32) {
    %c0_i32 = arith.constant 0 : i32
    %c0_i32_0 = arith.constant 0 : i32
    return %arg1, %c0_i32 : i32, i32
  }
  func.func @transform_1(%arg0: i32, %arg1: i32) -> (i32, i32, i32) {
    %c0_i32 = arith.constant 0 : i32
    %c0_i32_0 = arith.constant 0 : i32
    %c0_i32_1 = arith.constant 0 : i32
    return %arg0, %c0_i32, %c0_i32_0 : i32, i32, i32
  }
  func.func @transform_2(%arg0: i32, %arg1: i32) -> (i32, i32, i32) {
    %c0_i32 = arith.constant 0 : i32
    %c0_i32_0 = arith.constant 0 : i32
    %c0_i32_1 = arith.constant 0 : i32
    return %arg0, %c0_i32, %c0_i32_0 : i32, i32, i32
  }
  func.func @transform_3(%arg0: i32, %arg1: i32) -> (i32, i32, i32) {
    %c0_i32 = arith.constant 0 : i32
    %c0_i32_0 = arith.constant 0 : i32
    return %arg0, %arg1, %c0_i32 : i32, i32, i32
  }
}

module attributes {stable_mosaic.version = 11 : i64} {
  func.func @kernel(%arg0: i32, %arg1: memref<2x16x32xf32, #tpu.memory_space<vmem>>, %arg2: memref<2x32x16xf32, #tpu.memory_space<vmem>>, %arg3: memref<1x16xf32, #tpu.memory_space<vmem>>, %arg4: memref<16x8xf32, #tpu.memory_space<vmem>>, %arg5: memref<16x8xf32, #tpu.memory_space<vmem>>) attributes {dimension_semantics = [#tpu.dimension_semantics<parallel>], iteration_bounds = array<i64: 1>, scalar_prefetch = 0 : i64, scratch_operands = 0 : i64, tpu.core_type = #tpu.core_type<tc>, window_params = [{transform_indices = @transform_0, window_bounds = array<i64: 2, 16, 32>}, {pipeline_mode = #tpu.pipeline_mode<synchronous>, transform_indices = @transform_1, window_bounds = array<i64: 2, 32, 16>}, {pipeline_mode = #tpu.pipeline_mode<synchronous>, transform_indices = @transform_2, window_bounds = array<i64: 1, 16>}, {transform_indices = @transform_3, window_bounds = array<i64: 16, 8>}, {transform_indices = @transform_4, window_bounds = array<i64: 16, 8>}]} {
    %c0 = arith.constant 0 : index
    %c0_0 = arith.constant 0 : index
    %c0_1 = arith.constant 0 : index
    %0 = vector.load %arg1[%c0, %c0_0, %c0_1] : memref<2x16x32xf32, #tpu.memory_space<vmem>>, vector<1x16x32xf32>
    %1 = vector.shape_cast %0 : vector<1x16x32xf32> to vector<16x32xf32>
    %c0_2 = arith.constant 0 : index
    %c0_3 = arith.constant 0 : index
    %c0_4 = arith.constant 0 : index
    %2 = vector.load %arg2[%c0_2, %c0_3, %c0_4] : memref<2x32x16xf32, #tpu.memory_space<vmem>>, vector<1x32x16xf32>
    %3 = vector.shape_cast %2 : vector<1x32x16xf32> to vector<32x16xf32>
    %cst = arith.constant dense<0.000000e+00> : vector<16x16xf32>
    %4 = tpu.matmul %1, %3, %cst {dimension_numbers = #tpu.dot_dimension_numbers<[1], [0], [0], [1], [0, 0, 1, 1], [], []>} : vector<16x32xf32>, vector<32x16xf32>, vector<16x16xf32> -> vector<16x16xf32>
    %c1 = arith.constant 1 : index
    %c0_5 = arith.constant 0 : index
    %c0_6 = arith.constant 0 : index
    %5 = vector.load %arg1[%c1, %c0_5, %c0_6] : memref<2x16x32xf32, #tpu.memory_space<vmem>>, vector<1x16x32xf32>
    %6 = vector.shape_cast %5 : vector<1x16x32xf32> to vector<16x32xf32>
    %c1_7 = arith.constant 1 : index
    %c0_8 = arith.constant 0 : index
    %c0_9 = arith.constant 0 : index
    %7 = vector.load %arg2[%c1_7, %c0_8, %c0_9] : memref<2x32x16xf32, #tpu.memory_space<vmem>>, vector<1x32x16xf32>
    %8 = vector.shape_cast %7 : vector<1x32x16xf32> to vector<32x16xf32>
    %cst_10 = arith.constant dense<0.000000e+00> : vector<16x16xf32>
    %9 = tpu.matmul %6, %8, %cst_10 {dimension_numbers = #tpu.dot_dimension_numbers<[1], [0], [0], [1], [0, 0, 1, 1], [], []>} : vector<16x32xf32>, vector<32x16xf32>, vector<16x16xf32> -> vector<16x16xf32>
    %10 = arith.addf %4, %9 : vector<16x16xf32>
    %c0_11 = arith.constant 0 : index
    %c0_12 = arith.constant 0 : index
    %11 = vector.load %arg3[%c0_11, %c0_12] : memref<1x16xf32, #tpu.memory_space<vmem>>, vector<1x16xf32>
    %12 = vector.broadcast %11 : vector<1x16xf32> to vector<16x16xf32>
    %13 = arith.addf %10, %12 : vector<16x16xf32>
    %14 = vector.extract_strided_slice %13 {offsets = [0, 0], sizes = [16, 8], strides = [1, 1]} : vector<16x16xf32> to vector<16x8xf32>
    %c0_13 = arith.constant 0 : index
    %c0_14 = arith.constant 0 : index
    %15 = vector.load %arg4[%c0_13, %c0_14] : memref<16x8xf32, #tpu.memory_space<vmem>>, vector<16x8xf32>
    tpu.vector_store %arg4[%c0_13, %c0_14], %14 {strides = array<i32>} : memref<16x8xf32, #tpu.memory_space<vmem>>, vector<16x8xf32>,
    %16 = vector.extract_strided_slice %13 {offsets = [0, 8], sizes = [16, 8], strides = [1, 1]} : vector<16x16xf32> to vector<16x8xf32>
    %17 = arith.negf %16 : vector<16x8xf32>
    %18 = math.exp %17 : vector<16x8xf32>
    %cst_15 = arith.constant 1.000000e+00 : f32
    %19 = vector.broadcast %cst_15 : f32 to vector<16x8xf32>
    %20 = arith.addf %19, %18 : vector<16x8xf32>
    %21 = arith.divf %19, %20 : vector<16x8xf32>
    %c0_16 = arith.constant 0 : index
    %c0_17 = arith.constant 0 : index
    %22 = vector.load %arg5[%c0_16, %c0_17] : memref<16x8xf32, #tpu.memory_space<vmem>>, vector<16x8xf32>
    tpu.vector_store %arg5[%c0_16, %c0_17], %21 {strides = array<i32>} : memref<16x8xf32, #tpu.memory_space<vmem>>, vector<16x8xf32>,
    return
  }
  func.func @transform_0(%arg0: i32) -> (i32, i32, i32) {
    %c0_i32 = arith.constant 0 : i32
    %c0_i32_0 = arith.constant 0 : i32
    %c0_i32_1 = arith.constant 0 : i32
    return %c0_i32, %arg0, %c0_i32_0 : i32, i32, i32
  }
  func.func @transform_1(%arg0: i32) -> (i32, i32, i32) {
    %c0_i32 = arith.constant 0 : i32
    %c0_i32_0 = arith.constant 0 : i32
    %c0_i32_1 = arith.constant 0 : i32
    %c0_i32_2 = arith.constant 0 : i32
    return %c0_i32, %c0_i32_0, %c0_i32_1 : i32, i32, i32
  }
  func.func @transform_2(%arg0: i32) -> (i32, i32) {
    %c0_i32 = arith.constant 0 : i32
    %c0_i32_0 = arith.constant 0 : i32
    %c0_i32_1 = arith.constant 0 : i32
    return %c0_i32, %c0_i32_0 : i32, i32
  }
  func.func @transform_3(%arg0: i32) -> (i32, i32) {
    %c0_i32 = arith.constant 0 : i32
    %c0_i32_0 = arith.constant 0 : i32
    return %arg0, %c0_i32 : i32, i32
  }
  func.func @transform_4(%arg0: i32) -> (i32, i32) {
    %c0_i32 = arith.constant 0 : i32
    %c0_i32_0 = arith.constant 0 : i32
    return %arg0, %c0_i32 : i32, i32
  }
}

</mosaic_0001>

<llo_original>
// kernel: lstm_se_pl_dense_mtl_forward.9
$region0: #{lstm_se_pl_dense_mtl_forward.9}
  #allocation0 [shape = 'u32[]', space=smem, size = 0x4, offset = 0x4, fixed_abs, tag = 'smem constant byte address 0x4 - core index']
  #allocation1 [shape = 'u32[144,128]{1,0:T(1,128)}', space=vmem, size = 0x12000, scoped, tag = 'internal scratch']
  %s0 = inlined_call_operand.vmem [shape: f32[16,56], index: 0, kind: input, shape index: {}]
  %s1 = inlined_call_operand.hbm [shape: f32[2,56,128], index: 1, kind: input, shape index: {}]
  %s2 = inlined_call_operand.vmem [shape: f32[2,1,128], index: 2, kind: input, shape index: {}]
  %s3 = inlined_call_operand.vmem [shape: f32[2,16,128], index: 3, kind: output, shape index: {}]
  %s4 = sld [smem:[#allocation0]]
  $region49: #{lstm_se_pl_dense_mtl_forward.9} parent=0
    _
  %s6 = ssub.s32 1, %s4
  %s7 = scalar_select 0, %s6, %s4
  $region1: #{lstm_se_pl_dense_mtl_forward.9} parent=0
    #allocation2 [shape = 'u8[57344]{0}', space=vmem, size = 0xe000, scoped, tag = 'input window, operand 1']
    #allocation3 [shape = 's32[2]{0}', space=sflag, size = 0x8, scoped, tag = 'scoped memory for lstm_se_pl_dense_mtl_forward.9']
    %8 = vsyncpa [#allocation3], 0
    %s9 = scalar_lea.sflag [#allocation3], 1
    %10 = vsyncpa %s9, 0
    loop: start=0, step=1, limit=4
    $region2: #{lstm_se_pl_dense_mtl_forward.9} parent=1 // loop_pre_header
      _
    $region3: #{lstm_se_pl_dense_mtl_forward.9} parent=1 // loop_header
      %s12 = sphi 0, %s16
      %p13 = scmp.ge.s32.totalorder %s12, 4
      %s19 = sphi 0, %s31
      %s20 = sphi 0, %s27
      %s21 = sphi 0, %s19
      %s22 = sphi 0, %s20
      %s23 = sphi 0, %s21
      %s24 = sphi 0, %s22
      %s34 = sphi 0, %s36
      %s37 = sphi 0, %s34
      %s38 = sphi 0, %s37
      %s54 = sphi 0, %s38
      %s60 = sphi 0, %s62
      %s63 = sphi 0, %s60
      %s64 = sphi 0, %s63
      %s80 = sphi 0, %s64
      %s86 = sphi 0, %s88
      %s89 = sphi 0, %s86
      %s90 = sphi 0, %s89
      %s106 = sphi 0, %s90
      %s114 = sphi 0, %s116
      %s117 = sphi 0, %s114
      %s118 = sphi 0, %s117
      %s134 = sphi 0, %s118
    $region4: #{lstm_se_pl_dense_mtl_forward.9} parent=1 // loop_header_branch
      %15 = sbr.rel (%p13) target = $region8
    $region5: #{lstm_se_pl_dense_mtl_forward.9} parent=1 // loop_body
      %s17 = ssub.s32 %s12, 1
      %s18 = ssub.s32 %s12, 2
      %s25 = sadd.s32 1, %s20
      %p26 = scmp.ge.s32.totalorder %s25, 1
      %s27 = scalar_select %p26, 0, %s25
      %s28 = sadd.s32 1, %s19
      %s29 = scalar_select %p26, %s28, %s19
      %p30 = scmp.ge.s32.totalorder %s29, 2
      %s31 = scalar_select %p30, 0, %s29
      %s32 = ssub.s32 %s20, %s27
      %p33 = scmp.eq.s32.totalorder %s32, 0
      %s35 = sadd.s32 %s34, 1
      %s36 = scalar_select %p33, %s34, %s35
      %p39 = pneg %p33
      %p40 = scmp.eq.s32.totalorder %s12, 1
      %p41 = por %p39, %p40
      %p42 = scmp.ne.s32.totalorder %s34, %s37
      %p43 = scmp.eq.s32.totalorder %s12, 0
      %p44 = por %p42, %p43
      %p45 = scmp.ne.s32.totalorder %s34, %s37
      %p46 = scmp.eq.s32.totalorder %s17, 1
      %p47 = por %p45, %p46
      %p48 = scmp.ne.s32.totalorder %s37, %s38
      %p49 = scmp.eq.s32.totalorder %s17, 0
      %p50 = por %p48, %p49
      %p51 = scmp.ne.s32.totalorder %s37, %s38
      %p52 = scmp.eq.s32.totalorder %s18, 1
      %p53 = por %p51, %p52
      %p55 = scmp.ne.s32.totalorder %s38, %s54
      %p56 = scmp.eq.s32.totalorder %s18, 0
      %p57 = por %p55, %p56
      %s58 = ssub.s32 %s19, %s31
      %p59 = scmp.eq.s32.totalorder %s58, 0
      %s61 = sadd.s32 %s60, 1
      %s62 = scalar_select %p59, %s60, %s61
      %p65 = pneg %p59
      %p66 = scmp.eq.s32.totalorder %s12, 1
      %p67 = por %p65, %p66
      %p68 = scmp.ne.s32.totalorder %s60, %s63
      %p69 = scmp.eq.s32.totalorder %s12, 0
      %p70 = por %p68, %p69
      %p71 = scmp.ne.s32.totalorder %s60, %s63
      %p72 = scmp.eq.s32.totalorder %s17, 1
      %p73 = por %p71, %p72
      %p74 = scmp.ne.s32.totalorder %s63, %s64
      %p75 = scmp.eq.s32.totalorder %s17, 0
      %p76 = por %p74, %p75
      %p77 = scmp.ne.s32.totalorder %s63, %s64
      %p78 = scmp.eq.s32.totalorder %s18, 1
      %p79 = por %p77, %p78
      %p81 = scmp.ne.s32.totalorder %s64, %s80
      %p82 = scmp.eq.s32.totalorder %s18, 0
      %p83 = por %p81, %p82
      %s84 = ssub.s32 %s19, %s31
      %p85 = scmp.eq.s32.totalorder %s84, 0
      %s87 = sadd.s32 %s86, 1
      %s88 = scalar_select %p85, %s86, %s87
      %p91 = pneg %p85
      %p92 = scmp.eq.s32.totalorder %s12, 1
      %p93 = por %p91, %p92
      %p94 = scmp.ne.s32.totalorder %s86, %s89
      %p95 = scmp.eq.s32.totalorder %s12, 0
      %p96 = por %p94, %p95
      %p97 = scmp.ne.s32.totalorder %s86, %s89
      %p98 = scmp.eq.s32.totalorder %s17, 1
      %p99 = por %p97, %p98
      %p100 = scmp.ne.s32.totalorder %s89, %s90
      %p101 = scmp.eq.s32.totalorder %s17, 0
      %p102 = por %p100, %p101
      %p103 = scmp.ne.s32.totalorder %s89, %s90
      %p104 = scmp.eq.s32.totalorder %s18, 1
      %p105 = por %p103, %p104
      %p107 = scmp.ne.s32.totalorder %s90, %s106
      %p108 = scmp.eq.s32.totalorder %s18, 0
      %p109 = por %p107, %p108
      %s110 = ssub.s32 %s19, %s31
      %s111 = ssub.s32 %s20, %s27
      %s112 = sor.u32 %s110, %s111
      %p113 = scmp.eq.s32.totalorder %s112, 0
      %s115 = sadd.s32 %s114, 1
      %s116 = scalar_select %p113, %s114, %s115
      %p119 = pneg %p113
      %p120 = scmp.eq.s32.totalorder %s12, 1
      %p121 = por %p119, %p120
      %p122 = scmp.ne.s32.totalorder %s114, %s117
      %p123 = scmp.eq.s32.totalorder %s12, 0
      %p124 = por %p122, %p123
      %p125 = scmp.ne.s32.totalorder %s114, %s117
      %p126 = scmp.eq.s32.totalorder %s17, 1
      %p127 = por %p125, %p126
      %p128 = scmp.ne.s32.totalorder %s117, %s118
      %p129 = scmp.eq.s32.totalorder %s17, 0
      %p130 = por %p128, %p129
      %p131 = scmp.ne.s32.totalorder %s117, %s118
      %p132 = scmp.eq.s32.totalorder %s18, 1
      %p133 = por %p131, %p132
      %p135 = scmp.ne.s32.totalorder %s118, %s134
      %p136 = scmp.eq.s32.totalorder %s18, 0
      %p137 = por %p135, %p136
      %p138 = scmp.le.s32.totalorder 1, %s12
      %p139 = scmp.lt.s32.totalorder %s12, 3
      %p140 = pnand %p138, %p139
      %p141 = pneg %p140
      // Predicated region
      $region9: #{lstm_se_pl_dense_mtl_forward.9} parent=5 // pred_check
        _
      $region10: #{lstm_se_pl_dense_mtl_forward.9} parent=5 // pred_check_branch
        %143 = sbr.rel (%p140) target = $region12
      $region11: #{lstm_se_pl_dense_mtl_forward.9} parent=5 // pred_region
        %s144 = ssub.s32 %s12, 1
        // Predicated region
        $region13: #{lstm_se_pl_dense_mtl_forward.9} parent=11 // pred_check
          %p145 = pneg %p50
        $region14: #{lstm_se_pl_dense_mtl_forward.9} parent=11 // pred_check_branch
          %147 = sbr.rel (%p145) target = $region16
        $region15: #{lstm_se_pl_dense_mtl_forward.9} parent=11 // pred_region
          %s148 = smul.u32 2, %s22
          %p149 = scmp.lt.s32.totalorder %s148, 1
          %s150 = scalar_select %p149, %s148, 1
          %s151 = smul.addr %s150, 8
          %s152 = scalar_lea.vmem %s0, %s151
          %s153 = smul.u32 2, %s22
        $region16: #{lstm_se_pl_dense_mtl_forward.9} parent=11 // pred_fallthru
          _
      $region12: #{lstm_se_pl_dense_mtl_forward.9} parent=5 // pred_fallthru
        _
      %p154 = scmp.lt.s32.totalorder %s12, 2
      // Predicated region
      $region17: #{lstm_se_pl_dense_mtl_forward.9} parent=5 // pred_check
        %p155 = pneg %p154
      $region18: #{lstm_se_pl_dense_mtl_forward.9} parent=5 // pred_check_branch
        %157 = sbr.rel (%p155) target = $region20
      $region19: #{lstm_se_pl_dense_mtl_forward.9} parent=5 // pred_region
        // Predicated region
        $region21: #{lstm_se_pl_dense_mtl_forward.9} parent=19 // pred_check
          %p158 = pneg %p70
        $region22: #{lstm_se_pl_dense_mtl_forward.9} parent=19 // pred_check_branch
          %160 = sbr.rel (%p158) target = $region24
        $region23: #{lstm_se_pl_dense_mtl_forward.9} parent=19 // pred_region
          %s161 = sand.u32 %s60, 1
          %s162 = scalar_lea.sflag [#allocation3], %s161
          %s163 = sand.u32 %s60, 1
          %s164 = smul.addr %s163, 56
          %s165 = scalar_lea.vmem [#allocation2], %s164
          %s167 = ssub.s32 896, 896
          %168 = vsyncadd %s162, %s167
          %s169 = smul.addr %s19, 7
          %s170 = smul.addr %s169, 128
          %s171 = scalar_lea.hbm %s1, %s170
          %s172 = sshll.u32 %s165, 4
          %s173 = int_to_ptr.vmem [resolvable:$true] %s172
          %178 = dma.hbm_to_vmem [thread:$0]  %s171, 896, %s173, %s162, 128, 128, 8
        $region24: #{lstm_se_pl_dense_mtl_forward.9} parent=19 // pred_fallthru
          _
        // Predicated region
        $region25: #{lstm_se_pl_dense_mtl_forward.9} parent=19 // pred_check
          %p179 = pneg %p96
        $region26: #{lstm_se_pl_dense_mtl_forward.9} parent=19 // pred_check_branch
          %181 = sbr.rel (%p179) target = $region28
        $region27: #{lstm_se_pl_dense_mtl_forward.9} parent=19 // pred_region
          %p182 = scmp.lt.s32.totalorder %s19, 1
          %s183 = scalar_select %p182, %s19, 1
          %s184 = scalar_lea.vmem %s2, %s183
        $region28: #{lstm_se_pl_dense_mtl_forward.9} parent=19 // pred_fallthru
          _
      $region20: #{lstm_se_pl_dense_mtl_forward.9} parent=5 // pred_fallthru
        _
      %p185 = scmp.le.s32.totalorder 1, %s12
      %p186 = scmp.lt.s32.totalorder %s12, 3
      %p187 = pnand %p185, %p186
      %p188 = pneg %p187
      // Predicated region
      $region29: #{lstm_se_pl_dense_mtl_forward.9} parent=5 // pred_check
        _
      $region30: #{lstm_se_pl_dense_mtl_forward.9} parent=5 // pred_check_branch
        %190 = sbr.rel (%p187) target = $region32
      $region31: #{lstm_se_pl_dense_mtl_forward.9} parent=5 // pred_region
        %s191 = ssub.s32 %s12, 1
        %s192 = sand.u32 %s63, 1
        %s193 = scalar_lea.sflag [#allocation3], %s192
        %s194 = sand.u32 %s63, 1
        %s195 = smul.addr %s194, 56
        %s196 = scalar_lea.vmem [#allocation2], %s195
        // Predicated region
        $region33: #{lstm_se_pl_dense_mtl_forward.9} parent=31 // pred_check
          %p197 = pneg %p76
        $region34: #{lstm_se_pl_dense_mtl_forward.9} parent=31 // pred_check_branch
          %199 = sbr.rel (%p197) target = $region36
        $region35: #{lstm_se_pl_dense_mtl_forward.9} parent=31 // pred_region
          %200 = dma.done %s193, 896
        $region36: #{lstm_se_pl_dense_mtl_forward.9} parent=31 // pred_fallthru
          _
        %s201 = smul.u32 2, %s22
        %p202 = scmp.lt.s32.totalorder %s201, 1
        %s203 = scalar_select %p202, %s201, 1
        %s204 = smul.addr %s203, 8
        %s205 = scalar_lea.vmem %s0, %s204
        %p206 = pneg %p50
        %p207 = pneg %p47
        %s208 = sand.u32 %s63, 1
        %s209 = scalar_lea.sflag [#allocation3], %s208
        %s210 = sand.u32 %s63, 1
        %s211 = smul.addr %s210, 56
        %s212 = scalar_lea.vmem [#allocation2], %s211
        %p213 = pneg %p76
        %p214 = pneg %p73
        %p215 = scmp.lt.s32.totalorder %s21, 1
        %s216 = scalar_select %p215, %s21, 1
        %s217 = scalar_lea.vmem %s2, %s216
        %p218 = pneg %p102
        %p219 = pneg %p99
        %p220 = pneg %p130
        %p221 = pneg %p127
        %s222 = smul.u32 2, %s22
        %p223 = scmp.lt.s32.totalorder %s21, 1
        %s224 = scalar_select %p223, %s21, 1
        %p225 = scmp.lt.s32.totalorder %s222, 1
        %s226 = scalar_select %p225, %s222, 1
        %s227 = smul.addr %s224, 2
        %s228 = sadd.s32 %s226, %s227
        %s229 = smul.addr %s228, 8
        %s230 = scalar_lea.vmem %s3, %s229
        %s231 = smul.u32 2, %s22
        %p232 = scmp.lt.s32.totalorder %s231, 1
        %s233 = scalar_select %p232, %s231, 1
        %s234 = smul.addr %s233, 8
        %s235 = scalar_lea.vmem %s0, %s234
        %s236 = smul.u32 2, %s22
        %p237 = scmp.lt.s32.totalorder %s21, 1
        %s238 = scalar_select %p237, %s21, 1
        %s239 = scalar_lea.vmem %s2, %s238
        %s240 = smul.u32 2, %s22
        %p241 = scmp.lt.s32.totalorder %s21, 1
        %s242 = scalar_select %p241, %s21, 1
        %p243 = scmp.lt.s32.totalorder %s240, 1
        %s244 = scalar_select %p243, %s240, 1
        %s245 = smul.addr %s242, 2
        %s246 = sadd.s32 %s244, %s245
        %s247 = smul.addr %s246, 8
        %s248 = scalar_lea.vmem %s3, %s247
        %s249 = smul.u32 2, %s22
        %v250 = vld [vmem:[%s235] sm:$0xff]
        %v251 = vld [vmem:[%s235 + $0x8] sm:$0xff]
        %v252 = vld [vmem:[%s196] sm:$0xff]
        %v253 = vld [vmem:[%s196 + $0x8] sm:$0xff]
        %v254 = vld [vmem:[%s196 + $0x10] sm:$0xff]
        %v255 = vld [vmem:[%s196 + $0x18] sm:$0xff]
        %v256 = vld [vmem:[%s196 + $0x20] sm:$0xff]
        %v257 = vld [vmem:[%s196 + $0x28] sm:$0xff]
        %v258 = vld [vmem:[%s196 + $0x30] sm:$0xff]
        %v259 = vld [vmem:[%s239] sm:$0x1]
        %v261 = vlaneseq
        %v262 = vshrl.u32 %v261, 7
        %v263 = vsub.s32 0, %v262
        %v264 = vrot.slane %v259, %v263
        %vm266 = vcmask 457728
        %v268 = vsel %vm266, %v250, 0
        %v271 = vsel %vm266, %v251, 0
        %273 = vmatprep.subr.mxu0 0.0
        %274 = vmatpush1.msra.mxu0 %v252
        %275 = vmatprep.subr.mxu0 0.0
        %276 = vmatpush1.msra.mxu0 %v253
        %277 = vmatprep.subr.mxu0 0.0
        %278 = vmatpush1.msra.mxu0 %v254
        %279 = vmatprep.subr.mxu0 0.0
        %280 = vmatpush1.msra.mxu0 %v255
        %281 = vmatprep.subr.mxu0 0.0
        %282 = vmatpush1.msra.mxu0 %v256
        %283 = vmatprep.subr.mxu0 0.0
        %284 = vmatpush1.msra.mxu0 %v257
        %285 = vmatprep.subr.mxu0 0.0
        %286 = vmatpush1.msra.mxu0 %v258
        %287 = vmatprep.subr.mxu0 0.0
        %288 = vmatpush1.msra.mxu0 0.0
        %289 = vmatprep.subr.mxu0 0.0
        %290 = vmatpush1.msra.mxu0 0.0
        %291 = vmatprep.subr.mxu0 0.0
        %292 = vmatpush1.msra.mxu0 0.0
        %293 = vmatprep.subr.mxu0 0.0
        %294 = vmatpush1.msra.mxu0 0.0
        %295 = vmatprep.subr.mxu0 0.0
        %296 = vmatpush1.msra.mxu0 0.0
        %297 = vmatprep.subr.mxu0 0.0
        %298 = vmatpush1.msra.mxu0 0.0
        %299 = vmatprep.subr.mxu0 0.0
        %300 = vmatpush1.msra.mxu0 0.0
        %301 = vmatprep.subr.mxu0 0.0
        %302 = vmatpush1.msra.mxu0 0.0
        %303 = vmatprep.subr.mxu0 0.0
        %304 = vmatpush1.msra.mxu0 0.0
        %305 = vmatprep.subr.mxu0 0.0
        %306 = vmatpush1.msra.mxu0 0.0
        %307 = vmatprep.subr.mxu0 0.0
        %308 = vmatpush1.msra.mxu0 0.0
        %309 = vmatprep.subr.mxu0 0.0
        %310 = vmatpush1.msra.mxu0 0.0
        %311 = vmatprep.subr.mxu0 0.0
        %312 = vmatpush1.msra.mxu0 0.0
        %313 = vmatprep.subr.mxu0 0.0
        %314 = vmatpush1.msra.mxu0 0.0
        %315 = vmatprep.subr.mxu0 0.0
        %316 = vmatpush1.msra.mxu0 0.0
        %317 = vmatprep.subr.mxu0 0.0
        %318 = vmatpush1.msra.mxu0 0.0
        %319 = vmatprep.subr.mxu0 0.0
        %320 = vmatpush1.msra.mxu0 0.0
        %321 = vmatprep.subr.mxu0 0.0
        %322 = vmatpush1.msra.mxu0 0.0
        %323 = vmatprep.subr.mxu0 0.0
        %324 = vmatpush1.msra.mxu0 0.0
        %325 = vmatprep.subr.mxu0 0.0
        %326 = vmatpush1.msra.mxu0 0.0
        %327 = vmatprep.subr.mxu0 0.0
        %328 = vmatpush1.msra.mxu0 0.0
        %329 = vmatprep.subr.mxu0 0.0
        %330 = vmatpush1.msra.mxu0 0.0
        %331 = vmatprep.subr.mxu0 0.0
        %332 = vmatpush1.msra.mxu0 0.0
        %333 = vmatprep.subr.mxu0 0.0
        %334 = vmatpush1.msra.mxu0 0.0
        %335 = vmatprep.subr.mxu0 0.0
        %336 = vmatpush1.msra.mxu0 0.0
        %337 = vmatprep.mubr.f32.mxu0 0.0
        %338 = vmatmul.mubr.f32.gmra.mrb[0].mxu0 %v268
        %v339 = vpop.f32.mrb[0].mxu0
        %v340 = vadd.f32 %v264, %v339
        %v341 = vpop.f32.mrb[0].mxu0
        %342 = vmatprep.mubr.f32.mxu0 0.0
        %343 = vmatmul.mubr.f32.gmra.mrb[0].mxu0 %v271
        %v344 = vpop.f32.mrb[0].mxu0
        %v345 = vadd.f32 %v264, %v344
        %v346 = vpop.f32.mrb[0].mxu0
        %347 = vdwg.mxu0
        %348 = vst [vmem:[%s248] sm:$0xff] %v340
        %349 = vst [vmem:[%s248 + $0x8] sm:$0xff] %v345
        %s350 = smul.u32 2, %s22
        %p351 = scmp.lt.s32.totalorder %s21, 1
        %s352 = scalar_select %p351, %s21, 1
        %p353 = scmp.lt.s32.totalorder %s350, 1
        %s354 = scalar_select %p353, %s350, 1
        %s355 = smul.addr %s352, 2
        %s356 = sadd.s32 %s354, %s355
        %s357 = smul.addr %s356, 8
        %s358 = scalar_lea.vmem %s3, %s357
        // Predicated region
        $region37: #{lstm_se_pl_dense_mtl_forward.9} parent=31 // pred_check
          %p359 = pneg %p127
        $region38: #{lstm_se_pl_dense_mtl_forward.9} parent=31 // pred_check_branch
          %361 = sbr.rel (%p359) target = $region40
        $region39: #{lstm_se_pl_dense_mtl_forward.9} parent=31 // pred_region
          %s362 = smul.u32 2, %s22
        $region40: #{lstm_se_pl_dense_mtl_forward.9} parent=31 // pred_fallthru
          _
      $region32: #{lstm_se_pl_dense_mtl_forward.9} parent=5 // pred_fallthru
        _
      %p363 = scmp.le.s32.totalorder 2, %s12
      // Predicated region
      $region41: #{lstm_se_pl_dense_mtl_forward.9} parent=5 // pred_check
        %p364 = pneg %p363
      $region42: #{lstm_se_pl_dense_mtl_forward.9} parent=5 // pred_check_branch
        %366 = sbr.rel (%p364) target = $region44
      $region43: #{lstm_se_pl_dense_mtl_forward.9} parent=5 // pred_region
        %s367 = ssub.s32 %s12, 2
        // Predicated region
        $region45: #{lstm_se_pl_dense_mtl_forward.9} parent=43 // pred_check
          %p368 = pneg %p133
        $region46: #{lstm_se_pl_dense_mtl_forward.9} parent=43 // pred_check_branch
          %370 = sbr.rel (%p368) target = $region48
        $region47: #{lstm_se_pl_dense_mtl_forward.9} parent=43 // pred_region
          %s371 = smul.u32 2, %s24
          %p372 = scmp.lt.s32.totalorder %s23, 1
          %s373 = scalar_select %p372, %s23, 1
          %p374 = scmp.lt.s32.totalorder %s371, 1
          %s375 = scalar_select %p374, %s371, 1
          %s376 = smul.addr %s373, 2
          %s377 = sadd.s32 %s375, %s376
          %s378 = smul.addr %s377, 8
          %s379 = scalar_lea.vmem %s3, %s378
        $region48: #{lstm_se_pl_dense_mtl_forward.9} parent=43 // pred_fallthru
          _
      $region44: #{lstm_se_pl_dense_mtl_forward.9} parent=5 // pred_fallthru
        _
    $region6: #{lstm_se_pl_dense_mtl_forward.9} parent=1 // loop_footer
      %s16 = sadd.s32 1, %s12
    $region7: #{lstm_se_pl_dense_mtl_forward.9} parent=1 // loop_footer_branch
      %11 = sbr.rel target = $region3
    $region8: #{lstm_se_pl_dense_mtl_forward.9} parent=1 // loop_exit
      _
    %380 = vsyncpa [#allocation3], 1
    %s381 = scalar_lea.sflag [#allocation3], 1
    %382 = vsyncpa %s381, 1

// kernel: lstm_se_pl_dense_mtl_forward.12
$region0: #{lstm_se_pl_dense_mtl_forward.12}
  #allocation0 [shape = 'u32[]', space=smem, size = 0x4, offset = 0x4, fixed_abs, tag = 'smem constant byte address 0x4 - core index']
  #allocation1 [shape = 'u32[144,128]{1,0:T(1,128)}', space=vmem, size = 0x12000, scoped, tag = 'internal scratch']
  %s0 = inlined_call_operand.vmem [shape: f32[16,16], index: 0, kind: input, shape index: {}]
  %s1 = inlined_call_operand.vmem [shape: f32[2,16,128], index: 1, kind: input, shape index: {}]
  %s2 = inlined_call_operand.vmem [shape: f32[2,1,128], index: 2, kind: input, shape index: {}]
  %s3 = inlined_call_operand.vmem [shape: f32[2,16,128], index: 3, kind: output, shape index: {}]
  %s4 = sld [smem:[#allocation0]]
  $region45: #{lstm_se_pl_dense_mtl_forward.12} parent=0
    _
  %s6 = ssub.s32 1, %s4
  %s7 = scalar_select 0, %s6, %s4
  loop: start=0, step=1, limit=4
  $region2: #{lstm_se_pl_dense_mtl_forward.12} parent=0 // loop_pre_header
    _
  $region3: #{lstm_se_pl_dense_mtl_forward.12} parent=0 // loop_header
    %s9 = sphi 0, %s13
    %p10 = scmp.ge.s32.totalorder %s9, 4
    %s16 = sphi 0, %s28
    %s17 = sphi 0, %s24
    %s18 = sphi 0, %s16
    %s19 = sphi 0, %s17
    %s20 = sphi 0, %s18
    %s21 = sphi 0, %s19
    %s31 = sphi 0, %s33
    %s34 = sphi 0, %s31
    %s35 = sphi 0, %s34
    %s51 = sphi 0, %s35
    %s57 = sphi 0, %s59
    %s60 = sphi 0, %s57
    %s61 = sphi 0, %s60
    %s77 = sphi 0, %s61
    %s83 = sphi 0, %s85
    %s86 = sphi 0, %s83
    %s87 = sphi 0, %s86
    %s103 = sphi 0, %s87
    %s111 = sphi 0, %s113
    %s114 = sphi 0, %s111
    %s115 = sphi 0, %s114
    %s131 = sphi 0, %s115
  $region4: #{lstm_se_pl_dense_mtl_forward.12} parent=0 // loop_header_branch
    %12 = sbr.rel (%p10) target = $region8
  $region5: #{lstm_se_pl_dense_mtl_forward.12} parent=0 // loop_body
    %s14 = ssub.s32 %s9, 1
    %s15 = ssub.s32 %s9, 2
    %s22 = sadd.s32 1, %s17
    %p23 = scmp.ge.s32.totalorder %s22, 1
    %s24 = scalar_select %p23, 0, %s22
    %s25 = sadd.s32 1, %s16
    %s26 = scalar_select %p23, %s25, %s16
    %p27 = scmp.ge.s32.totalorder %s26, 2
    %s28 = scalar_select %p27, 0, %s26
    %s29 = ssub.s32 %s17, %s24
    %p30 = scmp.eq.s32.totalorder %s29, 0
    %s32 = sadd.s32 %s31, 1
    %s33 = scalar_select %p30, %s31, %s32
    %p36 = pneg %p30
    %p37 = scmp.eq.s32.totalorder %s9, 1
    %p38 = por %p36, %p37
    %p39 = scmp.ne.s32.totalorder %s31, %s34
    %p40 = scmp.eq.s32.totalorder %s9, 0
    %p41 = por %p39, %p40
    %p42 = scmp.ne.s32.totalorder %s31, %s34
    %p43 = scmp.eq.s32.totalorder %s14, 1
    %p44 = por %p42, %p43
    %p45 = scmp.ne.s32.totalorder %s34, %s35
    %p46 = scmp.eq.s32.totalorder %s14, 0
    %p47 = por %p45, %p46
    %p48 = scmp.ne.s32.totalorder %s34, %s35
    %p49 = scmp.eq.s32.totalorder %s15, 1
    %p50 = por %p48, %p49
    %p52 = scmp.ne.s32.totalorder %s35, %s51
    %p53 = scmp.eq.s32.totalorder %s15, 0
    %p54 = por %p52, %p53
    %s55 = ssub.s32 %s16, %s28
    %p56 = scmp.eq.s32.totalorder %s55, 0
    %s58 = sadd.s32 %s57, 1
    %s59 = scalar_select %p56, %s57, %s58
    %p62 = pneg %p56
    %p63 = scmp.eq.s32.totalorder %s9, 1
    %p64 = por %p62, %p63
    %p65 = scmp.ne.s32.totalorder %s57, %s60
    %p66 = scmp.eq.s32.totalorder %s9, 0
    %p67 = por %p65, %p66
    %p68 = scmp.ne.s32.totalorder %s57, %s60
    %p69 = scmp.eq.s32.totalorder %s14, 1
    %p70 = por %p68, %p69
    %p71 = scmp.ne.s32.totalorder %s60, %s61
    %p72 = scmp.eq.s32.totalorder %s14, 0
    %p73 = por %p71, %p72
    %p74 = scmp.ne.s32.totalorder %s60, %s61
    %p75 = scmp.eq.s32.totalorder %s15, 1
    %p76 = por %p74, %p75
    %p78 = scmp.ne.s32.totalorder %s61, %s77
    %p79 = scmp.eq.s32.totalorder %s15, 0
    %p80 = por %p78, %p79
    %s81 = ssub.s32 %s16, %s28
    %p82 = scmp.eq.s32.totalorder %s81, 0
    %s84 = sadd.s32 %s83, 1
    %s85 = scalar_select %p82, %s83, %s84
    %p88 = pneg %p82
    %p89 = scmp.eq.s32.totalorder %s9, 1
    %p90 = por %p88, %p89
    %p91 = scmp.ne.s32.totalorder %s83, %s86
    %p92 = scmp.eq.s32.totalorder %s9, 0
    %p93 = por %p91, %p92
    %p94 = scmp.ne.s32.totalorder %s83, %s86
    %p95 = scmp.eq.s32.totalorder %s14, 1
    %p96 = por %p94, %p95
    %p97 = scmp.ne.s32.totalorder %s86, %s87
    %p98 = scmp.eq.s32.totalorder %s14, 0
    %p99 = por %p97, %p98
    %p100 = scmp.ne.s32.totalorder %s86, %s87
    %p101 = scmp.eq.s32.totalorder %s15, 1
    %p102 = por %p100, %p101
    %p104 = scmp.ne.s32.totalorder %s87, %s103
    %p105 = scmp.eq.s32.totalorder %s15, 0
    %p106 = por %p104, %p105
    %s107 = ssub.s32 %s16, %s28
    %s108 = ssub.s32 %s17, %s24
    %s109 = sor.u32 %s107, %s108
    %p110 = scmp.eq.s32.totalorder %s109, 0
    %s112 = sadd.s32 %s111, 1
    %s113 = scalar_select %p110, %s111, %s112
    %p116 = pneg %p110
    %p117 = scmp.eq.s32.totalorder %s9, 1
    %p118 = por %p116, %p117
    %p119 = scmp.ne.s32.totalorder %s111, %s114
    %p120 = scmp.eq.s32.totalorder %s9, 0
    %p121 = por %p119, %p120
    %p122 = scmp.ne.s32.totalorder %s111, %s114
    %p123 = scmp.eq.s32.totalorder %s14, 1
    %p124 = por %p122, %p123
    %p125 = scmp.ne.s32.totalorder %s114, %s115
    %p126 = scmp.eq.s32.totalorder %s14, 0
    %p127 = por %p125, %p126
    %p128 = scmp.ne.s32.totalorder %s114, %s115
    %p129 = scmp.eq.s32.totalorder %s15, 1
    %p130 = por %p128, %p129
    %p132 = scmp.ne.s32.totalorder %s115, %s131
    %p133 = scmp.eq.s32.totalorder %s15, 0
    %p134 = por %p132, %p133
    %p135 = scmp.le.s32.totalorder 1, %s9
    %p136 = scmp.lt.s32.totalorder %s9, 3
    %p137 = pnand %p135, %p136
    %p138 = pneg %p137
    // Predicated region
    $region9: #{lstm_se_pl_dense_mtl_forward.12} parent=5 // pred_check
      _
    $region10: #{lstm_se_pl_dense_mtl_forward.12} parent=5 // pred_check_branch
      %140 = sbr.rel (%p137) target = $region12
    $region11: #{lstm_se_pl_dense_mtl_forward.12} parent=5 // pred_region
      %s141 = ssub.s32 %s9, 1
      // Predicated region
      $region13: #{lstm_se_pl_dense_mtl_forward.12} parent=11 // pred_check
        %p142 = pneg %p47
      $region14: #{lstm_se_pl_dense_mtl_forward.12} parent=11 // pred_check_branch
        %144 = sbr.rel (%p142) target = $region16
      $region15: #{lstm_se_pl_dense_mtl_forward.12} parent=11 // pred_region
        %s145 = smul.u32 2, %s19
        %p146 = scmp.lt.s32.totalorder %s145, 1
        %s147 = scalar_select %p146, %s145, 1
        %s148 = smul.addr %s147, 8
        %s149 = scalar_lea.vmem %s0, %s148
        %s150 = smul.u32 2, %s19
      $region16: #{lstm_se_pl_dense_mtl_forward.12} parent=11 // pred_fallthru
        _
    $region12: #{lstm_se_pl_dense_mtl_forward.12} parent=5 // pred_fallthru
      _
    %p151 = scmp.lt.s32.totalorder %s9, 2
    // Predicated region
    $region17: #{lstm_se_pl_dense_mtl_forward.12} parent=5 // pred_check
      %p152 = pneg %p151
    $region18: #{lstm_se_pl_dense_mtl_forward.12} parent=5 // pred_check_branch
      %154 = sbr.rel (%p152) target = $region20
    $region19: #{lstm_se_pl_dense_mtl_forward.12} parent=5 // pred_region
      // Predicated region
      $region21: #{lstm_se_pl_dense_mtl_forward.12} parent=19 // pred_check
        %p155 = pneg %p67
      $region22: #{lstm_se_pl_dense_mtl_forward.12} parent=19 // pred_check_branch
        %157 = sbr.rel (%p155) target = $region24
      $region23: #{lstm_se_pl_dense_mtl_forward.12} parent=19 // pred_region
        %p158 = scmp.lt.s32.totalorder %s16, 1
        %s159 = scalar_select %p158, %s16, 1
        %s160 = smul.addr %s159, 2
        %s161 = smul.addr %s160, 8
        %s162 = scalar_lea.vmem %s1, %s161
      $region24: #{lstm_se_pl_dense_mtl_forward.12} parent=19 // pred_fallthru
        _
      // Predicated region
      $region25: #{lstm_se_pl_dense_mtl_forward.12} parent=19 // pred_check
        %p163 = pneg %p93
      $region26: #{lstm_se_pl_dense_mtl_forward.12} parent=19 // pred_check_branch
        %165 = sbr.rel (%p163) target = $region28
      $region27: #{lstm_se_pl_dense_mtl_forward.12} parent=19 // pred_region
        %p166 = scmp.lt.s32.totalorder %s16, 1
        %s167 = scalar_select %p166, %s16, 1
        %s168 = scalar_lea.vmem %s2, %s167
      $region28: #{lstm_se_pl_dense_mtl_forward.12} parent=19 // pred_fallthru
        _
    $region20: #{lstm_se_pl_dense_mtl_forward.12} parent=5 // pred_fallthru
      _
    %p169 = scmp.le.s32.totalorder 1, %s9
    %p170 = scmp.lt.s32.totalorder %s9, 3
    %p171 = pnand %p169, %p170
    %p172 = pneg %p171
    // Predicated region
    $region29: #{lstm_se_pl_dense_mtl_forward.12} parent=5 // pred_check
      _
    $region30: #{lstm_se_pl_dense_mtl_forward.12} parent=5 // pred_check_branch
      %174 = sbr.rel (%p171) target = $region32
    $region31: #{lstm_se_pl_dense_mtl_forward.12} parent=5 // pred_region
      %s175 = ssub.s32 %s9, 1
      %s176 = smul.u32 2, %s19
      %p177 = scmp.lt.s32.totalorder %s176, 1
      %s178 = scalar_select %p177, %s176, 1
      %s179 = smul.addr %s178, 8
      %s180 = scalar_lea.vmem %s0, %s179
      %p181 = pneg %p47
      %p182 = pneg %p44
      %p183 = scmp.lt.s32.totalorder %s18, 1
      %s184 = scalar_select %p183, %s18, 1
      %s185 = smul.addr %s184, 2
      %s186 = smul.addr %s185, 8
      %s187 = scalar_lea.vmem %s1, %s186
      %p188 = pneg %p73
      %p189 = pneg %p70
      %p190 = scmp.lt.s32.totalorder %s18, 1
      %s191 = scalar_select %p190, %s18, 1
      %s192 = scalar_lea.vmem %s2, %s191
      %p193 = pneg %p99
      %p194 = pneg %p96
      %p195 = pneg %p127
      %p196 = pneg %p124
      %s197 = smul.u32 2, %s19
      %p198 = scmp.lt.s32.totalorder %s18, 1
      %s199 = scalar_select %p198, %s18, 1
      %p200 = scmp.lt.s32.totalorder %s197, 1
      %s201 = scalar_select %p200, %s197, 1
      %s202 = smul.addr %s199, 2
      %s203 = sadd.s32 %s201, %s202
      %s204 = smul.addr %s203, 8
      %s205 = scalar_lea.vmem %s3, %s204
      %s206 = smul.u32 2, %s19
      %p207 = scmp.lt.s32.totalorder %s206, 1
      %s208 = scalar_select %p207, %s206, 1
      %s209 = smul.addr %s208, 8
      %s210 = scalar_lea.vmem %s0, %s209
      %s211 = smul.u32 2, %s19
      %p212 = scmp.lt.s32.totalorder %s18, 1
      %s213 = scalar_select %p212, %s18, 1
      %s214 = smul.addr %s213, 2
      %s215 = smul.addr %s214, 8
      %s216 = scalar_lea.vmem %s1, %s215
      %p217 = scmp.lt.s32.totalorder %s18, 1
      %s218 = scalar_select %p217, %s18, 1
      %s219 = scalar_lea.vmem %s2, %s218
      %s220 = smul.u32 2, %s19
      %p221 = scmp.lt.s32.totalorder %s18, 1
      %s222 = scalar_select %p221, %s18, 1
      %p223 = scmp.lt.s32.totalorder %s220, 1
      %s224 = scalar_select %p223, %s220, 1
      %s225 = smul.addr %s222, 2
      %s226 = sadd.s32 %s224, %s225
      %s227 = smul.addr %s226, 8
      %s228 = scalar_lea.vmem %s3, %s227
      %s229 = smul.u32 2, %s19
      %v230 = vld [vmem:[%s210] sm:$0xff]
      %v231 = vld [vmem:[%s210 + $0x8] sm:$0xff]
      %v232 = vld [vmem:[%s216] sm:$0xff]
      %v233 = vld [vmem:[%s216 + $0x8] sm:$0xff]
      %v234 = vld [vmem:[%s219] sm:$0x1]
      %v236 = vlaneseq
      %v237 = vshrl.u32 %v236, 7
      %v238 = vsub.s32 0, %v237
      %v239 = vrot.slane %v234, %v238
      %vm241 = vcmask 130048
      %v243 = vsel %vm241, %v230, 0
      %v246 = vsel %vm241, %v231, 0
      %248 = vmatprep.subr.mxu0 0.0
      %249 = vmatpush1.msra.mxu0 %v232
      %250 = vmatprep.subr.mxu0 0.0
      %251 = vmatpush1.msra.mxu0 %v233
      %252 = vmatprep.subr.mxu0 0.0
      %253 = vmatpush1.msra.mxu0 0.0
      %254 = vmatprep.subr.mxu0 0.0
      %255 = vmatpush1.msra.mxu0 0.0
      %256 = vmatprep.subr.mxu0 0.0
      %257 = vmatpush1.msra.mxu0 0.0
      %258 = vmatprep.subr.mxu0 0.0
      %259 = vmatpush1.msra.mxu0 0.0
      %260 = vmatprep.subr.mxu0 0.0
      %261 = vmatpush1.msra.mxu0 0.0
      %262 = vmatprep.subr.mxu0 0.0
      %263 = vmatpush1.msra.mxu0 0.0
      %264 = vmatprep.subr.mxu0 0.0
      %265 = vmatpush1.msra.mxu0 0.0
      %266 = vmatprep.subr.mxu0 0.0
      %267 = vmatpush1.msra.mxu0 0.0
      %268 = vmatprep.subr.mxu0 0.0
      %269 = vmatpush1.msra.mxu0 0.0
      %270 = vmatprep.subr.mxu0 0.0
      %271 = vmatpush1.msra.mxu0 0.0
      %272 = vmatprep.subr.mxu0 0.0
      %273 = vmatpush1.msra.mxu0 0.0
      %274 = vmatprep.subr.mxu0 0.0
      %275 = vmatpush1.msra.mxu0 0.0
      %276 = vmatprep.subr.mxu0 0.0
      %277 = vmatpush1.msra.mxu0 0.0
      %278 = vmatprep.subr.mxu0 0.0
      %279 = vmatpush1.msra.mxu0 0.0
      %280 = vmatprep.subr.mxu0 0.0
      %281 = vmatpush1.msra.mxu0 0.0
      %282 = vmatprep.subr.mxu0 0.0
      %283 = vmatpush1.msra.mxu0 0.0
      %284 = vmatprep.subr.mxu0 0.0
      %285 = vmatpush1.msra.mxu0 0.0
      %286 = vmatprep.subr.mxu0 0.0
      %287 = vmatpush1.msra.mxu0 0.0
      %288 = vmatprep.subr.mxu0 0.0
      %289 = vmatpush1.msra.mxu0 0.0
      %290 = vmatprep.subr.mxu0 0.0
      %291 = vmatpush1.msra.mxu0 0.0
      %292 = vmatprep.subr.mxu0 0.0
      %293 = vmatpush1.msra.mxu0 0.0
      %294 = vmatprep.subr.mxu0 0.0
      %295 = vmatpush1.msra.mxu0 0.0
      %296 = vmatprep.subr.mxu0 0.0
      %297 = vmatpush1.msra.mxu0 0.0
      %298 = vmatprep.subr.mxu0 0.0
      %299 = vmatpush1.msra.mxu0 0.0
      %300 = vmatprep.subr.mxu0 0.0
      %301 = vmatpush1.msra.mxu0 0.0
      %302 = vmatprep.subr.mxu0 0.0
      %303 = vmatpush1.msra.mxu0 0.0
      %304 = vmatprep.subr.mxu0 0.0
      %305 = vmatpush1.msra.mxu0 0.0
      %306 = vmatprep.subr.mxu0 0.0
      %307 = vmatpush1.msra.mxu0 0.0
      %308 = vmatprep.subr.mxu0 0.0
      %309 = vmatpush1.msra.mxu0 0.0
      %310 = vmatprep.subr.mxu0 0.0
      %311 = vmatpush1.msra.mxu0 0.0
      %312 = vmatprep.mubr.f32.mxu0 0.0
      %313 = vmatmul.mubr.f32.gmra.mrb[0].mxu0 %v243
      %v314 = vpop.f32.mrb[0].mxu0
      %v315 = vadd.f32 %v239, %v314
      %v316 = vpop.f32.mrb[0].mxu0
      %317 = vmatprep.mubr.f32.mxu0 0.0
      %318 = vmatmul.mubr.f32.gmra.mrb[0].mxu0 %v246
      %v319 = vpop.f32.mrb[0].mxu0
      %v320 = vadd.f32 %v239, %v319
      %v321 = vpop.f32.mrb[0].mxu0
      %322 = vdwg.mxu0
      %323 = vst [vmem:[%s228] sm:$0xff] %v315
      %324 = vst [vmem:[%s228 + $0x8] sm:$0xff] %v320
      %s325 = smul.u32 2, %s19
      %p326 = scmp.lt.s32.totalorder %s18, 1
      %s327 = scalar_select %p326, %s18, 1
      %p328 = scmp.lt.s32.totalorder %s325, 1
      %s329 = scalar_select %p328, %s325, 1
      %s330 = smul.addr %s327, 2
      %s331 = sadd.s32 %s329, %s330
      %s332 = smul.addr %s331, 8
      %s333 = scalar_lea.vmem %s3, %s332
      // Predicated region
      $region33: #{lstm_se_pl_dense_mtl_forward.12} parent=31 // pred_check
        %p334 = pneg %p124
      $region34: #{lstm_se_pl_dense_mtl_forward.12} parent=31 // pred_check_branch
        %336 = sbr.rel (%p334) target = $region36
      $region35: #{lstm_se_pl_dense_mtl_forward.12} parent=31 // pred_region
        %s337 = smul.u32 2, %s19
      $region36: #{lstm_se_pl_dense_mtl_forward.12} parent=31 // pred_fallthru
        _
    $region32: #{lstm_se_pl_dense_mtl_forward.12} parent=5 // pred_fallthru
      _
    %p338 = scmp.le.s32.totalorder 2, %s9
    // Predicated region
    $region37: #{lstm_se_pl_dense_mtl_forward.12} parent=5 // pred_check
      %p339 = pneg %p338
    $region38: #{lstm_se_pl_dense_mtl_forward.12} parent=5 // pred_check_branch
      %341 = sbr.rel (%p339) target = $region40
    $region39: #{lstm_se_pl_dense_mtl_forward.12} parent=5 // pred_region
      %s342 = ssub.s32 %s9, 2
      // Predicated region
      $region41: #{lstm_se_pl_dense_mtl_forward.12} parent=39 // pred_check
        %p343 = pneg %p130
      $region42: #{lstm_se_pl_dense_mtl_forward.12} parent=39 // pred_check_branch
        %345 = sbr.rel (%p343) target = $region44
      $region43: #{lstm_se_pl_dense_mtl_forward.12} parent=39 // pred_region
        %s346 = smul.u32 2, %s21
        %p347 = scmp.lt.s32.totalorder %s20, 1
        %s348 = scalar_select %p347, %s20, 1
        %p349 = scmp.lt.s32.totalorder %s346, 1
        %s350 = scalar_select %p349, %s346, 1
        %s351 = smul.addr %s348, 2
        %s352 = sadd.s32 %s350, %s351
        %s353 = smul.addr %s352, 8
        %s354 = scalar_lea.vmem %s3, %s353
      $region44: #{lstm_se_pl_dense_mtl_forward.12} parent=39 // pred_fallthru
        _
    $region40: #{lstm_se_pl_dense_mtl_forward.12} parent=5 // pred_fallthru
      _
  $region6: #{lstm_se_pl_dense_mtl_forward.12} parent=0 // loop_footer
    %s13 = sadd.s32 1, %s9
  $region7: #{lstm_se_pl_dense_mtl_forward.12} parent=0 // loop_footer_branch
    %8 = sbr.rel target = $region3
  $region8: #{lstm_se_pl_dense_mtl_forward.12} parent=0 // loop_exit
    _

// kernel: lstm_se_pl_dense_mtl_forward.11
$region0: #{lstm_se_pl_dense_mtl_forward.11}
  #allocation0 [shape = 'u32[]', space=smem, size = 0x4, offset = 0x4, fixed_abs, tag = 'smem constant byte address 0x4 - core index']
  #allocation1 [shape = 'u32[144,128]{1,0:T(1,128)}', space=vmem, size = 0x12000, scoped, tag = 'internal scratch']
  %s0 = inlined_call_operand.vmem [shape: f32[2,16,32], index: 0, kind: input, shape index: {}]
  %s1 = inlined_call_operand.vmem [shape: f32[2,32,16], index: 1, kind: input, shape index: {}]
  %s2 = inlined_call_operand.vmem [shape: f32[1,16], index: 2, kind: input, shape index: {}]
  %s3 = inlined_call_operand.vmem [shape: f32[16,8], index: 3, kind: output, shape index: {0}]
  %s4 = inlined_call_operand.hbm [shape: f32[16,8], index: 4, kind: output, shape index: {1}]
  %5 = xla_tuple %s3, %s4
  %s6 = sld [smem:[#allocation0]]
  $region30: #{lstm_se_pl_dense_mtl_forward.11} parent=0
    _
  %s8 = ssub.s32 1, %s6
  %s9 = scalar_select 0, %s8, %s6
  $region1: #{lstm_se_pl_dense_mtl_forward.11} parent=0
    #allocation2 [shape = 'u8[8192]{0}', space=vmem, size = 0x2000, scoped, tag = 'output window, operand 1, single buffered']
    #allocation3 [shape = 's32[1]{0}', space=sflag, size = 0x4, scoped, tag = 'scoped memory for lstm_se_pl_dense_mtl_forward.11']
    %10 = vsyncpa [#allocation3], 0
    // Predicated region
    $region2: #{lstm_se_pl_dense_mtl_forward.11} parent=1 // pred_check
      _
    $region3: #{lstm_se_pl_dense_mtl_forward.11} parent=1 // pred_check_branch
      %12 = sbr.rel (0) target = $region5
    $region4: #{lstm_se_pl_dense_mtl_forward.11} parent=1 // pred_region
      _
    $region5: #{lstm_se_pl_dense_mtl_forward.11} parent=1 // pred_fallthru
      _
    // Predicated region
    $region6: #{lstm_se_pl_dense_mtl_forward.11} parent=1 // pred_check
      _
    $region7: #{lstm_se_pl_dense_mtl_forward.11} parent=1 // pred_check_branch
      %14 = sbr.rel (0) target = $region9
    $region8: #{lstm_se_pl_dense_mtl_forward.11} parent=1 // pred_region
      _
    $region9: #{lstm_se_pl_dense_mtl_forward.11} parent=1 // pred_fallthru
      _
    // Predicated region
    $region10: #{lstm_se_pl_dense_mtl_forward.11} parent=1 // pred_check
      _
    $region11: #{lstm_se_pl_dense_mtl_forward.11} parent=1 // pred_check_branch
      %16 = sbr.rel (0) target = $region13
    $region12: #{lstm_se_pl_dense_mtl_forward.11} parent=1 // pred_region
      _
    $region13: #{lstm_se_pl_dense_mtl_forward.11} parent=1 // pred_fallthru
      _
    %v17 = vld [vmem:[%s0] sm:$0xff]
    %v18 = vld [vmem:[%s0 + $0x8] sm:$0xff]
    %v19 = vld [vmem:[%s1] sm:$0xff]
    %v20 = vld [vmem:[%s1 + $0x8] sm:$0xff]
    %v21 = vld [vmem:[%s1 + $0x10] sm:$0xff]
    %v22 = vld [vmem:[%s1 + $0x18] sm:$0xff]
    %s23 = scalar_lea.vmem %s0, 16
    %v24 = vld [vmem:[%s23] sm:$0xff]
    %v25 = vld [vmem:[%s23 + $0x8] sm:$0xff]
    %s26 = scalar_lea.vmem %s1, 32
    %v27 = vld [vmem:[%s26] sm:$0xff]
    %v28 = vld [vmem:[%s26 + $0x8] sm:$0xff]
    %v29 = vld [vmem:[%s26 + $0x10] sm:$0xff]
    %v30 = vld [vmem:[%s26 + $0x18] sm:$0xff]
    %vm31 = vcmask 261120
    %v33 = vsel %vm31, %v24, 0
    %v36 = vsel %vm31, %v25, 0
    %38 = vmatprep.subr.mxu0 0.0
    %39 = vmatpush1.msra.mxu0 %v27
    %40 = vmatprep.subr.mxu0 0.0
    %41 = vmatpush1.msra.mxu0 %v28
    %42 = vmatprep.subr.mxu0 0.0
    %43 = vmatpush1.msra.mxu0 %v29
    %44 = vmatprep.subr.mxu0 0.0
    %45 = vmatpush1.msra.mxu0 %v30
    %46 = vmatprep.subr.mxu0 0.0
    %47 = vmatpush1.msra.mxu0 0.0
    %48 = vmatprep.subr.mxu0 0.0
    %49 = vmatpush1.msra.mxu0 0.0
    %50 = vmatprep.subr.mxu0 0.0
    %51 = vmatpush1.msra.mxu0 0.0
    %52 = vmatprep.subr.mxu0 0.0
    %53 = vmatpush1.msra.mxu0 0.0
    %54 = vmatprep.subr.mxu0 0.0
    %55 = vmatpush1.msra.mxu0 0.0
    %56 = vmatprep.subr.mxu0 0.0
    %57 = vmatpush1.msra.mxu0 0.0
    %58 = vmatprep.subr.mxu0 0.0
    %59 = vmatpush1.msra.mxu0 0.0
    %60 = vmatprep.subr.mxu0 0.0
    %61 = vmatpush1.msra.mxu0 0.0
    %62 = vmatprep.subr.mxu0 0.0
    %63 = vmatpush1.msra.mxu0 0.0
    %64 = vmatprep.subr.mxu0 0.0
    %65 = vmatpush1.msra.mxu0 0.0
    %66 = vmatprep.subr.mxu0 0.0
    %67 = vmatpush1.msra.mxu0 0.0
    %68 = vmatprep.subr.mxu0 0.0
    %69 = vmatpush1.msra.mxu0 0.0
    %70 = vmatprep.subr.mxu0 0.0
    %71 = vmatpush1.msra.mxu0 0.0
    %72 = vmatprep.subr.mxu0 0.0
    %73 = vmatpush1.msra.mxu0 0.0
    %74 = vmatprep.subr.mxu0 0.0
    %75 = vmatpush1.msra.mxu0 0.0
    %76 = vmatprep.subr.mxu0 0.0
    %77 = vmatpush1.msra.mxu0 0.0
    %78 = vmatprep.subr.mxu0 0.0
    %79 = vmatpush1.msra.mxu0 0.0
    %80 = vmatprep.subr.mxu0 0.0
    %81 = vmatpush1.msra.mxu0 0.0
    %82 = vmatprep.subr.mxu0 0.0
    %83 = vmatpush1.msra.mxu0 0.0
    %84 = vmatprep.subr.mxu0 0.0
    %85 = vmatpush1.msra.mxu0 0.0
    %86 = vmatprep.subr.mxu0 0.0
    %87 = vmatpush1.msra.mxu0 0.0
    %88 = vmatprep.subr.mxu0 0.0
    %89 = vmatpush1.msra.mxu0 0.0
    %90 = vmatprep.subr.mxu0 0.0
    %91 = vmatpush1.msra.mxu0 0.0
    %92 = vmatprep.subr.mxu0 0.0
    %93 = vmatpush1.msra.mxu0 0.0
    %94 = vmatprep.subr.mxu0 0.0
    %95 = vmatpush1.msra.mxu0 0.0
    %96 = vmatprep.subr.mxu0 0.0
    %97 = vmatpush1.msra.mxu0 0.0
    %98 = vmatprep.subr.mxu0 0.0
    %99 = vmatpush1.msra.mxu0 0.0
    %100 = vmatprep.subr.mxu0 0.0
    %101 = vmatpush1.msra.mxu0 0.0
    %102 = vmatprep.mubr.f32.mxu0 0.0
    %103 = vmatmul.mubr.f32.gmra.mrb[0].mxu0 %v33
    %v104 = vpop.f32.mrb[0].mxu0
    %v105 = vadd.f32 0.0, %v104
    %v106 = vpop.f32.mrb[0].mxu0
    %107 = vmatprep.mubr.f32.mxu0 0.0
    %108 = vmatmul.mubr.f32.gmra.mrb[0].mxu0 %v36
    %v109 = vpop.f32.mrb[0].mxu0
    %v110 = vadd.f32 0.0, %v109
    %v111 = vpop.f32.mrb[0].mxu0
    %112 = vdwg.mxu0
    %v114 = vsel %vm31, %v17, 0
    %v117 = vsel %vm31, %v18, 0
    %119 = vmatprep.subr.mxu0 0.0
    %120 = vmatpush1.msra.mxu0 %v19
    %121 = vmatprep.subr.mxu0 0.0
    %122 = vmatpush1.msra.mxu0 %v20
    %123 = vmatprep.subr.mxu0 0.0
    %124 = vmatpush1.msra.mxu0 %v21
    %125 = vmatprep.subr.mxu0 0.0
    %126 = vmatpush1.msra.mxu0 %v22
    %127 = vmatprep.subr.mxu0 0.0
    %128 = vmatpush1.msra.mxu0 0.0
    %129 = vmatprep.subr.mxu0 0.0
    %130 = vmatpush1.msra.mxu0 0.0
    %131 = vmatprep.subr.mxu0 0.0
    %132 = vmatpush1.msra.mxu0 0.0
    %133 = vmatprep.subr.mxu0 0.0
    %134 = vmatpush1.msra.mxu0 0.0
    %135 = vmatprep.subr.mxu0 0.0
    %136 = vmatpush1.msra.mxu0 0.0
    %137 = vmatprep.subr.mxu0 0.0
    %138 = vmatpush1.msra.mxu0 0.0
    %139 = vmatprep.subr.mxu0 0.0
    %140 = vmatpush1.msra.mxu0 0.0
    %141 = vmatprep.subr.mxu0 0.0
    %142 = vmatpush1.msra.mxu0 0.0
    %143 = vmatprep.subr.mxu0 0.0
    %144 = vmatpush1.msra.mxu0 0.0
    %145 = vmatprep.subr.mxu0 0.0
    %146 = vmatpush1.msra.mxu0 0.0
    %147 = vmatprep.subr.mxu0 0.0
    %148 = vmatpush1.msra.mxu0 0.0
    %149 = vmatprep.subr.mxu0 0.0
    %150 = vmatpush1.msra.mxu0 0.0
    %151 = vmatprep.subr.mxu0 0.0
    %152 = vmatpush1.msra.mxu0 0.0
    %153 = vmatprep.subr.mxu0 0.0
    %154 = vmatpush1.msra.mxu0 0.0
    %155 = vmatprep.subr.mxu0 0.0
    %156 = vmatpush1.msra.mxu0 0.0
    %157 = vmatprep.subr.mxu0 0.0
    %158 = vmatpush1.msra.mxu0 0.0
    %159 = vmatprep.subr.mxu0 0.0
    %160 = vmatpush1.msra.mxu0 0.0
    %161 = vmatprep.subr.mxu0 0.0
    %162 = vmatpush1.msra.mxu0 0.0
    %163 = vmatprep.subr.mxu0 0.0
    %164 = vmatpush1.msra.mxu0 0.0
    %165 = vmatprep.subr.mxu0 0.0
    %166 = vmatpush1.msra.mxu0 0.0
    %167 = vmatprep.subr.mxu0 0.0
    %168 = vmatpush1.msra.mxu0 0.0
    %169 = vmatprep.subr.mxu0 0.0
    %170 = vmatpush1.msra.mxu0 0.0
    %171 = vmatprep.subr.mxu0 0.0
    %172 = vmatpush1.msra.mxu0 0.0
    %173 = vmatprep.subr.mxu0 0.0
    %174 = vmatpush1.msra.mxu0 0.0
    %175 = vmatprep.subr.mxu0 0.0
    %176 = vmatpush1.msra.mxu0 0.0
    %177 = vmatprep.subr.mxu0 0.0
    %178 = vmatpush1.msra.mxu0 0.0
    %179 = vmatprep.subr.mxu0 0.0
    %180 = vmatpush1.msra.mxu0 0.0
    %181 = vmatprep.subr.mxu0 0.0
    %182 = vmatpush1.msra.mxu0 0.0
    %183 = vmatprep.mubr.f32.mxu0 0.0
    %184 = vmatmul.mubr.f32.gmra.mrb[0].mxu0 %v114
    %v185 = vpop.f32.mrb[0].mxu0
    %v186 = vadd.f32 %v105, %v185
    %v187 = vpop.f32.mrb[0].mxu0
    %188 = vmatprep.mubr.f32.mxu0 0.0
    %189 = vmatmul.mubr.f32.gmra.mrb[0].mxu0 %v117
    %v190 = vpop.f32.mrb[0].mxu0
    %v191 = vadd.f32 %v110, %v190
    %v192 = vpop.f32.mrb[0].mxu0
    %193 = vdwg.mxu0
    %v194 = vld [vmem:[%s2] sm:$0x1]
    %v196 = vlaneseq
    %v197 = vshrl.u32 %v196, 7
    %v198 = vsub.s32 0, %v197
    %v199 = vrot.slane %v194, %v198
    %v201 = vadd.f32 %v186, %v199
    %v202 = vadd.f32 %v191, %v199
    %vm203 = vcmask 64512
    %204 = vst.msk [vmem:[%s3] sm:$0xff] %vm203, %v201
    %205 = vst.msk [vmem:[%s3 + $0x8] sm:$0xff] %vm203, %v202
    %v206 = vxor.u32 %v201, 2147483648
    %v207 = vxor.u32 %v202, 2147483648
    %v208 = vmul.f32 %v206, 1.442695
    %v209 = vpow.pop %v208
    %v210 = vmul.f32 %v207, 1.442695
    %v211 = vpow.pop %v210
    %v212 = vadd.f32 %v209, 1.0
    %v213 = vadd.f32 %v211, 1.0
    %v214 = vrcp.pop %v212
    %v215 = vmul.f32 1.0, %v214
    %v216 = vrcp.pop %v213
    %v217 = vmul.f32 1.0, %v216
    %220 = vrot.lane.b32.xlu0 %v215, 120
    %v221 = vpop.permute.xlu0 %220
    %222 = vrot.lane.b32.xlu0 %v217, 120
    %v223 = vpop.permute.xlu0 %222
    %226 = vst.msk [vmem:[#allocation2] sm:$0xff] %vm203, %v221
    %227 = vst.msk [vmem:[#allocation2 + $0x8] sm:$0xff] %vm203, %v223
    // Predicated region
    $region14: #{lstm_se_pl_dense_mtl_forward.11} parent=1 // pred_check
      _
    $region15: #{lstm_se_pl_dense_mtl_forward.11} parent=1 // pred_check_branch
      %229 = sbr.rel (0) target = $region17
    $region16: #{lstm_se_pl_dense_mtl_forward.11} parent=1 // pred_region
      _
    $region17: #{lstm_se_pl_dense_mtl_forward.11} parent=1 // pred_fallthru
      _
    // Predicated region
    $region18: #{lstm_se_pl_dense_mtl_forward.11} parent=1 // pred_check
      _
    $region19: #{lstm_se_pl_dense_mtl_forward.11} parent=1 // pred_check_branch
      %231 = sbr.rel (0) target = $region21
    $region20: #{lstm_se_pl_dense_mtl_forward.11} parent=1 // pred_region
      %s233 = ssub.s32 256, 256
      %234 = vsyncadd [#allocation3], %s233
      %s235 = sshll.u32 [#allocation2], 4
      %s236 = int_to_ptr.vmem [resolvable:$true] %s235
      %241 = dma.vmem_to_hbm [thread:$0]  %s236, 256, %s4, [#allocation3], 128, 128, 8
    $region21: #{lstm_se_pl_dense_mtl_forward.11} parent=1 // pred_fallthru
      _
    // Predicated region
    $region22: #{lstm_se_pl_dense_mtl_forward.11} parent=1 // pred_check
      _
    $region23: #{lstm_se_pl_dense_mtl_forward.11} parent=1 // pred_check_branch
      %243 = sbr.rel (0) target = $region25
    $region24: #{lstm_se_pl_dense_mtl_forward.11} parent=1 // pred_region
      _
    $region25: #{lstm_se_pl_dense_mtl_forward.11} parent=1 // pred_fallthru
      _
    // Predicated region
    $region26: #{lstm_se_pl_dense_mtl_forward.11} parent=1 // pred_check
      _
    $region27: #{lstm_se_pl_dense_mtl_forward.11} parent=1 // pred_check_branch
      %245 = sbr.rel (0) target = $region29
    $region28: #{lstm_se_pl_dense_mtl_forward.11} parent=1 // pred_region
      %246 = dma.done [#allocation3], 256
    $region29: #{lstm_se_pl_dense_mtl_forward.11} parent=1 // pred_fallthru
      _
    %247 = vsyncpa [#allocation3], 1

// kernel: lstm_se_pl_dense_mtl_forward.10
$region0: #{lstm_se_pl_dense_mtl_forward.10}
  #allocation0 [shape = 'u32[]', space=smem, size = 0x4, offset = 0x4, fixed_abs, tag = 'smem constant byte address 0x4 - core index']
  #allocation1 [shape = 'u32[144,128]{1,0:T(1,128)}', space=vmem, size = 0x12000, scoped, tag = 'internal scratch']
  #allocation2 [shape = 'f32[2,32]{1,0:T(2,128)}', space=vmem, size = 0x400, scoped, tag = 'scratch operand']
  #allocation3 [shape = 'f32[2,32]{1,0:T(2,128)}', space=vmem, size = 0x400, scoped, tag = 'scratch operand']
  %s0 = inlined_call_operand.vmem [shape: f32[2,8,2,128], index: 0, kind: input, shape index: {}]
  %s1 = inlined_call_operand.vmem [shape: f32[2,32,128], index: 1, kind: input, shape index: {}]
  %s2 = inlined_call_operand.vmem [shape: f32[2,8,2,32], index: 2, kind: output, shape index: {}]
  %s3 = sld [smem:[#allocation0]]
  $region53: #{lstm_se_pl_dense_mtl_forward.10} parent=0
    _
  %s5 = ssub.s32 1, %s3
  %s6 = scalar_select 0, %s5, %s3
  loop: start=0, step=1, limit=4
  $region2: #{lstm_se_pl_dense_mtl_forward.10} parent=0 // loop_pre_header
    _
  $region3: #{lstm_se_pl_dense_mtl_forward.10} parent=0 // loop_header
    %s8 = sphi 0, %s12
    %p9 = scmp.ge.s32.totalorder %s8, 4
    %s15 = sphi 0, %s27
    %s16 = sphi 0, %s23
    %s17 = sphi 0, %s15
    %s18 = sphi 0, %s16
    %s19 = sphi 0, %s17
    %s20 = sphi 0, %s18
    %s38 = sphi 0, %s40
    %s41 = sphi 0, %s38
    %s42 = sphi 0, %s41
    %s58 = sphi 0, %s42
    %s64 = sphi 0, %s66
    %s67 = sphi 0, %s64
    %s68 = sphi 0, %s67
    %s84 = sphi 0, %s68
    %s98 = sphi 0, %s100
    %s101 = sphi 0, %s98
    %s102 = sphi 0, %s101
    %s118 = sphi 0, %s102
  $region4: #{lstm_se_pl_dense_mtl_forward.10} parent=0 // loop_header_branch
    %11 = sbr.rel (%p9) target = $region8
  $region5: #{lstm_se_pl_dense_mtl_forward.10} parent=0 // loop_body
    %s13 = ssub.s32 %s8, 1
    %s14 = ssub.s32 %s8, 2
    %s21 = sadd.s32 1, %s16
    %p22 = scmp.ge.s32.totalorder %s21, 1
    %s23 = scalar_select %p22, 0, %s21
    %s24 = sadd.s32 1, %s15
    %s25 = scalar_select %p22, %s24, %s15
    %p26 = scmp.ge.s32.totalorder %s25, 2
    %s27 = scalar_select %p26, 0, %s25
    %s28 = smul.u32 %s15, 2
    %s29 = ssub.s32 1, %s28
    %s30 = smul.u32 %s29, %s16
    %s31 = smul.u32 %s27, 2
    %s32 = ssub.s32 1, %s31
    %s33 = smul.u32 %s32, %s23
    %s34 = ssub.s32 %s15, %s27
    %s35 = ssub.s32 %s30, %s33
    %s36 = sor.u32 %s34, %s35
    %p37 = scmp.eq.s32.totalorder %s36, 0
    %s39 = sadd.s32 %s38, 1
    %s40 = scalar_select %p37, %s38, %s39
    %p43 = pneg %p37
    %p44 = scmp.eq.s32.totalorder %s8, 1
    %p45 = por %p43, %p44
    %p46 = scmp.ne.s32.totalorder %s38, %s41
    %p47 = scmp.eq.s32.totalorder %s8, 0
    %p48 = por %p46, %p47
    %p49 = scmp.ne.s32.totalorder %s38, %s41
    %p50 = scmp.eq.s32.totalorder %s13, 1
    %p51 = por %p49, %p50
    %p52 = scmp.ne.s32.totalorder %s41, %s42
    %p53 = scmp.eq.s32.totalorder %s13, 0
    %p54 = por %p52, %p53
    %p55 = scmp.ne.s32.totalorder %s41, %s42
    %p56 = scmp.eq.s32.totalorder %s14, 1
    %p57 = por %p55, %p56
    %p59 = scmp.ne.s32.totalorder %s42, %s58
    %p60 = scmp.eq.s32.totalorder %s14, 0
    %p61 = por %p59, %p60
    %s62 = ssub.s32 %s15, %s27
    %p63 = scmp.eq.s32.totalorder %s62, 0
    %s65 = sadd.s32 %s64, 1
    %s66 = scalar_select %p63, %s64, %s65
    %p69 = pneg %p63
    %p70 = scmp.eq.s32.totalorder %s8, 1
    %p71 = por %p69, %p70
    %p72 = scmp.ne.s32.totalorder %s64, %s67
    %p73 = scmp.eq.s32.totalorder %s8, 0
    %p74 = por %p72, %p73
    %p75 = scmp.ne.s32.totalorder %s64, %s67
    %p76 = scmp.eq.s32.totalorder %s13, 1
    %p77 = por %p75, %p76
    %p78 = scmp.ne.s32.totalorder %s67, %s68
    %p79 = scmp.eq.s32.totalorder %s13, 0
    %p80 = por %p78, %p79
    %p81 = scmp.ne.s32.totalorder %s67, %s68
    %p82 = scmp.eq.s32.totalorder %s14, 1
    %p83 = por %p81, %p82
    %p85 = scmp.ne.s32.totalorder %s68, %s84
    %p86 = scmp.eq.s32.totalorder %s14, 0
    %p87 = por %p85, %p86
    %s88 = smul.u32 %s15, 2
    %s89 = ssub.s32 1, %s88
    %s90 = smul.u32 %s89, %s16
    %s91 = smul.u32 %s27, 2
    %s92 = ssub.s32 1, %s91
    %s93 = smul.u32 %s92, %s23
    %s94 = ssub.s32 %s15, %s27
    %s95 = ssub.s32 %s90, %s93
    %s96 = sor.u32 %s94, %s95
    %p97 = scmp.eq.s32.totalorder %s96, 0
    %s99 = sadd.s32 %s98, 1
    %s100 = scalar_select %p97, %s98, %s99
    %p103 = pneg %p97
    %p104 = scmp.eq.s32.totalorder %s8, 1
    %p105 = por %p103, %p104
    %p106 = scmp.ne.s32.totalorder %s98, %s101
    %p107 = scmp.eq.s32.totalorder %s8, 0
    %p108 = por %p106, %p107
    %p109 = scmp.ne.s32.totalorder %s98, %s101
    %p110 = scmp.eq.s32.totalorder %s13, 1
    %p111 = por %p109, %p110
    %p112 = scmp.ne.s32.totalorder %s101, %s102
    %p113 = scmp.eq.s32.totalorder %s13, 0
    %p114 = por %p112, %p113
    %p115 = scmp.ne.s32.totalorder %s101, %s102
    %p116 = scmp.eq.s32.totalorder %s14, 1
    %p117 = por %p115, %p116
    %p119 = scmp.ne.s32.totalorder %s102, %s118
    %p120 = scmp.eq.s32.totalorder %s14, 0
    %p121 = por %p119, %p120
    %p122 = scmp.le.s32.totalorder 1, %s8
    %p123 = scmp.lt.s32.totalorder %s8, 3
    %p124 = pnand %p122, %p123
    %p125 = pneg %p124
    // Predicated region
    $region9: #{lstm_se_pl_dense_mtl_forward.10} parent=5 // pred_check
      _
    $region10: #{lstm_se_pl_dense_mtl_forward.10} parent=5 // pred_check_branch
      %127 = sbr.rel (%p124) target = $region12
    $region11: #{lstm_se_pl_dense_mtl_forward.10} parent=5 // pred_region
      %s128 = ssub.s32 %s8, 1
    $region12: #{lstm_se_pl_dense_mtl_forward.10} parent=5 // pred_fallthru
      _
    %p129 = scmp.lt.s32.totalorder %s8, 2
    // Predicated region
    $region13: #{lstm_se_pl_dense_mtl_forward.10} parent=5 // pred_check
      %p130 = pneg %p129
    $region14: #{lstm_se_pl_dense_mtl_forward.10} parent=5 // pred_check_branch
      %132 = sbr.rel (%p130) target = $region16
    $region15: #{lstm_se_pl_dense_mtl_forward.10} parent=5 // pred_region
      // Predicated region
      $region17: #{lstm_se_pl_dense_mtl_forward.10} parent=15 // pred_check
        %p133 = pneg %p48
      $region18: #{lstm_se_pl_dense_mtl_forward.10} parent=15 // pred_check_branch
        %135 = sbr.rel (%p133) target = $region20
      $region19: #{lstm_se_pl_dense_mtl_forward.10} parent=15 // pred_region
        %s136 = smul.u32 %s15, 2
        %s137 = ssub.s32 1, %s136
        %s138 = smul.u32 %s137, %s16
        %s139 = smul.u32 8, %s138
        %p140 = scmp.lt.s32.totalorder %s15, 1
        %s141 = scalar_select %p140, %s15, 1
        %p142 = scmp.lt.s32.totalorder %s139, 7
        %s143 = scalar_select %p142, %s139, 7
        %s144 = smul.addr %s141, 8
        %s145 = sadd.s32 %s143, %s144
        %s146 = smul.addr %s145, 2
        %s147 = scalar_lea.vmem %s0, %s146
        %s148 = smul.u32 %s15, 2
        %s149 = ssub.s32 1, %s148
        %s150 = smul.u32 %s149, %s16
        %s151 = smul.u32 8, %s150
      $region20: #{lstm_se_pl_dense_mtl_forward.10} parent=15 // pred_fallthru
        _
      // Predicated region
      $region21: #{lstm_se_pl_dense_mtl_forward.10} parent=15 // pred_check
        %p152 = pneg %p74
      $region22: #{lstm_se_pl_dense_mtl_forward.10} parent=15 // pred_check_branch
        %154 = sbr.rel (%p152) target = $region24
      $region23: #{lstm_se_pl_dense_mtl_forward.10} parent=15 // pred_region
        %p155 = scmp.lt.s32.totalorder %s15, 1
        %s156 = scalar_select %p155, %s15, 1
        %s157 = smul.addr %s156, 4
        %s158 = smul.addr %s157, 8
        %s159 = scalar_lea.vmem %s1, %s158
      $region24: #{lstm_se_pl_dense_mtl_forward.10} parent=15 // pred_fallthru
        _
    $region16: #{lstm_se_pl_dense_mtl_forward.10} parent=5 // pred_fallthru
      _
    %p160 = scmp.le.s32.totalorder 1, %s8
    %p161 = scmp.lt.s32.totalorder %s8, 3
    %p162 = pnand %p160, %p161
    %p163 = pneg %p162
    // Predicated region
    $region25: #{lstm_se_pl_dense_mtl_forward.10} parent=5 // pred_check
      _
    $region26: #{lstm_se_pl_dense_mtl_forward.10} parent=5 // pred_check_branch
      %165 = sbr.rel (%p162) target = $region28
    $region27: #{lstm_se_pl_dense_mtl_forward.10} parent=5 // pred_region
      %s166 = ssub.s32 %s8, 1
      %s167 = smul.u32 %s17, 2
      %s168 = ssub.s32 1, %s167
      %s169 = smul.u32 %s168, %s18
      %s170 = smul.u32 8, %s169
      %p171 = scmp.lt.s32.totalorder %s17, 1
      %s172 = scalar_select %p171, %s17, 1
      %p173 = scmp.lt.s32.totalorder %s170, 7
      %s174 = scalar_select %p173, %s170, 7
      %s175 = smul.addr %s172, 8
      %s176 = sadd.s32 %s174, %s175
      %s177 = smul.addr %s176, 2
      %s178 = scalar_lea.vmem %s0, %s177
      %p179 = pneg %p54
      %p180 = pneg %p51
      %p181 = scmp.lt.s32.totalorder %s17, 1
      %s182 = scalar_select %p181, %s17, 1
      %s183 = smul.addr %s182, 4
      %s184 = smul.addr %s183, 8
      %s185 = scalar_lea.vmem %s1, %s184
      %p186 = pneg %p80
      %p187 = pneg %p77
      %p188 = pneg %p114
      %p189 = pneg %p111
      %s190 = smul.u32 %s17, 2
      %s191 = ssub.s32 1, %s190
      %s192 = smul.u32 %s191, %s18
      %s193 = smul.u32 8, %s192
      %p194 = scmp.lt.s32.totalorder %s17, 1
      %s195 = scalar_select %p194, %s17, 1
      %p196 = scmp.lt.s32.totalorder %s193, 7
      %s197 = scalar_select %p196, %s193, 7
      %s198 = smul.addr %s195, 8
      %s199 = sadd.s32 %s197, %s198
      %s200 = smul.addr %s199, 2
      %s201 = scalar_lea.vmem %s2, %s200
      %s202 = smul.u32 %s17, 2
      %s203 = ssub.s32 1, %s202
      %s204 = smul.u32 %s203, %s18
      %s205 = smul.u32 8, %s204
      %p206 = scmp.lt.s32.totalorder %s17, 1
      %s207 = scalar_select %p206, %s17, 1
      %p208 = scmp.lt.s32.totalorder %s205, 7
      %s209 = scalar_select %p208, %s205, 7
      %s210 = smul.addr %s207, 8
      %s211 = sadd.s32 %s209, %s210
      %s212 = smul.addr %s211, 2
      %s213 = scalar_lea.vmem %s0, %s212
      %s214 = smul.u32 %s17, 2
      %s215 = ssub.s32 1, %s214
      %s216 = smul.u32 %s215, %s18
      %s217 = smul.u32 8, %s216
      %p218 = scmp.lt.s32.totalorder %s17, 1
      %s219 = scalar_select %p218, %s17, 1
      %s220 = smul.addr %s219, 4
      %s221 = smul.addr %s220, 8
      %s222 = scalar_lea.vmem %s1, %s221
      %s223 = smul.u32 %s17, 2
      %s224 = ssub.s32 1, %s223
      %s225 = smul.u32 %s224, %s18
      %s226 = smul.u32 8, %s225
      %p227 = scmp.lt.s32.totalorder %s17, 1
      %s228 = scalar_select %p227, %s17, 1
      %p229 = scmp.lt.s32.totalorder %s226, 7
      %s230 = scalar_select %p229, %s226, 7
      %s231 = smul.addr %s228, 8
      %s232 = sadd.s32 %s230, %s231
      %s233 = smul.addr %s232, 2
      %s234 = scalar_lea.vmem %s2, %s233
      %s235 = smul.u32 %s17, 2
      %s236 = ssub.s32 1, %s235
      %s237 = smul.u32 %s236, %s18
      %s238 = smul.u32 8, %s237
      %p239 = scmp.eq.s32.totalorder %s18, 0
      // Predicated region
      $region29: #{lstm_se_pl_dense_mtl_forward.10} parent=27 // pred_check
        %p240 = pneg %p239
      $region30: #{lstm_se_pl_dense_mtl_forward.10} parent=27 // pred_check_branch
        %242 = sbr.rel (%p240) target = $region32
      $region31: #{lstm_se_pl_dense_mtl_forward.10} parent=27 // pred_region
        %vm243 = vcmask 254976
        %244 = vst.msk [vmem:[#allocation2] sm:$0x3] %vm243, 0.0
        %245 = vst.msk [vmem:[#allocation3] sm:$0x3] %vm243, 0.0
      $region32: #{lstm_se_pl_dense_mtl_forward.10} parent=27 // pred_fallthru
        _
      %v246 = vld [vmem:[%s222] sm:$0xff]
      %v247 = vld [vmem:[%s222 + $0x8] sm:$0xff]
      %v248 = vld [vmem:[%s222 + $0x10] sm:$0xff]
      %v249 = vld [vmem:[%s222 + $0x18] sm:$0xff]
      %p250 = scmp.eq.s32.totalorder %s17, 0
      // Predicated region
      $region33: #{lstm_se_pl_dense_mtl_forward.10} parent=27 // pred_check
        %p251 = pneg %p250
      $region34: #{lstm_se_pl_dense_mtl_forward.10} parent=27 // pred_check_branch
        %253 = sbr.rel (%p251) target = $region36
      $region35: #{lstm_se_pl_dense_mtl_forward.10} parent=27 // pred_region
        %v254 = vld [vmem:[#allocation2] sm:$0x3]
        %v255 = vld [vmem:[#allocation3] sm:$0x3]
        %v256 = vld [vmem:[%s213] sm:$0x3]
        %vm257 = vcmask 261120
        %v259 = vsel %vm257, %v254, 0
        %261 = vmatprep.subr.mxu0 0.0
        %262 = vmatpush1.msra.mxu0 %v246
        %263 = vmatprep.subr.mxu0 0.0
        %264 = vmatpush1.msra.mxu0 %v247
        %265 = vmatprep.subr.mxu0 0.0
        %266 = vmatpush1.msra.mxu0 %v248
        %267 = vmatprep.subr.mxu0 0.0
        %268 = vmatpush1.msra.mxu0 %v249
        %269 = vmatprep.subr.mxu0 0.0
        %270 = vmatpush1.msra.mxu0 0.0
        %271 = vmatprep.subr.mxu0 0.0
        %272 = vmatpush1.msra.mxu0 0.0
        %273 = vmatprep.subr.mxu0 0.0
        %274 = vmatpush1.msra.mxu0 0.0
        %275 = vmatprep.subr.mxu0 0.0
        %276 = vmatpush1.msra.mxu0 0.0
        %277 = vmatprep.subr.mxu0 0.0
        %278 = vmatpush1.msra.mxu0 0.0
        %279 = vmatprep.subr.mxu0 0.0
        %280 = vmatpush1.msra.mxu0 0.0
        %281 = vmatprep.subr.mxu0 0.0
        %282 = vmatpush1.msra.mxu0 0.0
        %283 = vmatprep.subr.mxu0 0.0
        %284 = vmatpush1.msra.mxu0 0.0
        %285 = vmatprep.subr.mxu0 0.0
        %286 = vmatpush1.msra.mxu0 0.0
        %287 = vmatprep.subr.mxu0 0.0
        %288 = vmatpush1.msra.mxu0 0.0
        %289 = vmatprep.subr.mxu0 0.0
        %290 = vmatpush1.msra.mxu0 0.0
        %291 = vmatprep.subr.mxu0 0.0
        %292 = vmatpush1.msra.mxu0 0.0
        %293 = vmatprep.subr.mxu0 0.0
        %294 = vmatpush1.msra.mxu0 0.0
        %295 = vmatprep.subr.mxu0 0.0
        %296 = vmatpush1.msra.mxu0 0.0
        %297 = vmatprep.subr.mxu0 0.0
        %298 = vmatpush1.msra.mxu0 0.0
        %299 = vmatprep.subr.mxu0 0.0
        %300 = vmatpush1.msra.mxu0 0.0
        %301 = vmatprep.subr.mxu0 0.0
        %302 = vmatpush1.msra.mxu0 0.0
        %303 = vmatprep.subr.mxu0 0.0
        %304 = vmatpush1.msra.mxu0 0.0
        %305 = vmatprep.subr.mxu0 0.0
        %306 = vmatpush1.msra.mxu0 0.0
        %307 = vmatprep.subr.mxu0 0.0
        %308 = vmatpush1.msra.mxu0 0.0
        %309 = vmatprep.subr.mxu0 0.0
        %310 = vmatpush1.msra.mxu0 0.0
        %311 = vmatprep.subr.mxu0 0.0
        %312 = vmatpush1.msra.mxu0 0.0
        %313 = vmatprep.subr.mxu0 0.0
        %314 = vmatpush1.msra.mxu0 0.0
        %315 = vmatprep.subr.mxu0 0.0
        %316 = vmatpush1.msra.mxu0 0.0
        %317 = vmatprep.subr.mxu0 0.0
        %318 = vmatpush1.msra.mxu0 0.0
        %319 = vmatprep.subr.mxu0 0.0
        %320 = vmatpush1.msra.mxu0 0.0
        %321 = vmatprep.subr.mxu0 0.0
        %322 = vmatpush1.msra.mxu0 0.0
        %323 = vmatprep.subr.mxu0 0.0
        %324 = vmatpush1.msra.mxu0 0.0
        %325 = vmatprep.mubr.f32.mxu0 0.0
        %326 = vmatmul.mubr.f32.gmra.mrb[0].mxu0 %v259
        %v327 = vpop.f32.mrb[0].mxu0
        %v328 = vadd.f32 0.0, %v327
        %v329 = vpop.f32.mrb[0].mxu0
        %330 = vdwg.mxu0
        %v331 = vadd.f32 %v256, %v328
        %v332 = vxor.u32 %v331, 2147483648
        %v333 = vmul.f32 %v332, 1.442695
        %v334 = vpow.pop %v333
        %v335 = vadd.f32 %v334, 1.0
        %v336 = vrcp.pop %v335
        %v337 = vmul.f32 1.0, %v336
        %v338 = vtanh.pop %v331
        %340 = vrot.lane.b32.xlu0 %v255, 32
        %v341 = vpop.permute.xlu0 %340
        %v343 = vmul.f32 %v337, %v341
        %345 = vrot.lane.b32.xlu0 %v338, 64
        %v346 = vpop.permute.xlu0 %345
        %v348 = vmul.f32 %v337, %v346
        %350 = vrot.lane.b32.xlu0 %v348, 32
        %v351 = vpop.permute.xlu0 %350
        %v353 = vadd.f32 %v343, %v351
        %v354 = vtanh.pop %v353
        %356 = vrot.lane.b32.xlu0 %v354, 64
        %v357 = vpop.permute.xlu0 %356
        %v359 = vmul.f32 %v337, %v357
        %361 = vrot.lane.b32.xlu0 %v359, 32
        %v362 = vpop.permute.xlu0 %361
        %vm364 = vcmask 254976
        %365 = vst.msk [vmem:[%s234] sm:$0x3] %vm364, %v362
        %s366 = scalar_lea.vmem %s213, 2
        %v367 = vld [vmem:[%s366] sm:$0x3]
        %v368 = vsel %vm257, %v362, 0
        %370 = vmatprep.subr.mxu0 0.0
        %371 = vmatpush1.msra.mxu0 %v246
        %372 = vmatprep.subr.mxu0 0.0
        %373 = vmatpush1.msra.mxu0 %v247
        %374 = vmatprep.subr.mxu0 0.0
        %375 = vmatpush1.msra.mxu0 %v248
        %376 = vmatprep.subr.mxu0 0.0
        %377 = vmatpush1.msra.mxu0 %v249
        %378 = vmatprep.subr.mxu0 0.0
        %379 = vmatpush1.msra.mxu0 0.0
        %380 = vmatprep.subr.mxu0 0.0
        %381 = vmatpush1.msra.mxu0 0.0
        %382 = vmatprep.subr.mxu0 0.0
        %383 = vmatpush1.msra.mxu0 0.0
        %384 = vmatprep.subr.mxu0 0.0
        %385 = vmatpush1.msra.mxu0 0.0
        %386 = vmatprep.subr.mxu0 0.0
        %387 = vmatpush1.msra.mxu0 0.0
        %388 = vmatprep.subr.mxu0 0.0
        %389 = vmatpush1.msra.mxu0 0.0
        %390 = vmatprep.subr.mxu0 0.0
        %391 = vmatpush1.msra.mxu0 0.0
        %392 = vmatprep.subr.mxu0 0.0
        %393 = vmatpush1.msra.mxu0 0.0
        %394 = vmatprep.subr.mxu0 0.0
        %395 = vmatpush1.msra.mxu0 0.0
        %396 = vmatprep.subr.mxu0 0.0
        %397 = vmatpush1.msra.mxu0 0.0
        %398 = vmatprep.subr.mxu0 0.0
        %399 = vmatpush1.msra.mxu0 0.0
        %400 = vmatprep.subr.mxu0 0.0
        %401 = vmatpush1.msra.mxu0 0.0
        %402 = vmatprep.subr.mxu0 0.0
        %403 = vmatpush1.msra.mxu0 0.0
        %404 = vmatprep.subr.mxu0 0.0
        %405 = vmatpush1.msra.mxu0 0.0
        %406 = vmatprep.subr.mxu0 0.0
        %407 = vmatpush1.msra.mxu0 0.0
        %408 = vmatprep.subr.mxu0 0.0
        %409 = vmatpush1.msra.mxu0 0.0
        %410 = vmatprep.subr.mxu0 0.0
        %411 = vmatpush1.msra.mxu0 0.0
        %412 = vmatprep.subr.mxu0 0.0
        %413 = vmatpush1.msra.mxu0 0.0
        %414 = vmatprep.subr.mxu0 0.0
        %415 = vmatpush1.msra.mxu0 0.0
        %416 = vmatprep.subr.mxu0 0.0
        %417 = vmatpush1.msra.mxu0 0.0
        %418 = vmatprep.subr.mxu0 0.0
        %419 = vmatpush1.msra.mxu0 0.0
        %420 = vmatprep.subr.mxu0 0.0
        %421 = vmatpush1.msra.mxu0 0.0
        %422 = vmatprep.subr.mxu0 0.0
        %423 = vmatpush1.msra.mxu0 0.0
        %424 = vmatprep.subr.mxu0 0.0
        %425 = vmatpush1.msra.mxu0 0.0
        %426 = vmatprep.subr.mxu0 0.0
        %427 = vmatpush1.msra.mxu0 0.0
        %428 = vmatprep.subr.mxu0 0.0
        %429 = vmatpush1.msra.mxu0 0.0
        %430 = vmatprep.subr.mxu0 0.0
        %431 = vmatpush1.msra.mxu0 0.0
        %432 = vmatprep.subr.mxu0 0.0
        %433 = vmatpush1.msra.mxu0 0.0
        %434 = vmatprep.mubr.f32.mxu0 0.0
        %435 = vmatmul.mubr.f32.gmra.mrb[0].mxu0 %v368
        %v436 = vpop.f32.mrb[0].mxu0
        %v437 = vadd.f32 0.0, %v436
        %v438 = vpop.f32.mrb[0].mxu0
        %439 = vdwg.mxu0
        %v440 = vadd.f32 %v367, %v437
        %v441 = vxor.u32 %v440, 2147483648
        %v442 = vmul.f32 %v441, 1.442695
        %v443 = vpow.pop %v442
        %v444 = vadd.f32 %v443, 1.0
        %v445 = vrcp.pop %v444
        %v446 = vmul.f32 1.0, %v445
        %v447 = vtanh.pop %v440
        %v448 = vmul.f32 %v446, %v353
        %450 = vrot.lane.b32.xlu0 %v447, 64
        %v451 = vpop.permute.xlu0 %450
        %v453 = vmul.f32 %v446, %v451
        %455 = vrot.lane.b32.xlu0 %v453, 32
        %v456 = vpop.permute.xlu0 %455
        %v458 = vadd.f32 %v448, %v456
        %v459 = vtanh.pop %v458
        %461 = vrot.lane.b32.xlu0 %v459, 64
        %v462 = vpop.permute.xlu0 %461
        %v464 = vmul.f32 %v446, %v462
        %466 = vrot.lane.b32.xlu0 %v464, 32
        %v467 = vpop.permute.xlu0 %466
        %s469 = scalar_lea.vmem %s234, 2
        %470 = vst.msk [vmem:[%s469] sm:$0x3] %vm364, %v467
        %s471 = scalar_lea.vmem %s213, 4
        %v472 = vld [vmem:[%s471] sm:$0x3]
        %v473 = vsel %vm257, %v467, 0
        %475 = vmatprep.subr.mxu0 0.0
        %476 = vmatpush1.msra.mxu0 %v246
        %477 = vmatprep.subr.mxu0 0.0
        %478 = vmatpush1.msra.mxu0 %v247
        %479 = vmatprep.subr.mxu0 0.0
        %480 = vmatpush1.msra.mxu0 %v248
        %481 = vmatprep.subr.mxu0 0.0
        %482 = vmatpush1.msra.mxu0 %v249
        %483 = vmatprep.subr.mxu0 0.0
        %484 = vmatpush1.msra.mxu0 0.0
        %485 = vmatprep.subr.mxu0 0.0
        %486 = vmatpush1.msra.mxu0 0.0
        %487 = vmatprep.subr.mxu0 0.0
        %488 = vmatpush1.msra.mxu0 0.0
        %489 = vmatprep.subr.mxu0 0.0
        %490 = vmatpush1.msra.mxu0 0.0
        %491 = vmatprep.subr.mxu0 0.0
        %492 = vmatpush1.msra.mxu0 0.0
        %493 = vmatprep.subr.mxu0 0.0
        %494 = vmatpush1.msra.mxu0 0.0
        %495 = vmatprep.subr.mxu0 0.0
        %496 = vmatpush1.msra.mxu0 0.0
        %497 = vmatprep.subr.mxu0 0.0
        %498 = vmatpush1.msra.mxu0 0.0
        %499 = vmatprep.subr.mxu0 0.0
        %500 = vmatpush1.msra.mxu0 0.0
        %501 = vmatprep.subr.mxu0 0.0
        %502 = vmatpush1.msra.mxu0 0.0
        %503 = vmatprep.subr.mxu0 0.0
        %504 = vmatpush1.msra.mxu0 0.0
        %505 = vmatprep.subr.mxu0 0.0
        %506 = vmatpush1.msra.mxu0 0.0
        %507 = vmatprep.subr.mxu0 0.0
        %508 = vmatpush1.msra.mxu0 0.0
        %509 = vmatprep.subr.mxu0 0.0
        %510 = vmatpush1.msra.mxu0 0.0
        %511 = vmatprep.subr.mxu0 0.0
        %512 = vmatpush1.msra.mxu0 0.0
        %513 = vmatprep.subr.mxu0 0.0
        %514 = vmatpush1.msra.mxu0 0.0
        %515 = vmatprep.subr.mxu0 0.0
        %516 = vmatpush1.msra.mxu0 0.0
        %517 = vmatprep.subr.mxu0 0.0
        %518 = vmatpush1.msra.mxu0 0.0
        %519 = vmatprep.subr.mxu0 0.0
        %520 = vmatpush1.msra.mxu0 0.0
        %521 = vmatprep.subr.mxu0 0.0
        %522 = vmatpush1.msra.mxu0 0.0
        %523 = vmatprep.subr.mxu0 0.0
        %524 = vmatpush1.msra.mxu0 0.0
        %525 = vmatprep.subr.mxu0 0.0
        %526 = vmatpush1.msra.mxu0 0.0
        %527 = vmatprep.subr.mxu0 0.0
        %528 = vmatpush1.msra.mxu0 0.0
        %529 = vmatprep.subr.mxu0 0.0
        %530 = vmatpush1.msra.mxu0 0.0
        %531 = vmatprep.subr.mxu0 0.0
        %532 = vmatpush1.msra.mxu0 0.0
        %533 = vmatprep.subr.mxu0 0.0
        %534 = vmatpush1.msra.mxu0 0.0
        %535 = vmatprep.subr.mxu0 0.0
        %536 = vmatpush1.msra.mxu0 0.0
        %537 = vmatprep.subr.mxu0 0.0
        %538 = vmatpush1.msra.mxu0 0.0
        %539 = vmatprep.mubr.f32.mxu0 0.0
        %540 = vmatmul.mubr.f32.gmra.mrb[0].mxu0 %v473
        %v541 = vpop.f32.mrb[0].mxu0
        %v542 = vadd.f32 0.0, %v541
        %v543 = vpop.f32.mrb[0].mxu0
        %544 = vdwg.mxu0
        %v545 = vadd.f32 %v472, %v542
        %v546 = vxor.u32 %v545, 2147483648
        %v547 = vmul.f32 %v546, 1.442695
        %v548 = vpow.pop %v547
        %v549 = vadd.f32 %v548, 1.0
        %v550 = vrcp.pop %v549
        %v551 = vmul.f32 1.0, %v550
        %v552 = vtanh.pop %v545
        %v553 = vmul.f32 %v551, %v458
        %555 = vrot.lane.b32.xlu0 %v552, 64
        %v556 = vpop.permute.xlu0 %555
        %v558 = vmul.f32 %v551, %v556
        %560 = vrot.lane.b32.xlu0 %v558, 32
        %v561 = vpop.permute.xlu0 %560
        %v563 = vadd.f32 %v553, %v561
        %v564 = vtanh.pop %v563
        %566 = vrot.lane.b32.xlu0 %v564, 64
        %v567 = vpop.permute.xlu0 %566
        %v569 = vmul.f32 %v551, %v567
        %571 = vrot.lane.b32.xlu0 %v569, 32
        %v572 = vpop.permute.xlu0 %571
        %s574 = scalar_lea.vmem %s234, 4
        %575 = vst.msk [vmem:[%s574] sm:$0x3] %vm364, %v572
        %s576 = scalar_lea.vmem %s213, 6
        %v577 = vld [vmem:[%s576] sm:$0x3]
        %v578 = vsel %vm257, %v572, 0
        %580 = vmatprep.subr.mxu0 0.0
        %581 = vmatpush1.msra.mxu0 %v246
        %582 = vmatprep.subr.mxu0 0.0
        %583 = vmatpush1.msra.mxu0 %v247
        %584 = vmatprep.subr.mxu0 0.0
        %585 = vmatpush1.msra.mxu0 %v248
        %586 = vmatprep.subr.mxu0 0.0
        %587 = vmatpush1.msra.mxu0 %v249
        %588 = vmatprep.subr.mxu0 0.0
        %589 = vmatpush1.msra.mxu0 0.0
        %590 = vmatprep.subr.mxu0 0.0
        %591 = vmatpush1.msra.mxu0 0.0
        %592 = vmatprep.subr.mxu0 0.0
        %593 = vmatpush1.msra.mxu0 0.0
        %594 = vmatprep.subr.mxu0 0.0
        %595 = vmatpush1.msra.mxu0 0.0
        %596 = vmatprep.subr.mxu0 0.0
        %597 = vmatpush1.msra.mxu0 0.0
        %598 = vmatprep.subr.mxu0 0.0
        %599 = vmatpush1.msra.mxu0 0.0
        %600 = vmatprep.subr.mxu0 0.0
        %601 = vmatpush1.msra.mxu0 0.0
        %602 = vmatprep.subr.mxu0 0.0
        %603 = vmatpush1.msra.mxu0 0.0
        %604 = vmatprep.subr.mxu0 0.0
        %605 = vmatpush1.msra.mxu0 0.0
        %606 = vmatprep.subr.mxu0 0.0
        %607 = vmatpush1.msra.mxu0 0.0
        %608 = vmatprep.subr.mxu0 0.0
        %609 = vmatpush1.msra.mxu0 0.0
        %610 = vmatprep.subr.mxu0 0.0
        %611 = vmatpush1.msra.mxu0 0.0
        %612 = vmatprep.subr.mxu0 0.0
        %613 = vmatpush1.msra.mxu0 0.0
        %614 = vmatprep.subr.mxu0 0.0
        %615 = vmatpush1.msra.mxu0 0.0
        %616 = vmatprep.subr.mxu0 0.0
        %617 = vmatpush1.msra.mxu0 0.0
        %618 = vmatprep.subr.mxu0 0.0
        %619 = vmatpush1.msra.mxu0 0.0
        %620 = vmatprep.subr.mxu0 0.0
        %621 = vmatpush1.msra.mxu0 0.0
        %622 = vmatprep.subr.mxu0 0.0
        %623 = vmatpush1.msra.mxu0 0.0
        %624 = vmatprep.subr.mxu0 0.0
        %625 = vmatpush1.msra.mxu0 0.0
        %626 = vmatprep.subr.mxu0 0.0
        %627 = vmatpush1.msra.mxu0 0.0
        %628 = vmatprep.subr.mxu0 0.0
        %629 = vmatpush1.msra.mxu0 0.0
        %630 = vmatprep.subr.mxu0 0.0
        %631 = vmatpush1.msra.mxu0 0.0
        %632 = vmatprep.subr.mxu0 0.0
        %633 = vmatpush1.msra.mxu0 0.0
        %634 = vmatprep.subr.mxu0 0.0
        %635 = vmatpush1.msra.mxu0 0.0
        %636 = vmatprep.subr.mxu0 0.0
        %637 = vmatpush1.msra.mxu0 0.0
        %638 = vmatprep.subr.mxu0 0.0
        %639 = vmatpush1.msra.mxu0 0.0
        %640 = vmatprep.subr.mxu0 0.0
        %641 = vmatpush1.msra.mxu0 0.0
        %642 = vmatprep.subr.mxu0 0.0
        %643 = vmatpush1.msra.mxu0 0.0
        %644 = vmatprep.mubr.f32.mxu0 0.0
        %645 = vmatmul.mubr.f32.gmra.mrb[0].mxu0 %v578
        %v646 = vpop.f32.mrb[0].mxu0
        %v647 = vadd.f32 0.0, %v646
        %v648 = vpop.f32.mrb[0].mxu0
        %649 = vdwg.mxu0
        %v650 = vadd.f32 %v577, %v647
        %v651 = vxor.u32 %v650, 2147483648
        %v652 = vmul.f32 %v651, 1.442695
        %v653 = vpow.pop %v652
        %v654 = vadd.f32 %v653, 1.0
        %v655 = vrcp.pop %v654
        %v656 = vmul.f32 1.0, %v655
        %v657 = vtanh.pop %v650
        %v658 = vmul.f32 %v656, %v563
        %660 = vrot.lane.b32.xlu0 %v657, 64
        %v661 = vpop.permute.xlu0 %660
        %v663 = vmul.f32 %v656, %v661
        %665 = vrot.lane.b32.xlu0 %v663, 32
        %v666 = vpop.permute.xlu0 %665
        %v668 = vadd.f32 %v658, %v666
        %v669 = vtanh.pop %v668
        %671 = vrot.lane.b32.xlu0 %v669, 64
        %v672 = vpop.permute.xlu0 %671
        %v674 = vmul.f32 %v656, %v672
        %676 = vrot.lane.b32.xlu0 %v674, 32
        %v677 = vpop.permute.xlu0 %676
        %s679 = scalar_lea.vmem %s234, 6
        %680 = vst.msk [vmem:[%s679] sm:$0x3] %vm364, %v677
        %s681 = scalar_lea.vmem %s213, 8
        %v682 = vld [vmem:[%s681] sm:$0x3]
        %v683 = vsel %vm257, %v677, 0
        %685 = vmatprep.subr.mxu0 0.0
        %686 = vmatpush1.msra.mxu0 %v246
        %687 = vmatprep.subr.mxu0 0.0
        %688 = vmatpush1.msra.mxu0 %v247
        %689 = vmatprep.subr.mxu0 0.0
        %690 = vmatpush1.msra.mxu0 %v248
        %691 = vmatprep.subr.mxu0 0.0
        %692 = vmatpush1.msra.mxu0 %v249
        %693 = vmatprep.subr.mxu0 0.0
        %694 = vmatpush1.msra.mxu0 0.0
        %695 = vmatprep.subr.mxu0 0.0
        %696 = vmatpush1.msra.mxu0 0.0
        %697 = vmatprep.subr.mxu0 0.0
        %698 = vmatpush1.msra.mxu0 0.0
        %699 = vmatprep.subr.mxu0 0.0
        %700 = vmatpush1.msra.mxu0 0.0
        %701 = vmatprep.subr.mxu0 0.0
        %702 = vmatpush1.msra.mxu0 0.0
        %703 = vmatprep.subr.mxu0 0.0
        %704 = vmatpush1.msra.mxu0 0.0
        %705 = vmatprep.subr.mxu0 0.0
        %706 = vmatpush1.msra.mxu0 0.0
        %707 = vmatprep.subr.mxu0 0.0
        %708 = vmatpush1.msra.mxu0 0.0
        %709 = vmatprep.subr.mxu0 0.0
        %710 = vmatpush1.msra.mxu0 0.0
        %711 = vmatprep.subr.mxu0 0.0
        %712 = vmatpush1.msra.mxu0 0.0
        %713 = vmatprep.subr.mxu0 0.0
        %714 = vmatpush1.msra.mxu0 0.0
        %715 = vmatprep.subr.mxu0 0.0
        %716 = vmatpush1.msra.mxu0 0.0
        %717 = vmatprep.subr.mxu0 0.0
        %718 = vmatpush1.msra.mxu0 0.0
        %719 = vmatprep.subr.mxu0 0.0
        %720 = vmatpush1.msra.mxu0 0.0
        %721 = vmatprep.subr.mxu0 0.0
        %722 = vmatpush1.msra.mxu0 0.0
        %723 = vmatprep.subr.mxu0 0.0
        %724 = vmatpush1.msra.mxu0 0.0
        %725 = vmatprep.subr.mxu0 0.0
        %726 = vmatpush1.msra.mxu0 0.0
        %727 = vmatprep.subr.mxu0 0.0
        %728 = vmatpush1.msra.mxu0 0.0
        %729 = vmatprep.subr.mxu0 0.0
        %730 = vmatpush1.msra.mxu0 0.0
        %731 = vmatprep.subr.mxu0 0.0
        %732 = vmatpush1.msra.mxu0 0.0
        %733 = vmatprep.subr.mxu0 0.0
        %734 = vmatpush1.msra.mxu0 0.0
        %735 = vmatprep.subr.mxu0 0.0
        %736 = vmatpush1.msra.mxu0 0.0
        %737 = vmatprep.subr.mxu0 0.0
        %738 = vmatpush1.msra.mxu0 0.0
        %739 = vmatprep.subr.mxu0 0.0
        %740 = vmatpush1.msra.mxu0 0.0
        %741 = vmatprep.subr.mxu0 0.0
        %742 = vmatpush1.msra.mxu0 0.0
        %743 = vmatprep.subr.mxu0 0.0
        %744 = vmatpush1.msra.mxu0 0.0
        %745 = vmatprep.subr.mxu0 0.0
        %746 = vmatpush1.msra.mxu0 0.0
        %747 = vmatprep.subr.mxu0 0.0
        %748 = vmatpush1.msra.mxu0 0.0
        %749 = vmatprep.mubr.f32.mxu0 0.0
        %750 = vmatmul.mubr.f32.gmra.mrb[0].mxu0 %v683
        %v751 = vpop.f32.mrb[0].mxu0
        %v752 = vadd.f32 0.0, %v751
        %v753 = vpop.f32.mrb[0].mxu0
        %754 = vdwg.mxu0
        %v755 = vadd.f32 %v682, %v752
        %v756 = vxor.u32 %v755, 2147483648
        %v757 = vmul.f32 %v756, 1.442695
        %v758 = vpow.pop %v757
        %v759 = vadd.f32 %v758, 1.0
        %v760 = vrcp.pop %v759
        %v761 = vmul.f32 1.0, %v760
        %v762 = vtanh.pop %v755
        %v763 = vmul.f32 %v761, %v668
        %765 = vrot.lane.b32.xlu0 %v762, 64
        %v766 = vpop.permute.xlu0 %765
        %v768 = vmul.f32 %v761, %v766
        %770 = vrot.lane.b32.xlu0 %v768, 32
        %v771 = vpop.permute.xlu0 %770
        %v773 = vadd.f32 %v763, %v771
        %v774 = vtanh.pop %v773
        %776 = vrot.lane.b32.xlu0 %v774, 64
        %v777 = vpop.permute.xlu0 %776
        %v779 = vmul.f32 %v761, %v777
        %781 = vrot.lane.b32.xlu0 %v779, 32
        %v782 = vpop.permute.xlu0 %781
        %s784 = scalar_lea.vmem %s234, 8
        %785 = vst.msk [vmem:[%s784] sm:$0x3] %vm364, %v782
        %s786 = scalar_lea.vmem %s213, 10
        %v787 = vld [vmem:[%s786] sm:$0x3]
        %v788 = vsel %vm257, %v782, 0
        %790 = vmatprep.subr.mxu0 0.0
        %791 = vmatpush1.msra.mxu0 %v246
        %792 = vmatprep.subr.mxu0 0.0
        %793 = vmatpush1.msra.mxu0 %v247
        %794 = vmatprep.subr.mxu0 0.0
        %795 = vmatpush1.msra.mxu0 %v248
        %796 = vmatprep.subr.mxu0 0.0
        %797 = vmatpush1.msra.mxu0 %v249
        %798 = vmatprep.subr.mxu0 0.0
        %799 = vmatpush1.msra.mxu0 0.0
        %800 = vmatprep.subr.mxu0 0.0
        %801 = vmatpush1.msra.mxu0 0.0
        %802 = vmatprep.subr.mxu0 0.0
        %803 = vmatpush1.msra.mxu0 0.0
        %804 = vmatprep.subr.mxu0 0.0
        %805 = vmatpush1.msra.mxu0 0.0
        %806 = vmatprep.subr.mxu0 0.0
        %807 = vmatpush1.msra.mxu0 0.0
        %808 = vmatprep.subr.mxu0 0.0
        %809 = vmatpush1.msra.mxu0 0.0
        %810 = vmatprep.subr.mxu0 0.0
        %811 = vmatpush1.msra.mxu0 0.0
        %812 = vmatprep.subr.mxu0 0.0
        %813 = vmatpush1.msra.mxu0 0.0
        %814 = vmatprep.subr.mxu0 0.0
        %815 = vmatpush1.msra.mxu0 0.0
        %816 = vmatprep.subr.mxu0 0.0
        %817 = vmatpush1.msra.mxu0 0.0
        %818 = vmatprep.subr.mxu0 0.0
        %819 = vmatpush1.msra.mxu0 0.0
        %820 = vmatprep.subr.mxu0 0.0
        %821 = vmatpush1.msra.mxu0 0.0
        %822 = vmatprep.subr.mxu0 0.0
        %823 = vmatpush1.msra.mxu0 0.0
        %824 = vmatprep.subr.mxu0 0.0
        %825 = vmatpush1.msra.mxu0 0.0
        %826 = vmatprep.subr.mxu0 0.0
        %827 = vmatpush1.msra.mxu0 0.0
        %828 = vmatprep.subr.mxu0 0.0
        %829 = vmatpush1.msra.mxu0 0.0
        %830 = vmatprep.subr.mxu0 0.0
        %831 = vmatpush1.msra.mxu0 0.0
        %832 = vmatprep.subr.mxu0 0.0
        %833 = vmatpush1.msra.mxu0 0.0
        %834 = vmatprep.subr.mxu0 0.0
        %835 = vmatpush1.msra.mxu0 0.0
        %836 = vmatprep.subr.mxu0 0.0
        %837 = vmatpush1.msra.mxu0 0.0
        %838 = vmatprep.subr.mxu0 0.0
        %839 = vmatpush1.msra.mxu0 0.0
        %840 = vmatprep.subr.mxu0 0.0
        %841 = vmatpush1.msra.mxu0 0.0
        %842 = vmatprep.subr.mxu0 0.0
        %843 = vmatpush1.msra.mxu0 0.0
        %844 = vmatprep.subr.mxu0 0.0
        %845 = vmatpush1.msra.mxu0 0.0
        %846 = vmatprep.subr.mxu0 0.0
        %847 = vmatpush1.msra.mxu0 0.0
        %848 = vmatprep.subr.mxu0 0.0
        %849 = vmatpush1.msra.mxu0 0.0
        %850 = vmatprep.subr.mxu0 0.0
        %851 = vmatpush1.msra.mxu0 0.0
        %852 = vmatprep.subr.mxu0 0.0
        %853 = vmatpush1.msra.mxu0 0.0
        %854 = vmatprep.mubr.f32.mxu0 0.0
        %855 = vmatmul.mubr.f32.gmra.mrb[0].mxu0 %v788
        %v856 = vpop.f32.mrb[0].mxu0
        %v857 = vadd.f32 0.0, %v856
        %v858 = vpop.f32.mrb[0].mxu0
        %859 = vdwg.mxu0
        %v860 = vadd.f32 %v787, %v857
        %v861 = vxor.u32 %v860, 2147483648
        %v862 = vmul.f32 %v861, 1.442695
        %v863 = vpow.pop %v862
        %v864 = vadd.f32 %v863, 1.0
        %v865 = vrcp.pop %v864
        %v866 = vmul.f32 1.0, %v865
        %v867 = vtanh.pop %v860
        %v868 = vmul.f32 %v866, %v773
        %870 = vrot.lane.b32.xlu0 %v867, 64
        %v871 = vpop.permute.xlu0 %870
        %v873 = vmul.f32 %v866, %v871
        %875 = vrot.lane.b32.xlu0 %v873, 32
        %v876 = vpop.permute.xlu0 %875
        %v878 = vadd.f32 %v868, %v876
        %v879 = vtanh.pop %v878
        %881 = vrot.lane.b32.xlu0 %v879, 64
        %v882 = vpop.permute.xlu0 %881
        %v884 = vmul.f32 %v866, %v882
        %886 = vrot.lane.b32.xlu0 %v884, 32
        %v887 = vpop.permute.xlu0 %886
        %s889 = scalar_lea.vmem %s234, 10
        %890 = vst.msk [vmem:[%s889] sm:$0x3] %vm364, %v887
        %s891 = scalar_lea.vmem %s213, 12
        %v892 = vld [vmem:[%s891] sm:$0x3]
        %v893 = vsel %vm257, %v887, 0
        %895 = vmatprep.subr.mxu0 0.0
        %896 = vmatpush1.msra.mxu0 %v246
        %897 = vmatprep.subr.mxu0 0.0
        %898 = vmatpush1.msra.mxu0 %v247
        %899 = vmatprep.subr.mxu0 0.0
        %900 = vmatpush1.msra.mxu0 %v248
        %901 = vmatprep.subr.mxu0 0.0
        %902 = vmatpush1.msra.mxu0 %v249
        %903 = vmatprep.subr.mxu0 0.0
        %904 = vmatpush1.msra.mxu0 0.0
        %905 = vmatprep.subr.mxu0 0.0
        %906 = vmatpush1.msra.mxu0 0.0
        %907 = vmatprep.subr.mxu0 0.0
        %908 = vmatpush1.msra.mxu0 0.0
        %909 = vmatprep.subr.mxu0 0.0
        %910 = vmatpush1.msra.mxu0 0.0
        %911 = vmatprep.subr.mxu0 0.0
        %912 = vmatpush1.msra.mxu0 0.0
        %913 = vmatprep.subr.mxu0 0.0
        %914 = vmatpush1.msra.mxu0 0.0
        %915 = vmatprep.subr.mxu0 0.0
        %916 = vmatpush1.msra.mxu0 0.0
        %917 = vmatprep.subr.mxu0 0.0
        %918 = vmatpush1.msra.mxu0 0.0
        %919 = vmatprep.subr.mxu0 0.0
        %920 = vmatpush1.msra.mxu0 0.0
        %921 = vmatprep.subr.mxu0 0.0
        %922 = vmatpush1.msra.mxu0 0.0
        %923 = vmatprep.subr.mxu0 0.0
        %924 = vmatpush1.msra.mxu0 0.0
        %925 = vmatprep.subr.mxu0 0.0
        %926 = vmatpush1.msra.mxu0 0.0
        %927 = vmatprep.subr.mxu0 0.0
        %928 = vmatpush1.msra.mxu0 0.0
        %929 = vmatprep.subr.mxu0 0.0
        %930 = vmatpush1.msra.mxu0 0.0
        %931 = vmatprep.subr.mxu0 0.0
        %932 = vmatpush1.msra.mxu0 0.0
        %933 = vmatprep.subr.mxu0 0.0
        %934 = vmatpush1.msra.mxu0 0.0
        %935 = vmatprep.subr.mxu0 0.0
        %936 = vmatpush1.msra.mxu0 0.0
        %937 = vmatprep.subr.mxu0 0.0
        %938 = vmatpush1.msra.mxu0 0.0
        %939 = vmatprep.subr.mxu0 0.0
        %940 = vmatpush1.msra.mxu0 0.0
        %941 = vmatprep.subr.mxu0 0.0
        %942 = vmatpush1.msra.mxu0 0.0
        %943 = vmatprep.subr.mxu0 0.0
        %944 = vmatpush1.msra.mxu0 0.0
        %945 = vmatprep.subr.mxu0 0.0
        %946 = vmatpush1.msra.mxu0 0.0
        %947 = vmatprep.subr.mxu0 0.0
        %948 = vmatpush1.msra.mxu0 0.0
        %949 = vmatprep.subr.mxu0 0.0
        %950 = vmatpush1.msra.mxu0 0.0
        %951 = vmatprep.subr.mxu0 0.0
        %952 = vmatpush1.msra.mxu0 0.0
        %953 = vmatprep.subr.mxu0 0.0
        %954 = vmatpush1.msra.mxu0 0.0
        %955 = vmatprep.subr.mxu0 0.0
        %956 = vmatpush1.msra.mxu0 0.0
        %957 = vmatprep.subr.mxu0 0.0
        %958 = vmatpush1.msra.mxu0 0.0
        %959 = vmatprep.mubr.f32.mxu0 0.0
        %960 = vmatmul.mubr.f32.gmra.mrb[0].mxu0 %v893
        %v961 = vpop.f32.mrb[0].mxu0
        %v962 = vadd.f32 0.0, %v961
        %v963 = vpop.f32.mrb[0].mxu0
        %964 = vdwg.mxu0
        %v965 = vadd.f32 %v892, %v962
        %v966 = vxor.u32 %v965, 2147483648
        %v967 = vmul.f32 %v966, 1.442695
        %v968 = vpow.pop %v967
        %v969 = vadd.f32 %v968, 1.0
        %v970 = vrcp.pop %v969
        %v971 = vmul.f32 1.0, %v970
        %v972 = vtanh.pop %v965
        %v973 = vmul.f32 %v971, %v878
        %975 = vrot.lane.b32.xlu0 %v972, 64
        %v976 = vpop.permute.xlu0 %975
        %v978 = vmul.f32 %v971, %v976
        %980 = vrot.lane.b32.xlu0 %v978, 32
        %v981 = vpop.permute.xlu0 %980
        %v983 = vadd.f32 %v973, %v981
        %v984 = vtanh.pop %v983
        %986 = vrot.lane.b32.xlu0 %v984, 64
        %v987 = vpop.permute.xlu0 %986
        %v989 = vmul.f32 %v971, %v987
        %991 = vrot.lane.b32.xlu0 %v989, 32
        %v992 = vpop.permute.xlu0 %991
        %s994 = scalar_lea.vmem %s234, 12
        %995 = vst.msk [vmem:[%s994] sm:$0x3] %vm364, %v992
        %s996 = scalar_lea.vmem %s213, 14
        %v997 = vld [vmem:[%s996] sm:$0x3]
        %v998 = vsel %vm257, %v992, 0
        %1000 = vmatprep.subr.mxu0 0.0
        %1001 = vmatpush1.msra.mxu0 %v246
        %1002 = vmatprep.subr.mxu0 0.0
        %1003 = vmatpush1.msra.mxu0 %v247
        %1004 = vmatprep.subr.mxu0 0.0
        %1005 = vmatpush1.msra.mxu0 %v248
        %1006 = vmatprep.subr.mxu0 0.0
        %1007 = vmatpush1.msra.mxu0 %v249
        %1008 = vmatprep.subr.mxu0 0.0
        %1009 = vmatpush1.msra.mxu0 0.0
        %1010 = vmatprep.subr.mxu0 0.0
        %1011 = vmatpush1.msra.mxu0 0.0
        %1012 = vmatprep.subr.mxu0 0.0
        %1013 = vmatpush1.msra.mxu0 0.0
        %1014 = vmatprep.subr.mxu0 0.0
        %1015 = vmatpush1.msra.mxu0 0.0
        %1016 = vmatprep.subr.mxu0 0.0
        %1017 = vmatpush1.msra.mxu0 0.0
        %1018 = vmatprep.subr.mxu0 0.0
        %1019 = vmatpush1.msra.mxu0 0.0
        %1020 = vmatprep.subr.mxu0 0.0
        %1021 = vmatpush1.msra.mxu0 0.0
        %1022 = vmatprep.subr.mxu0 0.0
        %1023 = vmatpush1.msra.mxu0 0.0
        %1024 = vmatprep.subr.mxu0 0.0
        %1025 = vmatpush1.msra.mxu0 0.0
        %1026 = vmatprep.subr.mxu0 0.0
        %1027 = vmatpush1.msra.mxu0 0.0
        %1028 = vmatprep.subr.mxu0 0.0
        %1029 = vmatpush1.msra.mxu0 0.0
        %1030 = vmatprep.subr.mxu0 0.0
        %1031 = vmatpush1.msra.mxu0 0.0
        %1032 = vmatprep.subr.mxu0 0.0
        %1033 = vmatpush1.msra.mxu0 0.0
        %1034 = vmatprep.subr.mxu0 0.0
        %1035 = vmatpush1.msra.mxu0 0.0
        %1036 = vmatprep.subr.mxu0 0.0
        %1037 = vmatpush1.msra.mxu0 0.0
        %1038 = vmatprep.subr.mxu0 0.0
        %1039 = vmatpush1.msra.mxu0 0.0
        %1040 = vmatprep.subr.mxu0 0.0
        %1041 = vmatpush1.msra.mxu0 0.0
        %1042 = vmatprep.subr.mxu0 0.0
        %1043 = vmatpush1.msra.mxu0 0.0
        %1044 = vmatprep.subr.mxu0 0.0
        %1045 = vmatpush1.msra.mxu0 0.0
        %1046 = vmatprep.subr.mxu0 0.0
        %1047 = vmatpush1.msra.mxu0 0.0
        %1048 = vmatprep.subr.mxu0 0.0
        %1049 = vmatpush1.msra.mxu0 0.0
        %1050 = vmatprep.subr.mxu0 0.0
        %1051 = vmatpush1.msra.mxu0 0.0
        %1052 = vmatprep.subr.mxu0 0.0
        %1053 = vmatpush1.msra.mxu0 0.0
        %1054 = vmatprep.subr.mxu0 0.0
        %1055 = vmatpush1.msra.mxu0 0.0
        %1056 = vmatprep.subr.mxu0 0.0
        %1057 = vmatpush1.msra.mxu0 0.0
        %1058 = vmatprep.subr.mxu0 0.0
        %1059 = vmatpush1.msra.mxu0 0.0
        %1060 = vmatprep.subr.mxu0 0.0
        %1061 = vmatpush1.msra.mxu0 0.0
        %1062 = vmatprep.subr.mxu0 0.0
        %1063 = vmatpush1.msra.mxu0 0.0
        %1064 = vmatprep.mubr.f32.mxu0 0.0
        %1065 = vmatmul.mubr.f32.gmra.mrb[0].mxu0 %v998
        %v1066 = vpop.f32.mrb[0].mxu0
        %v1067 = vadd.f32 0.0, %v1066
        %v1068 = vpop.f32.mrb[0].mxu0
        %1069 = vdwg.mxu0
        %v1070 = vadd.f32 %v997, %v1067
        %v1071 = vxor.u32 %v1070, 2147483648
        %v1072 = vmul.f32 %v1071, 1.442695
        %v1073 = vpow.pop %v1072
        %v1074 = vadd.f32 %v1073, 1.0
        %v1075 = vrcp.pop %v1074
        %v1076 = vmul.f32 1.0, %v1075
        %v1077 = vtanh.pop %v1070
        %v1078 = vmul.f32 %v1076, %v983
        %1080 = vrot.lane.b32.xlu0 %v1077, 64
        %v1081 = vpop.permute.xlu0 %1080
        %v1083 = vmul.f32 %v1076, %v1081
        %1085 = vrot.lane.b32.xlu0 %v1083, 32
        %v1086 = vpop.permute.xlu0 %1085
        %v1088 = vadd.f32 %v1078, %v1086
        %v1089 = vtanh.pop %v1088
        %1091 = vrot.lane.b32.xlu0 %v1089, 64
        %v1092 = vpop.permute.xlu0 %1091
        %v1094 = vmul.f32 %v1076, %v1092
        %1096 = vrot.lane.b32.xlu0 %v1094, 32
        %v1097 = vpop.permute.xlu0 %1096
        %s1099 = scalar_lea.vmem %s234, 14
        %1100 = vst.msk [vmem:[%s1099] sm:$0x3] %vm364, %v1097
        %1101 = vst.msk [vmem:[#allocation2] sm:$0x3] %vm364, %v1097
        %1103 = vrot.lane.b32.xlu0 %v1088, 96
        %v1104 = vpop.permute.xlu0 %1103
        %1106 = vst.msk [vmem:[#allocation3] sm:$0x3] %vm364, %v1104
      $region36: #{lstm_se_pl_dense_mtl_forward.10} parent=27 // pred_fallthru
        _
      %p1107 = scmp.eq.s32.totalorder %s17, 1
      // Predicated region
      $region37: #{lstm_se_pl_dense_mtl_forward.10} parent=27 // pred_check
        %p1108 = pneg %p1107
      $region38: #{lstm_se_pl_dense_mtl_forward.10} parent=27 // pred_check_branch
        %1110 = sbr.rel (%p1108) target = $region40
      $region39: #{lstm_se_pl_dense_mtl_forward.10} parent=27 // pred_region
        %v1111 = vld [vmem:[#allocation2] sm:$0x3]
        %v1112 = vld [vmem:[#allocation3] sm:$0x3]
        %s1113 = scalar_lea.vmem %s213, 14
        %v1114 = vld [vmem:[%s1113] sm:$0x3]
        %vm1115 = vcmask 261120
        %v1117 = vsel %vm1115, %v1111, 0
        %1119 = vmatprep.subr.mxu0 0.0
        %1120 = vmatpush1.msra.mxu0 %v246
        %1121 = vmatprep.subr.mxu0 0.0
        %1122 = vmatpush1.msra.mxu0 %v247
        %1123 = vmatprep.subr.mxu0 0.0
        %1124 = vmatpush1.msra.mxu0 %v248
        %1125 = vmatprep.subr.mxu0 0.0
        %1126 = vmatpush1.msra.mxu0 %v249
        %1127 = vmatprep.subr.mxu0 0.0
        %1128 = vmatpush1.msra.mxu0 0.0
        %1129 = vmatprep.subr.mxu0 0.0
        %1130 = vmatpush1.msra.mxu0 0.0
        %1131 = vmatprep.subr.mxu0 0.0
        %1132 = vmatpush1.msra.mxu0 0.0
        %1133 = vmatprep.subr.mxu0 0.0
        %1134 = vmatpush1.msra.mxu0 0.0
        %1135 = vmatprep.subr.mxu0 0.0
        %1136 = vmatpush1.msra.mxu0 0.0
        %1137 = vmatprep.subr.mxu0 0.0
        %1138 = vmatpush1.msra.mxu0 0.0
        %1139 = vmatprep.subr.mxu0 0.0
        %1140 = vmatpush1.msra.mxu0 0.0
        %1141 = vmatprep.subr.mxu0 0.0
        %1142 = vmatpush1.msra.mxu0 0.0
        %1143 = vmatprep.subr.mxu0 0.0
        %1144 = vmatpush1.msra.mxu0 0.0
        %1145 = vmatprep.subr.mxu0 0.0
        %1146 = vmatpush1.msra.mxu0 0.0
        %1147 = vmatprep.subr.mxu0 0.0
        %1148 = vmatpush1.msra.mxu0 0.0
        %1149 = vmatprep.subr.mxu0 0.0
        %1150 = vmatpush1.msra.mxu0 0.0
        %1151 = vmatprep.subr.mxu0 0.0
        %1152 = vmatpush1.msra.mxu0 0.0
        %1153 = vmatprep.subr.mxu0 0.0
        %1154 = vmatpush1.msra.mxu0 0.0
        %1155 = vmatprep.subr.mxu0 0.0
        %1156 = vmatpush1.msra.mxu0 0.0
        %1157 = vmatprep.subr.mxu0 0.0
        %1158 = vmatpush1.msra.mxu0 0.0
        %1159 = vmatprep.subr.mxu0 0.0
        %1160 = vmatpush1.msra.mxu0 0.0
        %1161 = vmatprep.subr.mxu0 0.0
        %1162 = vmatpush1.msra.mxu0 0.0
        %1163 = vmatprep.subr.mxu0 0.0
        %1164 = vmatpush1.msra.mxu0 0.0
        %1165 = vmatprep.subr.mxu0 0.0
        %1166 = vmatpush1.msra.mxu0 0.0
        %1167 = vmatprep.subr.mxu0 0.0
        %1168 = vmatpush1.msra.mxu0 0.0
        %1169 = vmatprep.subr.mxu0 0.0
        %1170 = vmatpush1.msra.mxu0 0.0
        %1171 = vmatprep.subr.mxu0 0.0
        %1172 = vmatpush1.msra.mxu0 0.0
        %1173 = vmatprep.subr.mxu0 0.0
        %1174 = vmatpush1.msra.mxu0 0.0
        %1175 = vmatprep.subr.mxu0 0.0
        %1176 = vmatpush1.msra.mxu0 0.0
        %1177 = vmatprep.subr.mxu0 0.0
        %1178 = vmatpush1.msra.mxu0 0.0
        %1179 = vmatprep.subr.mxu0 0.0
        %1180 = vmatpush1.msra.mxu0 0.0
        %1181 = vmatprep.subr.mxu0 0.0
        %1182 = vmatpush1.msra.mxu0 0.0
        %1183 = vmatprep.mubr.f32.mxu0 0.0
        %1184 = vmatmul.mubr.f32.gmra.mrb[0].mxu0 %v1117
        %v1185 = vpop.f32.mrb[0].mxu0
        %v1186 = vadd.f32 0.0, %v1185
        %v1187 = vpop.f32.mrb[0].mxu0
        %1188 = vdwg.mxu0
        %v1189 = vadd.f32 %v1114, %v1186
        %v1190 = vxor.u32 %v1189, 2147483648
        %v1191 = vmul.f32 %v1190, 1.442695
        %v1192 = vpow.pop %v1191
        %v1193 = vadd.f32 %v1192, 1.0
        %v1194 = vrcp.pop %v1193
        %v1195 = vmul.f32 1.0, %v1194
        %v1196 = vtanh.pop %v1189
        %1198 = vrot.lane.b32.xlu0 %v1112, 32
        %v1199 = vpop.permute.xlu0 %1198
        %v1201 = vmul.f32 %v1195, %v1199
        %1203 = vrot.lane.b32.xlu0 %v1196, 64
        %v1204 = vpop.permute.xlu0 %1203
        %v1206 = vmul.f32 %v1195, %v1204
        %1208 = vrot.lane.b32.xlu0 %v1206, 32
        %v1209 = vpop.permute.xlu0 %1208
        %v1211 = vadd.f32 %v1201, %v1209
        %v1212 = vtanh.pop %v1211
        %1214 = vrot.lane.b32.xlu0 %v1212, 64
        %v1215 = vpop.permute.xlu0 %1214
        %v1217 = vmul.f32 %v1195, %v1215
        %1219 = vrot.lane.b32.xlu0 %v1217, 32
        %v1220 = vpop.permute.xlu0 %1219
        %s1222 = scalar_lea.vmem %s234, 14
        %vm1223 = vcmask 254976
        %1224 = vst.msk [vmem:[%s1222] sm:$0x3] %vm1223, %v1220
        %s1225 = scalar_lea.vmem %s213, 12
        %v1226 = vld [vmem:[%s1225] sm:$0x3]
        %v1227 = vsel %vm1115, %v1220, 0
        %1229 = vmatprep.subr.mxu0 0.0
        %1230 = vmatpush1.msra.mxu0 %v246
        %1231 = vmatprep.subr.mxu0 0.0
        %1232 = vmatpush1.msra.mxu0 %v247
        %1233 = vmatprep.subr.mxu0 0.0
        %1234 = vmatpush1.msra.mxu0 %v248
        %1235 = vmatprep.subr.mxu0 0.0
        %1236 = vmatpush1.msra.mxu0 %v249
        %1237 = vmatprep.subr.mxu0 0.0
        %1238 = vmatpush1.msra.mxu0 0.0
        %1239 = vmatprep.subr.mxu0 0.0
        %1240 = vmatpush1.msra.mxu0 0.0
        %1241 = vmatprep.subr.mxu0 0.0
        %1242 = vmatpush1.msra.mxu0 0.0
        %1243 = vmatprep.subr.mxu0 0.0
        %1244 = vmatpush1.msra.mxu0 0.0
        %1245 = vmatprep.subr.mxu0 0.0
        %1246 = vmatpush1.msra.mxu0 0.0
        %1247 = vmatprep.subr.mxu0 0.0
        %1248 = vmatpush1.msra.mxu0 0.0
        %1249 = vmatprep.subr.mxu0 0.0
        %1250 = vmatpush1.msra.mxu0 0.0
        %1251 = vmatprep.subr.mxu0 0.0
        %1252 = vmatpush1.msra.mxu0 0.0
        %1253 = vmatprep.subr.mxu0 0.0
        %1254 = vmatpush1.msra.mxu0 0.0
        %1255 = vmatprep.subr.mxu0 0.0
        %1256 = vmatpush1.msra.mxu0 0.0
        %1257 = vmatprep.subr.mxu0 0.0
        %1258 = vmatpush1.msra.mxu0 0.0
        %1259 = vmatprep.subr.mxu0 0.0
        %1260 = vmatpush1.msra.mxu0 0.0
        %1261 = vmatprep.subr.mxu0 0.0
        %1262 = vmatpush1.msra.mxu0 0.0
        %1263 = vmatprep.subr.mxu0 0.0
        %1264 = vmatpush1.msra.mxu0 0.0
        %1265 = vmatprep.subr.mxu0 0.0
        %1266 = vmatpush1.msra.mxu0 0.0
        %1267 = vmatprep.subr.mxu0 0.0
        %1268 = vmatpush1.msra.mxu0 0.0
        %1269 = vmatprep.subr.mxu0 0.0
        %1270 = vmatpush1.msra.mxu0 0.0
        %1271 = vmatprep.subr.mxu0 0.0
        %1272 = vmatpush1.msra.mxu0 0.0
        %1273 = vmatprep.subr.mxu0 0.0
        %1274 = vmatpush1.msra.mxu0 0.0
        %1275 = vmatprep.subr.mxu0 0.0
        %1276 = vmatpush1.msra.mxu0 0.0
        %1277 = vmatprep.subr.mxu0 0.0
        %1278 = vmatpush1.msra.mxu0 0.0
        %1279 = vmatprep.subr.mxu0 0.0
        %1280 = vmatpush1.msra.mxu0 0.0
        %1281 = vmatprep.subr.mxu0 0.0
        %1282 = vmatpush1.msra.mxu0 0.0
        %1283 = vmatprep.subr.mxu0 0.0
        %1284 = vmatpush1.msra.mxu0 0.0
        %1285 = vmatprep.subr.mxu0 0.0
        %1286 = vmatpush1.msra.mxu0 0.0
        %1287 = vmatprep.subr.mxu0 0.0
        %1288 = vmatpush1.msra.mxu0 0.0
        %1289 = vmatprep.subr.mxu0 0.0
        %1290 = vmatpush1.msra.mxu0 0.0
        %1291 = vmatprep.subr.mxu0 0.0
        %1292 = vmatpush1.msra.mxu0 0.0
        %1293 = vmatprep.mubr.f32.mxu0 0.0
        %1294 = vmatmul.mubr.f32.gmra.mrb[0].mxu0 %v1227
        %v1295 = vpop.f32.mrb[0].mxu0
        %v1296 = vadd.f32 0.0, %v1295
        %v1297 = vpop.f32.mrb[0].mxu0
        %1298 = vdwg.mxu0
        %v1299 = vadd.f32 %v1226, %v1296
        %v1300 = vxor.u32 %v1299, 2147483648
        %v1301 = vmul.f32 %v1300, 1.442695
        %v1302 = vpow.pop %v1301
        %v1303 = vadd.f32 %v1302, 1.0
        %v1304 = vrcp.pop %v1303
        %v1305 = vmul.f32 1.0, %v1304
        %v1306 = vtanh.pop %v1299
        %v1307 = vmul.f32 %v1305, %v1211
        %1309 = vrot.lane.b32.xlu0 %v1306, 64
        %v1310 = vpop.permute.xlu0 %1309
        %v1312 = vmul.f32 %v1305, %v1310
        %1314 = vrot.lane.b32.xlu0 %v1312, 32
        %v1315 = vpop.permute.xlu0 %1314
        %v1317 = vadd.f32 %v1307, %v1315
        %v1318 = vtanh.pop %v1317
        %1320 = vrot.lane.b32.xlu0 %v1318, 64
        %v1321 = vpop.permute.xlu0 %1320
        %v1323 = vmul.f32 %v1305, %v1321
        %1325 = vrot.lane.b32.xlu0 %v1323, 32
        %v1326 = vpop.permute.xlu0 %1325
        %s1328 = scalar_lea.vmem %s234, 12
        %1329 = vst.msk [vmem:[%s1328] sm:$0x3] %vm1223, %v1326
        %s1330 = scalar_lea.vmem %s213, 10
        %v1331 = vld [vmem:[%s1330] sm:$0x3]
        %v1332 = vsel %vm1115, %v1326, 0
        %1334 = vmatprep.subr.mxu0 0.0
        %1335 = vmatpush1.msra.mxu0 %v246
        %1336 = vmatprep.subr.mxu0 0.0
        %1337 = vmatpush1.msra.mxu0 %v247
        %1338 = vmatprep.subr.mxu0 0.0
        %1339 = vmatpush1.msra.mxu0 %v248
        %1340 = vmatprep.subr.mxu0 0.0
        %1341 = vmatpush1.msra.mxu0 %v249
        %1342 = vmatprep.subr.mxu0 0.0
        %1343 = vmatpush1.msra.mxu0 0.0
        %1344 = vmatprep.subr.mxu0 0.0
        %1345 = vmatpush1.msra.mxu0 0.0
        %1346 = vmatprep.subr.mxu0 0.0
        %1347 = vmatpush1.msra.mxu0 0.0
        %1348 = vmatprep.subr.mxu0 0.0
        %1349 = vmatpush1.msra.mxu0 0.0
        %1350 = vmatprep.subr.mxu0 0.0
        %1351 = vmatpush1.msra.mxu0 0.0
        %1352 = vmatprep.subr.mxu0 0.0
        %1353 = vmatpush1.msra.mxu0 0.0
        %1354 = vmatprep.subr.mxu0 0.0
        %1355 = vmatpush1.msra.mxu0 0.0
        %1356 = vmatprep.subr.mxu0 0.0
        %1357 = vmatpush1.msra.mxu0 0.0
        %1358 = vmatprep.subr.mxu0 0.0
        %1359 = vmatpush1.msra.mxu0 0.0
        %1360 = vmatprep.subr.mxu0 0.0
        %1361 = vmatpush1.msra.mxu0 0.0
        %1362 = vmatprep.subr.mxu0 0.0
        %1363 = vmatpush1.msra.mxu0 0.0
        %1364 = vmatprep.subr.mxu0 0.0
        %1365 = vmatpush1.msra.mxu0 0.0
        %1366 = vmatprep.subr.mxu0 0.0
        %1367 = vmatpush1.msra.mxu0 0.0
        %1368 = vmatprep.subr.mxu0 0.0
        %1369 = vmatpush1.msra.mxu0 0.0
        %1370 = vmatprep.subr.mxu0 0.0
        %1371 = vmatpush1.msra.mxu0 0.0
        %1372 = vmatprep.subr.mxu0 0.0
        %1373 = vmatpush1.msra.mxu0 0.0
        %1374 = vmatprep.subr.mxu0 0.0
        %1375 = vmatpush1.msra.mxu0 0.0
        %1376 = vmatprep.subr.mxu0 0.0
        %1377 = vmatpush1.msra.mxu0 0.0
        %1378 = vmatprep.subr.mxu0 0.0
        %1379 = vmatpush1.msra.mxu0 0.0
        %1380 = vmatprep.subr.mxu0 0.0
        %1381 = vmatpush1.msra.mxu0 0.0
        %1382 = vmatprep.subr.mxu0 0.0
        %1383 = vmatpush1.msra.mxu0 0.0
        %1384 = vmatprep.subr.mxu0 0.0
        %1385 = vmatpush1.msra.mxu0 0.0
        %1386 = vmatprep.subr.mxu0 0.0
        %1387 = vmatpush1.msra.mxu0 0.0
        %1388 = vmatprep.subr.mxu0 0.0
        %1389 = vmatpush1.msra.mxu0 0.0
        %1390 = vmatprep.subr.mxu0 0.0
        %1391 = vmatpush1.msra.mxu0 0.0
        %1392 = vmatprep.subr.mxu0 0.0
        %1393 = vmatpush1.msra.mxu0 0.0
        %1394 = vmatprep.subr.mxu0 0.0
        %1395 = vmatpush1.msra.mxu0 0.0
        %1396 = vmatprep.subr.mxu0 0.0
        %1397 = vmatpush1.msra.mxu0 0.0
        %1398 = vmatprep.mubr.f32.mxu0 0.0
        %1399 = vmatmul.mubr.f32.gmra.mrb[0].mxu0 %v1332
        %v1400 = vpop.f32.mrb[0].mxu0
        %v1401 = vadd.f32 0.0, %v1400
        %v1402 = vpop.f32.mrb[0].mxu0
        %1403 = vdwg.mxu0
        %v1404 = vadd.f32 %v1331, %v1401
        %v1405 = vxor.u32 %v1404, 2147483648
        %v1406 = vmul.f32 %v1405, 1.442695
        %v1407 = vpow.pop %v1406
        %v1408 = vadd.f32 %v1407, 1.0
        %v1409 = vrcp.pop %v1408
        %v1410 = vmul.f32 1.0, %v1409
        %v1411 = vtanh.pop %v1404
        %v1412 = vmul.f32 %v1410, %v1317
        %1414 = vrot.lane.b32.xlu0 %v1411, 64
        %v1415 = vpop.permute.xlu0 %1414
        %v1417 = vmul.f32 %v1410, %v1415
        %1419 = vrot.lane.b32.xlu0 %v1417, 32
        %v1420 = vpop.permute.xlu0 %1419
        %v1422 = vadd.f32 %v1412, %v1420
        %v1423 = vtanh.pop %v1422
        %1425 = vrot.lane.b32.xlu0 %v1423, 64
        %v1426 = vpop.permute.xlu0 %1425
        %v1428 = vmul.f32 %v1410, %v1426
        %1430 = vrot.lane.b32.xlu0 %v1428, 32
        %v1431 = vpop.permute.xlu0 %1430
        %s1433 = scalar_lea.vmem %s234, 10
        %1434 = vst.msk [vmem:[%s1433] sm:$0x3] %vm1223, %v1431
        %s1435 = scalar_lea.vmem %s213, 8
        %v1436 = vld [vmem:[%s1435] sm:$0x3]
        %v1437 = vsel %vm1115, %v1431, 0
        %1439 = vmatprep.subr.mxu0 0.0
        %1440 = vmatpush1.msra.mxu0 %v246
        %1441 = vmatprep.subr.mxu0 0.0
        %1442 = vmatpush1.msra.mxu0 %v247
        %1443 = vmatprep.subr.mxu0 0.0
        %1444 = vmatpush1.msra.mxu0 %v248
        %1445 = vmatprep.subr.mxu0 0.0
        %1446 = vmatpush1.msra.mxu0 %v249
        %1447 = vmatprep.subr.mxu0 0.0
        %1448 = vmatpush1.msra.mxu0 0.0
        %1449 = vmatprep.subr.mxu0 0.0
        %1450 = vmatpush1.msra.mxu0 0.0
        %1451 = vmatprep.subr.mxu0 0.0
        %1452 = vmatpush1.msra.mxu0 0.0
        %1453 = vmatprep.subr.mxu0 0.0
        %1454 = vmatpush1.msra.mxu0 0.0
        %1455 = vmatprep.subr.mxu0 0.0
        %1456 = vmatpush1.msra.mxu0 0.0
        %1457 = vmatprep.subr.mxu0 0.0
        %1458 = vmatpush1.msra.mxu0 0.0
        %1459 = vmatprep.subr.mxu0 0.0
        %1460 = vmatpush1.msra.mxu0 0.0
        %1461 = vmatprep.subr.mxu0 0.0
        %1462 = vmatpush1.msra.mxu0 0.0
        %1463 = vmatprep.subr.mxu0 0.0
        %1464 = vmatpush1.msra.mxu0 0.0
        %1465 = vmatprep.subr.mxu0 0.0
        %1466 = vmatpush1.msra.mxu0 0.0
        %1467 = vmatprep.subr.mxu0 0.0
        %1468 = vmatpush1.msra.mxu0 0.0
        %1469 = vmatprep.subr.mxu0 0.0
        %1470 = vmatpush1.msra.mxu0 0.0
        %1471 = vmatprep.subr.mxu0 0.0
        %1472 = vmatpush1.msra.mxu0 0.0
        %1473 = vmatprep.subr.mxu0 0.0
        %1474 = vmatpush1.msra.mxu0 0.0
        %1475 = vmatprep.subr.mxu0 0.0
        %1476 = vmatpush1.msra.mxu0 0.0
        %1477 = vmatprep.subr.mxu0 0.0
        %1478 = vmatpush1.msra.mxu0 0.0
        %1479 = vmatprep.subr.mxu0 0.0
        %1480 = vmatpush1.msra.mxu0 0.0
        %1481 = vmatprep.subr.mxu0 0.0
        %1482 = vmatpush1.msra.mxu0 0.0
        %1483 = vmatprep.subr.mxu0 0.0
        %1484 = vmatpush1.msra.mxu0 0.0
        %1485 = vmatprep.subr.mxu0 0.0
        %1486 = vmatpush1.msra.mxu0 0.0
        %1487 = vmatprep.subr.mxu0 0.0
        %1488 = vmatpush1.msra.mxu0 0.0
        %1489 = vmatprep.subr.mxu0 0.0
        %1490 = vmatpush1.msra.mxu0 0.0
        %1491 = vmatprep.subr.mxu0 0.0
        %1492 = vmatpush1.msra.mxu0 0.0
        %1493 = vmatprep.subr.mxu0 0.0
        %1494 = vmatpush1.msra.mxu0 0.0
        %1495 = vmatprep.subr.mxu0 0.0
        %1496 = vmatpush1.msra.mxu0 0.0
        %1497 = vmatprep.subr.mxu0 0.0
        %1498 = vmatpush1.msra.mxu0 0.0
        %1499 = vmatprep.subr.mxu0 0.0
        %1500 = vmatpush1.msra.mxu0 0.0
        %1501 = vmatprep.subr.mxu0 0.0
        %1502 = vmatpush1.msra.mxu0 0.0
        %1503 = vmatprep.mubr.f32.mxu0 0.0
        %1504 = vmatmul.mubr.f32.gmra.mrb[0].mxu0 %v1437
        %v1505 = vpop.f32.mrb[0].mxu0
        %v1506 = vadd.f32 0.0, %v1505
        %v1507 = vpop.f32.mrb[0].mxu0
        %1508 = vdwg.mxu0
        %v1509 = vadd.f32 %v1436, %v1506
        %v1510 = vxor.u32 %v1509, 2147483648
        %v1511 = vmul.f32 %v1510, 1.442695
        %v1512 = vpow.pop %v1511
        %v1513 = vadd.f32 %v1512, 1.0
        %v1514 = vrcp.pop %v1513
        %v1515 = vmul.f32 1.0, %v1514
        %v1516 = vtanh.pop %v1509
        %v1517 = vmul.f32 %v1515, %v1422
        %1519 = vrot.lane.b32.xlu0 %v1516, 64
        %v1520 = vpop.permute.xlu0 %1519
        %v1522 = vmul.f32 %v1515, %v1520
        %1524 = vrot.lane.b32.xlu0 %v1522, 32
        %v1525 = vpop.permute.xlu0 %1524
        %v1527 = vadd.f32 %v1517, %v1525
        %v1528 = vtanh.pop %v1527
        %1530 = vrot.lane.b32.xlu0 %v1528, 64
        %v1531 = vpop.permute.xlu0 %1530
        %v1533 = vmul.f32 %v1515, %v1531
        %1535 = vrot.lane.b32.xlu0 %v1533, 32
        %v1536 = vpop.permute.xlu0 %1535
        %s1538 = scalar_lea.vmem %s234, 8
        %1539 = vst.msk [vmem:[%s1538] sm:$0x3] %vm1223, %v1536
        %s1540 = scalar_lea.vmem %s213, 6
        %v1541 = vld [vmem:[%s1540] sm:$0x3]
        %v1542 = vsel %vm1115, %v1536, 0
        %1544 = vmatprep.subr.mxu0 0.0
        %1545 = vmatpush1.msra.mxu0 %v246
        %1546 = vmatprep.subr.mxu0 0.0
        %1547 = vmatpush1.msra.mxu0 %v247
        %1548 = vmatprep.subr.mxu0 0.0
        %1549 = vmatpush1.msra.mxu0 %v248
        %1550 = vmatprep.subr.mxu0 0.0
        %1551 = vmatpush1.msra.mxu0 %v249
        %1552 = vmatprep.subr.mxu0 0.0
        %1553 = vmatpush1.msra.mxu0 0.0
        %1554 = vmatprep.subr.mxu0 0.0
        %1555 = vmatpush1.msra.mxu0 0.0
        %1556 = vmatprep.subr.mxu0 0.0
        %1557 = vmatpush1.msra.mxu0 0.0
        %1558 = vmatprep.subr.mxu0 0.0
        %1559 = vmatpush1.msra.mxu0 0.0
        %1560 = vmatprep.subr.mxu0 0.0
        %1561 = vmatpush1.msra.mxu0 0.0
        %1562 = vmatprep.subr.mxu0 0.0
        %1563 = vmatpush1.msra.mxu0 0.0
        %1564 = vmatprep.subr.mxu0 0.0
        %1565 = vmatpush1.msra.mxu0 0.0
        %1566 = vmatprep.subr.mxu0 0.0
        %1567 = vmatpush1.msra.mxu0 0.0
        %1568 = vmatprep.subr.mxu0 0.0
        %1569 = vmatpush1.msra.mxu0 0.0
        %1570 = vmatprep.subr.mxu0 0.0
        %1571 = vmatpush1.msra.mxu0 0.0
        %1572 = vmatprep.subr.mxu0 0.0
        %1573 = vmatpush1.msra.mxu0 0.0
        %1574 = vmatprep.subr.mxu0 0.0
        %1575 = vmatpush1.msra.mxu0 0.0
        %1576 = vmatprep.subr.mxu0 0.0
        %1577 = vmatpush1.msra.mxu0 0.0
        %1578 = vmatprep.subr.mxu0 0.0
        %1579 = vmatpush1.msra.mxu0 0.0
        %1580 = vmatprep.subr.mxu0 0.0
        %1581 = vmatpush1.msra.mxu0 0.0
        %1582 = vmatprep.subr.mxu0 0.0
        %1583 = vmatpush1.msra.mxu0 0.0
        %1584 = vmatprep.subr.mxu0 0.0
        %1585 = vmatpush1.msra.mxu0 0.0
        %1586 = vmatprep.subr.mxu0 0.0
        %1587 = vmatpush1.msra.mxu0 0.0
        %1588 = vmatprep.subr.mxu0 0.0
        %1589 = vmatpush1.msra.mxu0 0.0
        %1590 = vmatprep.subr.mxu0 0.0
        %1591 = vmatpush1.msra.mxu0 0.0
        %1592 = vmatprep.subr.mxu0 0.0
        %1593 = vmatpush1.msra.mxu0 0.0
        %1594 = vmatprep.subr.mxu0 0.0
        %1595 = vmatpush1.msra.mxu0 0.0
        %1596 = vmatprep.subr.mxu0 0.0
        %1597 = vmatpush1.msra.mxu0 0.0
        %1598 = vmatprep.subr.mxu0 0.0
        %1599 = vmatpush1.msra.mxu0 0.0
        %1600 = vmatprep.subr.mxu0 0.0
        %1601 = vmatpush1.msra.mxu0 0.0
        %1602 = vmatprep.subr.mxu0 0.0
        %1603 = vmatpush1.msra.mxu0 0.0
        %1604 = vmatprep.subr.mxu0 0.0
        %1605 = vmatpush1.msra.mxu0 0.0
        %1606 = vmatprep.subr.mxu0 0.0
        %1607 = vmatpush1.msra.mxu0 0.0
        %1608 = vmatprep.mubr.f32.mxu0 0.0
        %1609 = vmatmul.mubr.f32.gmra.mrb[0].mxu0 %v1542
        %v1610 = vpop.f32.mrb[0].mxu0
        %v1611 = vadd.f32 0.0, %v1610
        %v1612 = vpop.f32.mrb[0].mxu0
        %1613 = vdwg.mxu0
        %v1614 = vadd.f32 %v1541, %v1611
        %v1615 = vxor.u32 %v1614, 2147483648
        %v1616 = vmul.f32 %v1615, 1.442695
        %v1617 = vpow.pop %v1616
        %v1618 = vadd.f32 %v1617, 1.0
        %v1619 = vrcp.pop %v1618
        %v1620 = vmul.f32 1.0, %v1619
        %v1621 = vtanh.pop %v1614
        %v1622 = vmul.f32 %v1620, %v1527
        %1624 = vrot.lane.b32.xlu0 %v1621, 64
        %v1625 = vpop.permute.xlu0 %1624
        %v1627 = vmul.f32 %v1620, %v1625
        %1629 = vrot.lane.b32.xlu0 %v1627, 32
        %v1630 = vpop.permute.xlu0 %1629
        %v1632 = vadd.f32 %v1622, %v1630
        %v1633 = vtanh.pop %v1632
        %1635 = vrot.lane.b32.xlu0 %v1633, 64
        %v1636 = vpop.permute.xlu0 %1635
        %v1638 = vmul.f32 %v1620, %v1636
        %1640 = vrot.lane.b32.xlu0 %v1638, 32
        %v1641 = vpop.permute.xlu0 %1640
        %s1643 = scalar_lea.vmem %s234, 6
        %1644 = vst.msk [vmem:[%s1643] sm:$0x3] %vm1223, %v1641
        %s1645 = scalar_lea.vmem %s213, 4
        %v1646 = vld [vmem:[%s1645] sm:$0x3]
        %v1647 = vsel %vm1115, %v1641, 0
        %1649 = vmatprep.subr.mxu0 0.0
        %1650 = vmatpush1.msra.mxu0 %v246
        %1651 = vmatprep.subr.mxu0 0.0
        %1652 = vmatpush1.msra.mxu0 %v247
        %1653 = vmatprep.subr.mxu0 0.0
        %1654 = vmatpush1.msra.mxu0 %v248
        %1655 = vmatprep.subr.mxu0 0.0
        %1656 = vmatpush1.msra.mxu0 %v249
        %1657 = vmatprep.subr.mxu0 0.0
        %1658 = vmatpush1.msra.mxu0 0.0
        %1659 = vmatprep.subr.mxu0 0.0
        %1660 = vmatpush1.msra.mxu0 0.0
        %1661 = vmatprep.subr.mxu0 0.0
        %1662 = vmatpush1.msra.mxu0 0.0
        %1663 = vmatprep.subr.mxu0 0.0
        %1664 = vmatpush1.msra.mxu0 0.0
        %1665 = vmatprep.subr.mxu0 0.0
        %1666 = vmatpush1.msra.mxu0 0.0
        %1667 = vmatprep.subr.mxu0 0.0
        %1668 = vmatpush1.msra.mxu0 0.0
        %1669 = vmatprep.subr.mxu0 0.0
        %1670 = vmatpush1.msra.mxu0 0.0
        %1671 = vmatprep.subr.mxu0 0.0
        %1672 = vmatpush1.msra.mxu0 0.0
        %1673 = vmatprep.subr.mxu0 0.0
        %1674 = vmatpush1.msra.mxu0 0.0
        %1675 = vmatprep.subr.mxu0 0.0
        %1676 = vmatpush1.msra.mxu0 0.0
        %1677 = vmatprep.subr.mxu0 0.0
        %1678 = vmatpush1.msra.mxu0 0.0
        %1679 = vmatprep.subr.mxu0 0.0
        %1680 = vmatpush1.msra.mxu0 0.0
        %1681 = vmatprep.subr.mxu0 0.0
        %1682 = vmatpush1.msra.mxu0 0.0
        %1683 = vmatprep.subr.mxu0 0.0
        %1684 = vmatpush1.msra.mxu0 0.0
        %1685 = vmatprep.subr.mxu0 0.0
        %1686 = vmatpush1.msra.mxu0 0.0
        %1687 = vmatprep.subr.mxu0 0.0
        %1688 = vmatpush1.msra.mxu0 0.0
        %1689 = vmatprep.subr.mxu0 0.0
        %1690 = vmatpush1.msra.mxu0 0.0
        %1691 = vmatprep.subr.mxu0 0.0
        %1692 = vmatpush1.msra.mxu0 0.0
        %1693 = vmatprep.subr.mxu0 0.0
        %1694 = vmatpush1.msra.mxu0 0.0
        %1695 = vmatprep.subr.mxu0 0.0
        %1696 = vmatpush1.msra.mxu0 0.0
        %1697 = vmatprep.subr.mxu0 0.0
        %1698 = vmatpush1.msra.mxu0 0.0
        %1699 = vmatprep.subr.mxu0 0.0
        %1700 = vmatpush1.msra.mxu0 0.0
        %1701 = vmatprep.subr.mxu0 0.0
        %1702 = vmatpush1.msra.mxu0 0.0
        %1703 = vmatprep.subr.mxu0 0.0
        %1704 = vmatpush1.msra.mxu0 0.0
        %1705 = vmatprep.subr.mxu0 0.0
        %1706 = vmatpush1.msra.mxu0 0.0
        %1707 = vmatprep.subr.mxu0 0.0
        %1708 = vmatpush1.msra.mxu0 0.0
        %1709 = vmatprep.subr.mxu0 0.0
        %1710 = vmatpush1.msra.mxu0 0.0
        %1711 = vmatprep.subr.mxu0 0.0
        %1712 = vmatpush1.msra.mxu0 0.0
        %1713 = vmatprep.mubr.f32.mxu0 0.0
        %1714 = vmatmul.mubr.f32.gmra.mrb[0].mxu0 %v1647
        %v1715 = vpop.f32.mrb[0].mxu0
        %v1716 = vadd.f32 0.0, %v1715
        %v1717 = vpop.f32.mrb[0].mxu0
        %1718 = vdwg.mxu0
        %v1719 = vadd.f32 %v1646, %v1716
        %v1720 = vxor.u32 %v1719, 2147483648
        %v1721 = vmul.f32 %v1720, 1.442695
        %v1722 = vpow.pop %v1721
        %v1723 = vadd.f32 %v1722, 1.0
        %v1724 = vrcp.pop %v1723
        %v1725 = vmul.f32 1.0, %v1724
        %v1726 = vtanh.pop %v1719
        %v1727 = vmul.f32 %v1725, %v1632
        %1729 = vrot.lane.b32.xlu0 %v1726, 64
        %v1730 = vpop.permute.xlu0 %1729
        %v1732 = vmul.f32 %v1725, %v1730
        %1734 = vrot.lane.b32.xlu0 %v1732, 32
        %v1735 = vpop.permute.xlu0 %1734
        %v1737 = vadd.f32 %v1727, %v1735
        %v1738 = vtanh.pop %v1737
        %1740 = vrot.lane.b32.xlu0 %v1738, 64
        %v1741 = vpop.permute.xlu0 %1740
        %v1743 = vmul.f32 %v1725, %v1741
        %1745 = vrot.lane.b32.xlu0 %v1743, 32
        %v1746 = vpop.permute.xlu0 %1745
        %s1748 = scalar_lea.vmem %s234, 4
        %1749 = vst.msk [vmem:[%s1748] sm:$0x3] %vm1223, %v1746
        %s1750 = scalar_lea.vmem %s213, 2
        %v1751 = vld [vmem:[%s1750] sm:$0x3]
        %v1752 = vsel %vm1115, %v1746, 0
        %1754 = vmatprep.subr.mxu0 0.0
        %1755 = vmatpush1.msra.mxu0 %v246
        %1756 = vmatprep.subr.mxu0 0.0
        %1757 = vmatpush1.msra.mxu0 %v247
        %1758 = vmatprep.subr.mxu0 0.0
        %1759 = vmatpush1.msra.mxu0 %v248
        %1760 = vmatprep.subr.mxu0 0.0
        %1761 = vmatpush1.msra.mxu0 %v249
        %1762 = vmatprep.subr.mxu0 0.0
        %1763 = vmatpush1.msra.mxu0 0.0
        %1764 = vmatprep.subr.mxu0 0.0
        %1765 = vmatpush1.msra.mxu0 0.0
        %1766 = vmatprep.subr.mxu0 0.0
        %1767 = vmatpush1.msra.mxu0 0.0
        %1768 = vmatprep.subr.mxu0 0.0
        %1769 = vmatpush1.msra.mxu0 0.0
        %1770 = vmatprep.subr.mxu0 0.0
        %1771 = vmatpush1.msra.mxu0 0.0
        %1772 = vmatprep.subr.mxu0 0.0
        %1773 = vmatpush1.msra.mxu0 0.0
        %1774 = vmatprep.subr.mxu0 0.0
        %1775 = vmatpush1.msra.mxu0 0.0
        %1776 = vmatprep.subr.mxu0 0.0
        %1777 = vmatpush1.msra.mxu0 0.0
        %1778 = vmatprep.subr.mxu0 0.0
        %1779 = vmatpush1.msra.mxu0 0.0
        %1780 = vmatprep.subr.mxu0 0.0
        %1781 = vmatpush1.msra.mxu0 0.0
        %1782 = vmatprep.subr.mxu0 0.0
        %1783 = vmatpush1.msra.mxu0 0.0
        %1784 = vmatprep.subr.mxu0 0.0
        %1785 = vmatpush1.msra.mxu0 0.0
        %1786 = vmatprep.subr.mxu0 0.0
        %1787 = vmatpush1.msra.mxu0 0.0
        %1788 = vmatprep.subr.mxu0 0.0
        %1789 = vmatpush1.msra.mxu0 0.0
        %1790 = vmatprep.subr.mxu0 0.0
        %1791 = vmatpush1.msra.mxu0 0.0
        %1792 = vmatprep.subr.mxu0 0.0
        %1793 = vmatpush1.msra.mxu0 0.0
        %1794 = vmatprep.subr.mxu0 0.0
        %1795 = vmatpush1.msra.mxu0 0.0
        %1796 = vmatprep.subr.mxu0 0.0
        %1797 = vmatpush1.msra.mxu0 0.0
        %1798 = vmatprep.subr.mxu0 0.0
        %1799 = vmatpush1.msra.mxu0 0.0
        %1800 = vmatprep.subr.mxu0 0.0
        %1801 = vmatpush1.msra.mxu0 0.0
        %1802 = vmatprep.subr.mxu0 0.0
        %1803 = vmatpush1.msra.mxu0 0.0
        %1804 = vmatprep.subr.mxu0 0.0
        %1805 = vmatpush1.msra.mxu0 0.0
        %1806 = vmatprep.subr.mxu0 0.0
        %1807 = vmatpush1.msra.mxu0 0.0
        %1808 = vmatprep.subr.mxu0 0.0
        %1809 = vmatpush1.msra.mxu0 0.0
        %1810 = vmatprep.subr.mxu0 0.0
        %1811 = vmatpush1.msra.mxu0 0.0
        %1812 = vmatprep.subr.mxu0 0.0
        %1813 = vmatpush1.msra.mxu0 0.0
        %1814 = vmatprep.subr.mxu0 0.0
        %1815 = vmatpush1.msra.mxu0 0.0
        %1816 = vmatprep.subr.mxu0 0.0
        %1817 = vmatpush1.msra.mxu0 0.0
        %1818 = vmatprep.mubr.f32.mxu0 0.0
        %1819 = vmatmul.mubr.f32.gmra.mrb[0].mxu0 %v1752
        %v1820 = vpop.f32.mrb[0].mxu0
        %v1821 = vadd.f32 0.0, %v1820
        %v1822 = vpop.f32.mrb[0].mxu0
        %1823 = vdwg.mxu0
        %v1824 = vadd.f32 %v1751, %v1821
        %v1825 = vxor.u32 %v1824, 2147483648
        %v1826 = vmul.f32 %v1825, 1.442695
        %v1827 = vpow.pop %v1826
        %v1828 = vadd.f32 %v1827, 1.0
        %v1829 = vrcp.pop %v1828
        %v1830 = vmul.f32 1.0, %v1829
        %v1831 = vtanh.pop %v1824
        %v1832 = vmul.f32 %v1830, %v1737
        %1834 = vrot.lane.b32.xlu0 %v1831, 64
        %v1835 = vpop.permute.xlu0 %1834
        %v1837 = vmul.f32 %v1830, %v1835
        %1839 = vrot.lane.b32.xlu0 %v1837, 32
        %v1840 = vpop.permute.xlu0 %1839
        %v1842 = vadd.f32 %v1832, %v1840
        %v1843 = vtanh.pop %v1842
        %1845 = vrot.lane.b32.xlu0 %v1843, 64
        %v1846 = vpop.permute.xlu0 %1845
        %v1848 = vmul.f32 %v1830, %v1846
        %1850 = vrot.lane.b32.xlu0 %v1848, 32
        %v1851 = vpop.permute.xlu0 %1850
        %s1853 = scalar_lea.vmem %s234, 2
        %1854 = vst.msk [vmem:[%s1853] sm:$0x3] %vm1223, %v1851
        %v1855 = vld [vmem:[%s213] sm:$0x3]
        %v1856 = vsel %vm1115, %v1851, 0
        %1858 = vmatprep.subr.mxu0 0.0
        %1859 = vmatpush1.msra.mxu0 %v246
        %1860 = vmatprep.subr.mxu0 0.0
        %1861 = vmatpush1.msra.mxu0 %v247
        %1862 = vmatprep.subr.mxu0 0.0
        %1863 = vmatpush1.msra.mxu0 %v248
        %1864 = vmatprep.subr.mxu0 0.0
        %1865 = vmatpush1.msra.mxu0 %v249
        %1866 = vmatprep.subr.mxu0 0.0
        %1867 = vmatpush1.msra.mxu0 0.0
        %1868 = vmatprep.subr.mxu0 0.0
        %1869 = vmatpush1.msra.mxu0 0.0
        %1870 = vmatprep.subr.mxu0 0.0
        %1871 = vmatpush1.msra.mxu0 0.0
        %1872 = vmatprep.subr.mxu0 0.0
        %1873 = vmatpush1.msra.mxu0 0.0
        %1874 = vmatprep.subr.mxu0 0.0
        %1875 = vmatpush1.msra.mxu0 0.0
        %1876 = vmatprep.subr.mxu0 0.0
        %1877 = vmatpush1.msra.mxu0 0.0
        %1878 = vmatprep.subr.mxu0 0.0
        %1879 = vmatpush1.msra.mxu0 0.0
        %1880 = vmatprep.subr.mxu0 0.0
        %1881 = vmatpush1.msra.mxu0 0.0
        %1882 = vmatprep.subr.mxu0 0.0
        %1883 = vmatpush1.msra.mxu0 0.0
        %1884 = vmatprep.subr.mxu0 0.0
        %1885 = vmatpush1.msra.mxu0 0.0
        %1886 = vmatprep.subr.mxu0 0.0
        %1887 = vmatpush1.msra.mxu0 0.0
        %1888 = vmatprep.subr.mxu0 0.0
        %1889 = vmatpush1.msra.mxu0 0.0
        %1890 = vmatprep.subr.mxu0 0.0
        %1891 = vmatpush1.msra.mxu0 0.0
        %1892 = vmatprep.subr.mxu0 0.0
        %1893 = vmatpush1.msra.mxu0 0.0
        %1894 = vmatprep.subr.mxu0 0.0
        %1895 = vmatpush1.msra.mxu0 0.0
        %1896 = vmatprep.subr.mxu0 0.0
        %1897 = vmatpush1.msra.mxu0 0.0
        %1898 = vmatprep.subr.mxu0 0.0
        %1899 = vmatpush1.msra.mxu0 0.0
        %1900 = vmatprep.subr.mxu0 0.0
        %1901 = vmatpush1.msra.mxu0 0.0
        %1902 = vmatprep.subr.mxu0 0.0
        %1903 = vmatpush1.msra.mxu0 0.0
        %1904 = vmatprep.subr.mxu0 0.0
        %1905 = vmatpush1.msra.mxu0 0.0
        %1906 = vmatprep.subr.mxu0 0.0
        %1907 = vmatpush1.msra.mxu0 0.0
        %1908 = vmatprep.subr.mxu0 0.0
        %1909 = vmatpush1.msra.mxu0 0.0
        %1910 = vmatprep.subr.mxu0 0.0
        %1911 = vmatpush1.msra.mxu0 0.0
        %1912 = vmatprep.subr.mxu0 0.0
        %1913 = vmatpush1.msra.mxu0 0.0
        %1914 = vmatprep.subr.mxu0 0.0
        %1915 = vmatpush1.msra.mxu0 0.0
        %1916 = vmatprep.subr.mxu0 0.0
        %1917 = vmatpush1.msra.mxu0 0.0
        %1918 = vmatprep.subr.mxu0 0.0
        %1919 = vmatpush1.msra.mxu0 0.0
        %1920 = vmatprep.subr.mxu0 0.0
        %1921 = vmatpush1.msra.mxu0 0.0
        %1922 = vmatprep.mubr.f32.mxu0 0.0
        %1923 = vmatmul.mubr.f32.gmra.mrb[0].mxu0 %v1856
        %v1924 = vpop.f32.mrb[0].mxu0
        %v1925 = vadd.f32 0.0, %v1924
        %v1926 = vpop.f32.mrb[0].mxu0
        %1927 = vdwg.mxu0
        %v1928 = vadd.f32 %v1855, %v1925
        %v1929 = vxor.u32 %v1928, 2147483648
        %v1930 = vmul.f32 %v1929, 1.442695
        %v1931 = vpow.pop %v1930
        %v1932 = vadd.f32 %v1931, 1.0
        %v1933 = vrcp.pop %v1932
        %v1934 = vmul.f32 1.0, %v1933
        %v1935 = vtanh.pop %v1928
        %v1936 = vmul.f32 %v1934, %v1842
        %1938 = vrot.lane.b32.xlu0 %v1935, 64
        %v1939 = vpop.permute.xlu0 %1938
        %v1941 = vmul.f32 %v1934, %v1939
        %1943 = vrot.lane.b32.xlu0 %v1941, 32
        %v1944 = vpop.permute.xlu0 %1943
        %v1946 = vadd.f32 %v1936, %v1944
        %v1947 = vtanh.pop %v1946
        %1949 = vrot.lane.b32.xlu0 %v1947, 64
        %v1950 = vpop.permute.xlu0 %1949
        %v1952 = vmul.f32 %v1934, %v1950
        %1954 = vrot.lane.b32.xlu0 %v1952, 32
        %v1955 = vpop.permute.xlu0 %1954
        %1957 = vst.msk [vmem:[%s234] sm:$0x3] %vm1223, %v1955
        %1958 = vst.msk [vmem:[#allocation2] sm:$0x3] %vm1223, %v1955
        %1960 = vrot.lane.b32.xlu0 %v1946, 96
        %v1961 = vpop.permute.xlu0 %1960
        %1963 = vst.msk [vmem:[#allocation3] sm:$0x3] %vm1223, %v1961
      $region40: #{lstm_se_pl_dense_mtl_forward.10} parent=27 // pred_fallthru
        _
      %s1964 = smul.u32 %s17, 2
      %s1965 = ssub.s32 1, %s1964
      %s1966 = smul.u32 %s1965, %s18
      %s1967 = smul.u32 8, %s1966
      %p1968 = scmp.lt.s32.totalorder %s17, 1
      %s1969 = scalar_select %p1968, %s17, 1
      %p1970 = scmp.lt.s32.totalorder %s1967, 7
      %s1971 = scalar_select %p1970, %s1967, 7
      %s1972 = smul.addr %s1969, 8
      %s1973 = sadd.s32 %s1971, %s1972
      %s1974 = smul.addr %s1973, 2
      %s1975 = scalar_lea.vmem %s2, %s1974
      // Predicated region
      $region41: #{lstm_se_pl_dense_mtl_forward.10} parent=27 // pred_check
        %p1976 = pneg %p111
      $region42: #{lstm_se_pl_dense_mtl_forward.10} parent=27 // pred_check_branch
        %1978 = sbr.rel (%p1976) target = $region44
      $region43: #{lstm_se_pl_dense_mtl_forward.10} parent=27 // pred_region
        %s1979 = smul.u32 %s17, 2
        %s1980 = ssub.s32 1, %s1979
        %s1981 = smul.u32 %s1980, %s18
        %s1982 = smul.u32 8, %s1981
      $region44: #{lstm_se_pl_dense_mtl_forward.10} parent=27 // pred_fallthru
        _
    $region28: #{lstm_se_pl_dense_mtl_forward.10} parent=5 // pred_fallthru
      _
    %p1983 = scmp.le.s32.totalorder 2, %s8
    // Predicated region
    $region45: #{lstm_se_pl_dense_mtl_forward.10} parent=5 // pred_check
      %p1984 = pneg %p1983
    $region46: #{lstm_se_pl_dense_mtl_forward.10} parent=5 // pred_check_branch
      %1986 = sbr.rel (%p1984) target = $region48
    $region47: #{lstm_se_pl_dense_mtl_forward.10} parent=5 // pred_region
      %s1987 = ssub.s32 %s8, 2
      // Predicated region
      $region49: #{lstm_se_pl_dense_mtl_forward.10} parent=47 // pred_check
        %p1988 = pneg %p117
      $region50: #{lstm_se_pl_dense_mtl_forward.10} parent=47 // pred_check_branch
        %1990 = sbr.rel (%p1988) target = $region52
      $region51: #{lstm_se_pl_dense_mtl_forward.10} parent=47 // pred_region
        %s1991 = smul.u32 %s19, 2
        %s1992 = ssub.s32 1, %s1991
        %s1993 = smul.u32 %s1992, %s20
        %s1994 = smul.u32 8, %s1993
        %p1995 = scmp.lt.s32.totalorder %s19, 1
        %s1996 = scalar_select %p1995, %s19, 1
        %p1997 = scmp.lt.s32.totalorder %s1994, 7
        %s1998 = scalar_select %p1997, %s1994, 7
        %s1999 = smul.addr %s1996, 8
        %s2000 = sadd.s32 %s1998, %s1999
        %s2001 = smul.addr %s2000, 2
        %s2002 = scalar_lea.vmem %s2, %s2001
      $region52: #{lstm_se_pl_dense_mtl_forward.10} parent=47 // pred_fallthru
        _
    $region48: #{lstm_se_pl_dense_mtl_forward.10} parent=5 // pred_fallthru
      _
  $region6: #{lstm_se_pl_dense_mtl_forward.10} parent=0 // loop_footer
    %s12 = sadd.s32 1, %s8
  $region7: #{lstm_se_pl_dense_mtl_forward.10} parent=0 // loop_footer_branch
    %7 = sbr.rel target = $region3
  $region8: #{lstm_se_pl_dense_mtl_forward.10} parent=0 // loop_exit
    _

// kernel: lstm_se_pl_dense_mtl_forward.15
$region0: #{lstm_se_pl_dense_mtl_forward.15}
  #allocation0 [shape = 'u32[]', space=smem, size = 0x4, offset = 0x4, fixed_abs, tag = 'smem constant byte address 0x4 - core index']
  #allocation1 [shape = 'u32[144,128]{1,0:T(1,128)}', space=vmem, size = 0x12000, scoped, tag = 'internal scratch']
  %s0 = inlined_call_operand.vmem [shape: f32[16,24], index: 0, kind: input, shape index: {}]
  %s1 = inlined_call_operand.vmem [shape: f32[2,24,128], index: 1, kind: input, shape index: {}]
  %s2 = inlined_call_operand.vmem [shape: f32[2,1,128], index: 2, kind: input, shape index: {}]
  %s3 = inlined_call_operand.vmem [shape: f32[2,16,128], index: 3, kind: output, shape index: {}]
  %s4 = sld [smem:[#allocation0]]
  $region45: #{lstm_se_pl_dense_mtl_forward.15} parent=0
    _
  %s6 = ssub.s32 1, %s4
  %s7 = scalar_select 0, %s6, %s4
  loop: start=0, step=1, limit=4
  $region2: #{lstm_se_pl_dense_mtl_forward.15} parent=0 // loop_pre_header
    _
  $region3: #{lstm_se_pl_dense_mtl_forward.15} parent=0 // loop_header
    %s9 = sphi 0, %s13
    %p10 = scmp.ge.s32.totalorder %s9, 4
    %s16 = sphi 0, %s28
    %s17 = sphi 0, %s24
    %s18 = sphi 0, %s16
    %s19 = sphi 0, %s17
    %s20 = sphi 0, %s18
    %s21 = sphi 0, %s19
    %s31 = sphi 0, %s33
    %s34 = sphi 0, %s31
    %s35 = sphi 0, %s34
    %s51 = sphi 0, %s35
    %s57 = sphi 0, %s59
    %s60 = sphi 0, %s57
    %s61 = sphi 0, %s60
    %s77 = sphi 0, %s61
    %s83 = sphi 0, %s85
    %s86 = sphi 0, %s83
    %s87 = sphi 0, %s86
    %s103 = sphi 0, %s87
    %s111 = sphi 0, %s113
    %s114 = sphi 0, %s111
    %s115 = sphi 0, %s114
    %s131 = sphi 0, %s115
  $region4: #{lstm_se_pl_dense_mtl_forward.15} parent=0 // loop_header_branch
    %12 = sbr.rel (%p10) target = $region8
  $region5: #{lstm_se_pl_dense_mtl_forward.15} parent=0 // loop_body
    %s14 = ssub.s32 %s9, 1
    %s15 = ssub.s32 %s9, 2
    %s22 = sadd.s32 1, %s17
    %p23 = scmp.ge.s32.totalorder %s22, 1
    %s24 = scalar_select %p23, 0, %s22
    %s25 = sadd.s32 1, %s16
    %s26 = scalar_select %p23, %s25, %s16
    %p27 = scmp.ge.s32.totalorder %s26, 2
    %s28 = scalar_select %p27, 0, %s26
    %s29 = ssub.s32 %s17, %s24
    %p30 = scmp.eq.s32.totalorder %s29, 0
    %s32 = sadd.s32 %s31, 1
    %s33 = scalar_select %p30, %s31, %s32
    %p36 = pneg %p30
    %p37 = scmp.eq.s32.totalorder %s9, 1
    %p38 = por %p36, %p37
    %p39 = scmp.ne.s32.totalorder %s31, %s34
    %p40 = scmp.eq.s32.totalorder %s9, 0
    %p41 = por %p39, %p40
    %p42 = scmp.ne.s32.totalorder %s31, %s34
    %p43 = scmp.eq.s32.totalorder %s14, 1
    %p44 = por %p42, %p43
    %p45 = scmp.ne.s32.totalorder %s34, %s35
    %p46 = scmp.eq.s32.totalorder %s14, 0
    %p47 = por %p45, %p46
    %p48 = scmp.ne.s32.totalorder %s34, %s35
    %p49 = scmp.eq.s32.totalorder %s15, 1
    %p50 = por %p48, %p49
    %p52 = scmp.ne.s32.totalorder %s35, %s51
    %p53 = scmp.eq.s32.totalorder %s15, 0
    %p54 = por %p52, %p53
    %s55 = ssub.s32 %s16, %s28
    %p56 = scmp.eq.s32.totalorder %s55, 0
    %s58 = sadd.s32 %s57, 1
    %s59 = scalar_select %p56, %s57, %s58
    %p62 = pneg %p56
    %p63 = scmp.eq.s32.totalorder %s9, 1
    %p64 = por %p62, %p63
    %p65 = scmp.ne.s32.totalorder %s57, %s60
    %p66 = scmp.eq.s32.totalorder %s9, 0
    %p67 = por %p65, %p66
    %p68 = scmp.ne.s32.totalorder %s57, %s60
    %p69 = scmp.eq.s32.totalorder %s14, 1
    %p70 = por %p68, %p69
    %p71 = scmp.ne.s32.totalorder %s60, %s61
    %p72 = scmp.eq.s32.totalorder %s14, 0
    %p73 = por %p71, %p72
    %p74 = scmp.ne.s32.totalorder %s60, %s61
    %p75 = scmp.eq.s32.totalorder %s15, 1
    %p76 = por %p74, %p75
    %p78 = scmp.ne.s32.totalorder %s61, %s77
    %p79 = scmp.eq.s32.totalorder %s15, 0
    %p80 = por %p78, %p79
    %s81 = ssub.s32 %s16, %s28
    %p82 = scmp.eq.s32.totalorder %s81, 0
    %s84 = sadd.s32 %s83, 1
    %s85 = scalar_select %p82, %s83, %s84
    %p88 = pneg %p82
    %p89 = scmp.eq.s32.totalorder %s9, 1
    %p90 = por %p88, %p89
    %p91 = scmp.ne.s32.totalorder %s83, %s86
    %p92 = scmp.eq.s32.totalorder %s9, 0
    %p93 = por %p91, %p92
    %p94 = scmp.ne.s32.totalorder %s83, %s86
    %p95 = scmp.eq.s32.totalorder %s14, 1
    %p96 = por %p94, %p95
    %p97 = scmp.ne.s32.totalorder %s86, %s87
    %p98 = scmp.eq.s32.totalorder %s14, 0
    %p99 = por %p97, %p98
    %p100 = scmp.ne.s32.totalorder %s86, %s87
    %p101 = scmp.eq.s32.totalorder %s15, 1
    %p102 = por %p100, %p101
    %p104 = scmp.ne.s32.totalorder %s87, %s103
    %p105 = scmp.eq.s32.totalorder %s15, 0
    %p106 = por %p104, %p105
    %s107 = ssub.s32 %s16, %s28
    %s108 = ssub.s32 %s17, %s24
    %s109 = sor.u32 %s107, %s108
    %p110 = scmp.eq.s32.totalorder %s109, 0
    %s112 = sadd.s32 %s111, 1
    %s113 = scalar_select %p110, %s111, %s112
    %p116 = pneg %p110
    %p117 = scmp.eq.s32.totalorder %s9, 1
    %p118 = por %p116, %p117
    %p119 = scmp.ne.s32.totalorder %s111, %s114
    %p120 = scmp.eq.s32.totalorder %s9, 0
    %p121 = por %p119, %p120
    %p122 = scmp.ne.s32.totalorder %s111, %s114
    %p123 = scmp.eq.s32.totalorder %s14, 1
    %p124 = por %p122, %p123
    %p125 = scmp.ne.s32.totalorder %s114, %s115
    %p126 = scmp.eq.s32.totalorder %s14, 0
    %p127 = por %p125, %p126
    %p128 = scmp.ne.s32.totalorder %s114, %s115
    %p129 = scmp.eq.s32.totalorder %s15, 1
    %p130 = por %p128, %p129
    %p132 = scmp.ne.s32.totalorder %s115, %s131
    %p133 = scmp.eq.s32.totalorder %s15, 0
    %p134 = por %p132, %p133
    %p135 = scmp.le.s32.totalorder 1, %s9
    %p136 = scmp.lt.s32.totalorder %s9, 3
    %p137 = pnand %p135, %p136
    %p138 = pneg %p137
    // Predicated region
    $region9: #{lstm_se_pl_dense_mtl_forward.15} parent=5 // pred_check
      _
    $region10: #{lstm_se_pl_dense_mtl_forward.15} parent=5 // pred_check_branch
      %140 = sbr.rel (%p137) target = $region12
    $region11: #{lstm_se_pl_dense_mtl_forward.15} parent=5 // pred_region
      %s141 = ssub.s32 %s9, 1
      // Predicated region
      $region13: #{lstm_se_pl_dense_mtl_forward.15} parent=11 // pred_check
        %p142 = pneg %p47
      $region14: #{lstm_se_pl_dense_mtl_forward.15} parent=11 // pred_check_branch
        %144 = sbr.rel (%p142) target = $region16
      $region15: #{lstm_se_pl_dense_mtl_forward.15} parent=11 // pred_region
        %s145 = smul.u32 2, %s19
        %p146 = scmp.lt.s32.totalorder %s145, 1
        %s147 = scalar_select %p146, %s145, 1
        %s148 = smul.addr %s147, 8
        %s149 = scalar_lea.vmem %s0, %s148
        %s150 = smul.u32 2, %s19
      $region16: #{lstm_se_pl_dense_mtl_forward.15} parent=11 // pred_fallthru
        _
    $region12: #{lstm_se_pl_dense_mtl_forward.15} parent=5 // pred_fallthru
      _
    %p151 = scmp.lt.s32.totalorder %s9, 2
    // Predicated region
    $region17: #{lstm_se_pl_dense_mtl_forward.15} parent=5 // pred_check
      %p152 = pneg %p151
    $region18: #{lstm_se_pl_dense_mtl_forward.15} parent=5 // pred_check_branch
      %154 = sbr.rel (%p152) target = $region20
    $region19: #{lstm_se_pl_dense_mtl_forward.15} parent=5 // pred_region
      // Predicated region
      $region21: #{lstm_se_pl_dense_mtl_forward.15} parent=19 // pred_check
        %p155 = pneg %p67
      $region22: #{lstm_se_pl_dense_mtl_forward.15} parent=19 // pred_check_branch
        %157 = sbr.rel (%p155) target = $region24
      $region23: #{lstm_se_pl_dense_mtl_forward.15} parent=19 // pred_region
        %p158 = scmp.lt.s32.totalorder %s16, 1
        %s159 = scalar_select %p158, %s16, 1
        %s160 = smul.addr %s159, 3
        %s161 = smul.addr %s160, 8
        %s162 = scalar_lea.vmem %s1, %s161
      $region24: #{lstm_se_pl_dense_mtl_forward.15} parent=19 // pred_fallthru
        _
      // Predicated region
      $region25: #{lstm_se_pl_dense_mtl_forward.15} parent=19 // pred_check
        %p163 = pneg %p93
      $region26: #{lstm_se_pl_dense_mtl_forward.15} parent=19 // pred_check_branch
        %165 = sbr.rel (%p163) target = $region28
      $region27: #{lstm_se_pl_dense_mtl_forward.15} parent=19 // pred_region
        %p166 = scmp.lt.s32.totalorder %s16, 1
        %s167 = scalar_select %p166, %s16, 1
        %s168 = scalar_lea.vmem %s2, %s167
      $region28: #{lstm_se_pl_dense_mtl_forward.15} parent=19 // pred_fallthru
        _
    $region20: #{lstm_se_pl_dense_mtl_forward.15} parent=5 // pred_fallthru
      _
    %p169 = scmp.le.s32.totalorder 1, %s9
    %p170 = scmp.lt.s32.totalorder %s9, 3
    %p171 = pnand %p169, %p170
    %p172 = pneg %p171
    // Predicated region
    $region29: #{lstm_se_pl_dense_mtl_forward.15} parent=5 // pred_check
      _
    $region30: #{lstm_se_pl_dense_mtl_forward.15} parent=5 // pred_check_branch
      %174 = sbr.rel (%p171) target = $region32
    $region31: #{lstm_se_pl_dense_mtl_forward.15} parent=5 // pred_region
      %s175 = ssub.s32 %s9, 1
      %s176 = smul.u32 2, %s19
      %p177 = scmp.lt.s32.totalorder %s176, 1
      %s178 = scalar_select %p177, %s176, 1
      %s179 = smul.addr %s178, 8
      %s180 = scalar_lea.vmem %s0, %s179
      %p181 = pneg %p47
      %p182 = pneg %p44
      %p183 = scmp.lt.s32.totalorder %s18, 1
      %s184 = scalar_select %p183, %s18, 1
      %s185 = smul.addr %s184, 3
      %s186 = smul.addr %s185, 8
      %s187 = scalar_lea.vmem %s1, %s186
      %p188 = pneg %p73
      %p189 = pneg %p70
      %p190 = scmp.lt.s32.totalorder %s18, 1
      %s191 = scalar_select %p190, %s18, 1
      %s192 = scalar_lea.vmem %s2, %s191
      %p193 = pneg %p99
      %p194 = pneg %p96
      %p195 = pneg %p127
      %p196 = pneg %p124
      %s197 = smul.u32 2, %s19
      %p198 = scmp.lt.s32.totalorder %s18, 1
      %s199 = scalar_select %p198, %s18, 1
      %p200 = scmp.lt.s32.totalorder %s197, 1
      %s201 = scalar_select %p200, %s197, 1
      %s202 = smul.addr %s199, 2
      %s203 = sadd.s32 %s201, %s202
      %s204 = smul.addr %s203, 8
      %s205 = scalar_lea.vmem %s3, %s204
      %s206 = smul.u32 2, %s19
      %p207 = scmp.lt.s32.totalorder %s206, 1
      %s208 = scalar_select %p207, %s206, 1
      %s209 = smul.addr %s208, 8
      %s210 = scalar_lea.vmem %s0, %s209
      %s211 = smul.u32 2, %s19
      %p212 = scmp.lt.s32.totalorder %s18, 1
      %s213 = scalar_select %p212, %s18, 1
      %s214 = smul.addr %s213, 3
      %s215 = smul.addr %s214, 8
      %s216 = scalar_lea.vmem %s1, %s215
      %p217 = scmp.lt.s32.totalorder %s18, 1
      %s218 = scalar_select %p217, %s18, 1
      %s219 = scalar_lea.vmem %s2, %s218
      %s220 = smul.u32 2, %s19
      %p221 = scmp.lt.s32.totalorder %s18, 1
      %s222 = scalar_select %p221, %s18, 1
      %p223 = scmp.lt.s32.totalorder %s220, 1
      %s224 = scalar_select %p223, %s220, 1
      %s225 = smul.addr %s222, 2
      %s226 = sadd.s32 %s224, %s225
      %s227 = smul.addr %s226, 8
      %s228 = scalar_lea.vmem %s3, %s227
      %s229 = smul.u32 2, %s19
      %v230 = vld [vmem:[%s210] sm:$0xff]
      %v231 = vld [vmem:[%s210 + $0x8] sm:$0xff]
      %v232 = vld [vmem:[%s216] sm:$0xff]
      %v233 = vld [vmem:[%s216 + $0x8] sm:$0xff]
      %v234 = vld [vmem:[%s216 + $0x10] sm:$0xff]
      %v235 = vld [vmem:[%s219] sm:$0x1]
      %v237 = vlaneseq
      %v238 = vshrl.u32 %v237, 7
      %v239 = vsub.s32 0, %v238
      %v240 = vrot.slane %v235, %v239
      %vm242 = vcmask 195584
      %v244 = vsel %vm242, %v230, 0
      %v247 = vsel %vm242, %v231, 0
      %249 = vmatprep.subr.mxu0 0.0
      %250 = vmatpush1.msra.mxu0 %v232
      %251 = vmatprep.subr.mxu0 0.0
      %252 = vmatpush1.msra.mxu0 %v233
      %253 = vmatprep.subr.mxu0 0.0
      %254 = vmatpush1.msra.mxu0 %v234
      %255 = vmatprep.subr.mxu0 0.0
      %256 = vmatpush1.msra.mxu0 0.0
      %257 = vmatprep.subr.mxu0 0.0
      %258 = vmatpush1.msra.mxu0 0.0
      %259 = vmatprep.subr.mxu0 0.0
      %260 = vmatpush1.msra.mxu0 0.0
      %261 = vmatprep.subr.mxu0 0.0
      %262 = vmatpush1.msra.mxu0 0.0
      %263 = vmatprep.subr.mxu0 0.0
      %264 = vmatpush1.msra.mxu0 0.0
      %265 = vmatprep.subr.mxu0 0.0
      %266 = vmatpush1.msra.mxu0 0.0
      %267 = vmatprep.subr.mxu0 0.0
      %268 = vmatpush1.msra.mxu0 0.0
      %269 = vmatprep.subr.mxu0 0.0
      %270 = vmatpush1.msra.mxu0 0.0
      %271 = vmatprep.subr.mxu0 0.0
      %272 = vmatpush1.msra.mxu0 0.0
      %273 = vmatprep.subr.mxu0 0.0
      %274 = vmatpush1.msra.mxu0 0.0
      %275 = vmatprep.subr.mxu0 0.0
      %276 = vmatpush1.msra.mxu0 0.0
      %277 = vmatprep.subr.mxu0 0.0
      %278 = vmatpush1.msra.mxu0 0.0
      %279 = vmatprep.subr.mxu0 0.0
      %280 = vmatpush1.msra.mxu0 0.0
      %281 = vmatprep.subr.mxu0 0.0
      %282 = vmatpush1.msra.mxu0 0.0
      %283 = vmatprep.subr.mxu0 0.0
      %284 = vmatpush1.msra.mxu0 0.0
      %285 = vmatprep.subr.mxu0 0.0
      %286 = vmatpush1.msra.mxu0 0.0
      %287 = vmatprep.subr.mxu0 0.0
      %288 = vmatpush1.msra.mxu0 0.0
      %289 = vmatprep.subr.mxu0 0.0
      %290 = vmatpush1.msra.mxu0 0.0
      %291 = vmatprep.subr.mxu0 0.0
      %292 = vmatpush1.msra.mxu0 0.0
      %293 = vmatprep.subr.mxu0 0.0
      %294 = vmatpush1.msra.mxu0 0.0
      %295 = vmatprep.subr.mxu0 0.0
      %296 = vmatpush1.msra.mxu0 0.0
      %297 = vmatprep.subr.mxu0 0.0
      %298 = vmatpush1.msra.mxu0 0.0
      %299 = vmatprep.subr.mxu0 0.0
      %300 = vmatpush1.msra.mxu0 0.0
      %301 = vmatprep.subr.mxu0 0.0
      %302 = vmatpush1.msra.mxu0 0.0
      %303 = vmatprep.subr.mxu0 0.0
      %304 = vmatpush1.msra.mxu0 0.0
      %305 = vmatprep.subr.mxu0 0.0
      %306 = vmatpush1.msra.mxu0 0.0
      %307 = vmatprep.subr.mxu0 0.0
      %308 = vmatpush1.msra.mxu0 0.0
      %309 = vmatprep.subr.mxu0 0.0
      %310 = vmatpush1.msra.mxu0 0.0
      %311 = vmatprep.subr.mxu0 0.0
      %312 = vmatpush1.msra.mxu0 0.0
      %313 = vmatprep.mubr.f32.mxu0 0.0
      %314 = vmatmul.mubr.f32.gmra.mrb[0].mxu0 %v244
      %v315 = vpop.f32.mrb[0].mxu0
      %v316 = vadd.f32 %v240, %v315
      %v317 = vpop.f32.mrb[0].mxu0
      %318 = vmatprep.mubr.f32.mxu0 0.0
      %319 = vmatmul.mubr.f32.gmra.mrb[0].mxu0 %v247
      %v320 = vpop.f32.mrb[0].mxu0
      %v321 = vadd.f32 %v240, %v320
      %v322 = vpop.f32.mrb[0].mxu0
      %323 = vdwg.mxu0
      %324 = vst [vmem:[%s228] sm:$0xff] %v316
      %325 = vst [vmem:[%s228 + $0x8] sm:$0xff] %v321
      %s326 = smul.u32 2, %s19
      %p327 = scmp.lt.s32.totalorder %s18, 1
      %s328 = scalar_select %p327, %s18, 1
      %p329 = scmp.lt.s32.totalorder %s326, 1
      %s330 = scalar_select %p329, %s326, 1
      %s331 = smul.addr %s328, 2
      %s332 = sadd.s32 %s330, %s331
      %s333 = smul.addr %s332, 8
      %s334 = scalar_lea.vmem %s3, %s333
      // Predicated region
      $region33: #{lstm_se_pl_dense_mtl_forward.15} parent=31 // pred_check
        %p335 = pneg %p124
      $region34: #{lstm_se_pl_dense_mtl_forward.15} parent=31 // pred_check_branch
        %337 = sbr.rel (%p335) target = $region36
      $region35: #{lstm_se_pl_dense_mtl_forward.15} parent=31 // pred_region
        %s338 = smul.u32 2, %s19
      $region36: #{lstm_se_pl_dense_mtl_forward.15} parent=31 // pred_fallthru
        _
    $region32: #{lstm_se_pl_dense_mtl_forward.15} parent=5 // pred_fallthru
      _
    %p339 = scmp.le.s32.totalorder 2, %s9
    // Predicated region
    $region37: #{lstm_se_pl_dense_mtl_forward.15} parent=5 // pred_check
      %p340 = pneg %p339
    $region38: #{lstm_se_pl_dense_mtl_forward.15} parent=5 // pred_check_branch
      %342 = sbr.rel (%p340) target = $region40
    $region39: #{lstm_se_pl_dense_mtl_forward.15} parent=5 // pred_region
      %s343 = ssub.s32 %s9, 2
      // Predicated region
      $region41: #{lstm_se_pl_dense_mtl_forward.15} parent=39 // pred_check
        %p344 = pneg %p130
      $region42: #{lstm_se_pl_dense_mtl_forward.15} parent=39 // pred_check_branch
        %346 = sbr.rel (%p344) target = $region44
      $region43: #{lstm_se_pl_dense_mtl_forward.15} parent=39 // pred_region
        %s347 = smul.u32 2, %s21
        %p348 = scmp.lt.s32.totalorder %s20, 1
        %s349 = scalar_select %p348, %s20, 1
        %p350 = scmp.lt.s32.totalorder %s347, 1
        %s351 = scalar_select %p350, %s347, 1
        %s352 = smul.addr %s349, 2
        %s353 = sadd.s32 %s351, %s352
        %s354 = smul.addr %s353, 8
        %s355 = scalar_lea.vmem %s3, %s354
      $region44: #{lstm_se_pl_dense_mtl_forward.15} parent=39 // pred_fallthru
        _
    $region40: #{lstm_se_pl_dense_mtl_forward.15} parent=5 // pred_fallthru
      _
  $region6: #{lstm_se_pl_dense_mtl_forward.15} parent=0 // loop_footer
    %s13 = sadd.s32 1, %s9
  $region7: #{lstm_se_pl_dense_mtl_forward.15} parent=0 // loop_footer_branch
    %8 = sbr.rel target = $region3
  $region8: #{lstm_se_pl_dense_mtl_forward.15} parent=0 // loop_exit
    _

// kernel: lstm_se_pl_dense_mtl_forward.17
$region0: #{lstm_se_pl_dense_mtl_forward.17}
  #allocation0 [shape = 'u32[]', space=smem, size = 0x4, offset = 0x4, fixed_abs, tag = 'smem constant byte address 0x4 - core index']
  #allocation1 [shape = 'u32[144,128]{1,0:T(1,128)}', space=vmem, size = 0x12000, scoped, tag = 'internal scratch']
  %s0 = inlined_call_operand.vmem [shape: f32[2,16,32], index: 0, kind: input, shape index: {}]
  %s1 = inlined_call_operand.vmem [shape: f32[2,32,16], index: 1, kind: input, shape index: {}]
  %s2 = inlined_call_operand.vmem [shape: f32[1,16], index: 2, kind: input, shape index: {}]
  %s3 = inlined_call_operand.hbm [shape: f32[16,8], index: 3, kind: output, shape index: {0}]
  %s4 = inlined_call_operand.hbm [shape: f32[16,8], index: 4, kind: output, shape index: {1}]
  %5 = xla_tuple %s3, %s4
  %s6 = sld [smem:[#allocation0]]
  $region30: #{lstm_se_pl_dense_mtl_forward.17} parent=0
    _
  %s8 = ssub.s32 1, %s6
  %s9 = scalar_select 0, %s8, %s6
  $region1: #{lstm_se_pl_dense_mtl_forward.17} parent=0
    #allocation2 [shape = 'u8[8192]{0}', space=vmem, size = 0x2000, scoped, tag = 'output window, operand 0, single buffered']
    #allocation3 [shape = 's32[1]{0}', space=sflag, size = 0x4, scoped, tag = 'scoped memory for lstm_se_pl_dense_mtl_forward.17']
    #allocation4 [shape = 'u8[8192]{0}', space=vmem, size = 0x2000, scoped, tag = 'output window, operand 1, single buffered']
    #allocation5 [shape = 's32[1]{0}', space=sflag, size = 0x4, scoped, tag = 'scoped memory for lstm_se_pl_dense_mtl_forward.17']
    %10 = vsyncpa [#allocation3], 0
    %11 = vsyncpa [#allocation5], 0
    // Predicated region
    $region2: #{lstm_se_pl_dense_mtl_forward.17} parent=1 // pred_check
      _
    $region3: #{lstm_se_pl_dense_mtl_forward.17} parent=1 // pred_check_branch
      %13 = sbr.rel (0) target = $region5
    $region4: #{lstm_se_pl_dense_mtl_forward.17} parent=1 // pred_region
      _
    $region5: #{lstm_se_pl_dense_mtl_forward.17} parent=1 // pred_fallthru
      _
    // Predicated region
    $region6: #{lstm_se_pl_dense_mtl_forward.17} parent=1 // pred_check
      _
    $region7: #{lstm_se_pl_dense_mtl_forward.17} parent=1 // pred_check_branch
      %15 = sbr.rel (0) target = $region9
    $region8: #{lstm_se_pl_dense_mtl_forward.17} parent=1 // pred_region
      _
    $region9: #{lstm_se_pl_dense_mtl_forward.17} parent=1 // pred_fallthru
      _
    // Predicated region
    $region10: #{lstm_se_pl_dense_mtl_forward.17} parent=1 // pred_check
      _
    $region11: #{lstm_se_pl_dense_mtl_forward.17} parent=1 // pred_check_branch
      %17 = sbr.rel (0) target = $region13
    $region12: #{lstm_se_pl_dense_mtl_forward.17} parent=1 // pred_region
      _
    $region13: #{lstm_se_pl_dense_mtl_forward.17} parent=1 // pred_fallthru
      _
    %v18 = vld [vmem:[%s0] sm:$0xff]
    %v19 = vld [vmem:[%s0 + $0x8] sm:$0xff]
    %v20 = vld [vmem:[%s1] sm:$0xff]
    %v21 = vld [vmem:[%s1 + $0x8] sm:$0xff]
    %v22 = vld [vmem:[%s1 + $0x10] sm:$0xff]
    %v23 = vld [vmem:[%s1 + $0x18] sm:$0xff]
    %s24 = scalar_lea.vmem %s0, 16
    %v25 = vld [vmem:[%s24] sm:$0xff]
    %v26 = vld [vmem:[%s24 + $0x8] sm:$0xff]
    %s27 = scalar_lea.vmem %s1, 32
    %v28 = vld [vmem:[%s27] sm:$0xff]
    %v29 = vld [vmem:[%s27 + $0x8] sm:$0xff]
    %v30 = vld [vmem:[%s27 + $0x10] sm:$0xff]
    %v31 = vld [vmem:[%s27 + $0x18] sm:$0xff]
    %vm32 = vcmask 261120
    %v34 = vsel %vm32, %v25, 0
    %v37 = vsel %vm32, %v26, 0
    %39 = vmatprep.subr.mxu0 0.0
    %40 = vmatpush1.msra.mxu0 %v28
    %41 = vmatprep.subr.mxu0 0.0
    %42 = vmatpush1.msra.mxu0 %v29
    %43 = vmatprep.subr.mxu0 0.0
    %44 = vmatpush1.msra.mxu0 %v30
    %45 = vmatprep.subr.mxu0 0.0
    %46 = vmatpush1.msra.mxu0 %v31
    %47 = vmatprep.subr.mxu0 0.0
    %48 = vmatpush1.msra.mxu0 0.0
    %49 = vmatprep.subr.mxu0 0.0
    %50 = vmatpush1.msra.mxu0 0.0
    %51 = vmatprep.subr.mxu0 0.0
    %52 = vmatpush1.msra.mxu0 0.0
    %53 = vmatprep.subr.mxu0 0.0
    %54 = vmatpush1.msra.mxu0 0.0
    %55 = vmatprep.subr.mxu0 0.0
    %56 = vmatpush1.msra.mxu0 0.0
    %57 = vmatprep.subr.mxu0 0.0
    %58 = vmatpush1.msra.mxu0 0.0
    %59 = vmatprep.subr.mxu0 0.0
    %60 = vmatpush1.msra.mxu0 0.0
    %61 = vmatprep.subr.mxu0 0.0
    %62 = vmatpush1.msra.mxu0 0.0
    %63 = vmatprep.subr.mxu0 0.0
    %64 = vmatpush1.msra.mxu0 0.0
    %65 = vmatprep.subr.mxu0 0.0
    %66 = vmatpush1.msra.mxu0 0.0
    %67 = vmatprep.subr.mxu0 0.0
    %68 = vmatpush1.msra.mxu0 0.0
    %69 = vmatprep.subr.mxu0 0.0
    %70 = vmatpush1.msra.mxu0 0.0
    %71 = vmatprep.subr.mxu0 0.0
    %72 = vmatpush1.msra.mxu0 0.0
    %73 = vmatprep.subr.mxu0 0.0
    %74 = vmatpush1.msra.mxu0 0.0
    %75 = vmatprep.subr.mxu0 0.0
    %76 = vmatpush1.msra.mxu0 0.0
    %77 = vmatprep.subr.mxu0 0.0
    %78 = vmatpush1.msra.mxu0 0.0
    %79 = vmatprep.subr.mxu0 0.0
    %80 = vmatpush1.msra.mxu0 0.0
    %81 = vmatprep.subr.mxu0 0.0
    %82 = vmatpush1.msra.mxu0 0.0
    %83 = vmatprep.subr.mxu0 0.0
    %84 = vmatpush1.msra.mxu0 0.0
    %85 = vmatprep.subr.mxu0 0.0
    %86 = vmatpush1.msra.mxu0 0.0
    %87 = vmatprep.subr.mxu0 0.0
    %88 = vmatpush1.msra.mxu0 0.0
    %89 = vmatprep.subr.mxu0 0.0
    %90 = vmatpush1.msra.mxu0 0.0
    %91 = vmatprep.subr.mxu0 0.0
    %92 = vmatpush1.msra.mxu0 0.0
    %93 = vmatprep.subr.mxu0 0.0
    %94 = vmatpush1.msra.mxu0 0.0
    %95 = vmatprep.subr.mxu0 0.0
    %96 = vmatpush1.msra.mxu0 0.0
    %97 = vmatprep.subr.mxu0 0.0
    %98 = vmatpush1.msra.mxu0 0.0
    %99 = vmatprep.subr.mxu0 0.0
    %100 = vmatpush1.msra.mxu0 0.0
    %101 = vmatprep.subr.mxu0 0.0
    %102 = vmatpush1.msra.mxu0 0.0
    %103 = vmatprep.mubr.f32.mxu0 0.0
    %104 = vmatmul.mubr.f32.gmra.mrb[0].mxu0 %v34
    %v105 = vpop.f32.mrb[0].mxu0
    %v106 = vadd.f32 0.0, %v105
    %v107 = vpop.f32.mrb[0].mxu0
    %108 = vmatprep.mubr.f32.mxu0 0.0
    %109 = vmatmul.mubr.f32.gmra.mrb[0].mxu0 %v37
    %v110 = vpop.f32.mrb[0].mxu0
    %v111 = vadd.f32 0.0, %v110
    %v112 = vpop.f32.mrb[0].mxu0
    %113 = vdwg.mxu0
    %v115 = vsel %vm32, %v18, 0
    %v118 = vsel %vm32, %v19, 0
    %120 = vmatprep.subr.mxu0 0.0
    %121 = vmatpush1.msra.mxu0 %v20
    %122 = vmatprep.subr.mxu0 0.0
    %123 = vmatpush1.msra.mxu0 %v21
    %124 = vmatprep.subr.mxu0 0.0
    %125 = vmatpush1.msra.mxu0 %v22
    %126 = vmatprep.subr.mxu0 0.0
    %127 = vmatpush1.msra.mxu0 %v23
    %128 = vmatprep.subr.mxu0 0.0
    %129 = vmatpush1.msra.mxu0 0.0
    %130 = vmatprep.subr.mxu0 0.0
    %131 = vmatpush1.msra.mxu0 0.0
    %132 = vmatprep.subr.mxu0 0.0
    %133 = vmatpush1.msra.mxu0 0.0
    %134 = vmatprep.subr.mxu0 0.0
    %135 = vmatpush1.msra.mxu0 0.0
    %136 = vmatprep.subr.mxu0 0.0
    %137 = vmatpush1.msra.mxu0 0.0
    %138 = vmatprep.subr.mxu0 0.0
    %139 = vmatpush1.msra.mxu0 0.0
    %140 = vmatprep.subr.mxu0 0.0
    %141 = vmatpush1.msra.mxu0 0.0
    %142 = vmatprep.subr.mxu0 0.0
    %143 = vmatpush1.msra.mxu0 0.0
    %144 = vmatprep.subr.mxu0 0.0
    %145 = vmatpush1.msra.mxu0 0.0
    %146 = vmatprep.subr.mxu0 0.0
    %147 = vmatpush1.msra.mxu0 0.0
    %148 = vmatprep.subr.mxu0 0.0
    %149 = vmatpush1.msra.mxu0 0.0
    %150 = vmatprep.subr.mxu0 0.0
    %151 = vmatpush1.msra.mxu0 0.0
    %152 = vmatprep.subr.mxu0 0.0
    %153 = vmatpush1.msra.mxu0 0.0
    %154 = vmatprep.subr.mxu0 0.0
    %155 = vmatpush1.msra.mxu0 0.0
    %156 = vmatprep.subr.mxu0 0.0
    %157 = vmatpush1.msra.mxu0 0.0
    %158 = vmatprep.subr.mxu0 0.0
    %159 = vmatpush1.msra.mxu0 0.0
    %160 = vmatprep.subr.mxu0 0.0
    %161 = vmatpush1.msra.mxu0 0.0
    %162 = vmatprep.subr.mxu0 0.0
    %163 = vmatpush1.msra.mxu0 0.0
    %164 = vmatprep.subr.mxu0 0.0
    %165 = vmatpush1.msra.mxu0 0.0
    %166 = vmatprep.subr.mxu0 0.0
    %167 = vmatpush1.msra.mxu0 0.0
    %168 = vmatprep.subr.mxu0 0.0
    %169 = vmatpush1.msra.mxu0 0.0
    %170 = vmatprep.subr.mxu0 0.0
    %171 = vmatpush1.msra.mxu0 0.0
    %172 = vmatprep.subr.mxu0 0.0
    %173 = vmatpush1.msra.mxu0 0.0
    %174 = vmatprep.subr.mxu0 0.0
    %175 = vmatpush1.msra.mxu0 0.0
    %176 = vmatprep.subr.mxu0 0.0
    %177 = vmatpush1.msra.mxu0 0.0
    %178 = vmatprep.subr.mxu0 0.0
    %179 = vmatpush1.msra.mxu0 0.0
    %180 = vmatprep.subr.mxu0 0.0
    %181 = vmatpush1.msra.mxu0 0.0
    %182 = vmatprep.subr.mxu0 0.0
    %183 = vmatpush1.msra.mxu0 0.0
    %184 = vmatprep.mubr.f32.mxu0 0.0
    %185 = vmatmul.mubr.f32.gmra.mrb[0].mxu0 %v115
    %v186 = vpop.f32.mrb[0].mxu0
    %v187 = vadd.f32 %v106, %v186
    %v188 = vpop.f32.mrb[0].mxu0
    %189 = vmatprep.mubr.f32.mxu0 0.0
    %190 = vmatmul.mubr.f32.gmra.mrb[0].mxu0 %v118
    %v191 = vpop.f32.mrb[0].mxu0
    %v192 = vadd.f32 %v111, %v191
    %v193 = vpop.f32.mrb[0].mxu0
    %194 = vdwg.mxu0
    %v195 = vld [vmem:[%s2] sm:$0x1]
    %v197 = vlaneseq
    %v198 = vshrl.u32 %v197, 7
    %v199 = vsub.s32 0, %v198
    %v200 = vrot.slane %v195, %v199
    %v202 = vadd.f32 %v187, %v200
    %v203 = vadd.f32 %v192, %v200
    %vm204 = vcmask 64512
    %205 = vst.msk [vmem:[#allocation2] sm:$0xff] %vm204, %v202
    %206 = vst.msk [vmem:[#allocation2 + $0x8] sm:$0xff] %vm204, %v203
    %v207 = vxor.u32 %v202, 2147483648
    %v208 = vxor.u32 %v203, 2147483648
    %v209 = vmul.f32 %v207, 1.442695
    %v210 = vpow.pop %v209
    %v211 = vmul.f32 %v208, 1.442695
    %v212 = vpow.pop %v211
    %v213 = vadd.f32 %v210, 1.0
    %v214 = vadd.f32 %v212, 1.0
    %v215 = vrcp.pop %v213
    %v216 = vmul.f32 1.0, %v215
    %v217 = vrcp.pop %v214
    %v218 = vmul.f32 1.0, %v217
    %221 = vrot.lane.b32.xlu0 %v216, 120
    %v222 = vpop.permute.xlu0 %221
    %223 = vrot.lane.b32.xlu0 %v218, 120
    %v224 = vpop.permute.xlu0 %223
    %227 = vst.msk [vmem:[#allocation4] sm:$0xff] %vm204, %v222
    %228 = vst.msk [vmem:[#allocation4 + $0x8] sm:$0xff] %vm204, %v224
    // Predicated region
    $region14: #{lstm_se_pl_dense_mtl_forward.17} parent=1 // pred_check
      _
    $region15: #{lstm_se_pl_dense_mtl_forward.17} parent=1 // pred_check_branch
      %230 = sbr.rel (0) target = $region17
    $region16: #{lstm_se_pl_dense_mtl_forward.17} parent=1 // pred_region
      %s232 = ssub.s32 256, 256
      %233 = vsyncadd [#allocation3], %s232
      %s234 = sshll.u32 [#allocation2], 4
      %s235 = int_to_ptr.vmem [resolvable:$true] %s234
      %240 = dma.vmem_to_hbm [thread:$0]  %s235, 256, %s3, [#allocation3], 128, 128, 8
    $region17: #{lstm_se_pl_dense_mtl_forward.17} parent=1 // pred_fallthru
      _
    // Predicated region
    $region18: #{lstm_se_pl_dense_mtl_forward.17} parent=1 // pred_check
      _
    $region19: #{lstm_se_pl_dense_mtl_forward.17} parent=1 // pred_check_branch
      %242 = sbr.rel (0) target = $region21
    $region20: #{lstm_se_pl_dense_mtl_forward.17} parent=1 // pred_region
      %s244 = ssub.s32 256, 256
      %245 = vsyncadd [#allocation5], %s244
      %s246 = sshll.u32 [#allocation4], 4
      %s247 = int_to_ptr.vmem [resolvable:$true] %s246
      %252 = dma.vmem_to_hbm [thread:$0]  %s247, 256, %s4, [#allocation5], 128, 128, 8
    $region21: #{lstm_se_pl_dense_mtl_forward.17} parent=1 // pred_fallthru
      _
    // Predicated region
    $region22: #{lstm_se_pl_dense_mtl_forward.17} parent=1 // pred_check
      _
    $region23: #{lstm_se_pl_dense_mtl_forward.17} parent=1 // pred_check_branch
      %254 = sbr.rel (0) target = $region25
    $region24: #{lstm_se_pl_dense_mtl_forward.17} parent=1 // pred_region
      %255 = dma.done [#allocation3], 256
    $region25: #{lstm_se_pl_dense_mtl_forward.17} parent=1 // pred_fallthru
      _
    // Predicated region
    $region26: #{lstm_se_pl_dense_mtl_forward.17} parent=1 // pred_check
      _
    $region27: #{lstm_se_pl_dense_mtl_forward.17} parent=1 // pred_check_branch
      %257 = sbr.rel (0) target = $region29
    $region28: #{lstm_se_pl_dense_mtl_forward.17} parent=1 // pred_region
      %258 = dma.done [#allocation5], 256
    $region29: #{lstm_se_pl_dense_mtl_forward.17} parent=1 // pred_fallthru
      _
    %259 = vsyncpa [#allocation3], 1
    %260 = vsyncpa [#allocation5], 1

</llo_original>
